<compile_context>
chip_gen: v5e
topology: v5e:2x2
jax: 0.10.0
libtpu: 0.0.40
codegen_flags: <defaults>
</compile_context>

<pallas_src>
import functools
import math

import jax
import jax.numpy as jnp
from jax import lax
from jax.experimental import pallas as pl
from jax.experimental.pallas import tpu as pltpu


# MXU operand dtype.  bf16 is the native fast MXU path on v5e/v6e/v7x (f32 operands
# force a slow multi-pass decomposition) and halves matmul-operand VMEM footprint.
# Accumulation stays float32 via preferred_element_type.  Set to jnp.float32 for
# bit-level parity with the f32 PyTorch reference.
_MM_DTYPE = jnp.bfloat16


@functools.lru_cache(maxsize=None)
def _vmem_limit_bytes():
    """Generation-aware VMEM budget: ~75% of per-core VMEM
    (v5e/v6e: 128 MiB -> 96 MiB, v7x: 64 MiB -> 48 MiB).  Falls back to 48 MiB."""
    cap = 64 * 1024 * 1024
    try:
        cap = int(getattr(pltpu.get_tpu_info(), "vmem_capacity_bytes", cap))
    except Exception:
        pass
    return max(32 * 1024 * 1024, (cap * 3) // 4)


def _cp(dimension_semantics):
    return pltpu.CompilerParams(
        dimension_semantics=dimension_semantics,
        vmem_limit_bytes=_vmem_limit_bytes(),
    )


def _row_tile(n, target=1024):
    """Row tile for (N, D) slabs.  Large tiles approach the HBM roofline and amortize
    the ~0.35 us/step grid overhead; rows are independent so edge-block masking makes
    non-divisible N safe (grid uses pl.cdiv)."""
    return n if n <= target else target


def _q_tile(seq_len):
    """Fixed 128-row query tiles: restores MXU M-fill for common lengths (L=100/200/500)
    and bounds (tq, L) temporaries; edge blocks are masked by Pallas."""
    return min(seq_len, 128)


# ----------------------------------------------------------------------------
# Dense (+ optional activation)
# ----------------------------------------------------------------------------
def _dense_kernel(x_ref, w_ref, b_ref, o_ref, *, activation):
    x = x_ref[...].astype(_MM_DTYPE)
    w = w_ref[...].astype(_MM_DTYPE)
    y = jnp.dot(x, w, preferred_element_type=jnp.float32) + b_ref[...]
    if activation == "relu":
        y = jnp.maximum(y, 0.0)
    elif activation == "sigmoid":
        y = 1.0 / (1.0 + jnp.exp(-y))
    o_ref[...] = y


def pallas_dense(x, w, b, activation=None):
    n, din = x.shape
    dout = w.shape[1]
    tm = _row_tile(n)
    return pl.pallas_call(
        functools.partial(_dense_kernel, activation=activation),
        grid=(pl.cdiv(n, tm),),
        in_specs=[
            pl.BlockSpec((tm, din), lambda i: (i, 0)),      # x   : row-tiled
            pl.BlockSpec((din, dout), lambda i: (0, 0)),    # W   : resident
            pl.BlockSpec((1, dout), lambda i: (0, 0)),      # b   : resident
        ],
        out_specs=pl.BlockSpec((tm, dout), lambda i: (i, 0)),
        out_shape=jax.ShapeDtypeStruct((n, dout), jnp.float32),
        compiler_params=_cp(("parallel",)),
    )(x, w, b.reshape(1, dout))


# ----------------------------------------------------------------------------
# Fused transformer block: LN2(res + FFN(LN1(a + b)))
# (res=None -> residual is the LN1 output itself, as in the reference first block)
# ----------------------------------------------------------------------------
def _block_kernel(*refs, has_res):
    if has_res:
        (a_ref, b_ref, res_ref, w1_ref, b1_ref, w2_ref, b2_ref,
         g1_ref, be1_ref, g2_ref, be2_ref, o_ref) = refs
    else:
        (a_ref, b_ref, w1_ref, b1_ref, w2_ref, b2_ref,
         g1_ref, be1_ref, g2_ref, be2_ref, o_ref) = refs
        res_ref = None

    # LN1(a + b)
    x = a_ref[...] + b_ref[...]
    mu = jnp.mean(x, axis=-1, keepdims=True)
    var = jnp.mean((x - mu) ** 2, axis=-1, keepdims=True)
    x = (x - mu) * lax.rsqrt(var + 1e-5) * g1_ref[...] + be1_ref[...]

    # FFN (linear1 -> relu -> linear2), bf16 MXU operands, f32 accumulation
    h = jnp.dot(x.astype(_MM_DTYPE), w1_ref[...].astype(_MM_DTYPE),
                preferred_element_type=jnp.float32) + b1_ref[...]
    h = jnp.maximum(h, 0.0)
    y = jnp.dot(h.astype(_MM_DTYPE), w2_ref[...].astype(_MM_DTYPE),
                preferred_element_type=jnp.float32) + b2_ref[...]

    # residual + LN2
    y = y + (x if res_ref is None else res_ref[...])
    mu = jnp.mean(y, axis=-1, keepdims=True)
    var = jnp.mean((y - mu) ** 2, axis=-1, keepdims=True)
    o_ref[...] = (y - mu) * lax.rsqrt(var + 1e-5) * g2_ref[...] + be2_ref[...]


def pallas_transformer_block(a, b, res, w1, b1, w2, b2, g1, be1, g2, be2):
    n, d = a.shape
    dh = w1.shape[1]
    tm = _row_tile(n)
    has_res = res is not None

    row_spec = pl.BlockSpec((tm, d), lambda i: (i, 0))

    def const(shape):
        return pl.BlockSpec(shape, lambda i: (0, 0))

    in_specs = [row_spec, row_spec]
    args = [a, b]
    if has_res:
        in_specs.append(row_spec)
        args.append(res)
    in_specs += [const((d, dh)), const((1, dh)), const((dh, d)), const((1, d)),
                 const((1, d)), const((1, d)), const((1, d)), const((1, d))]
    args += [w1, b1.reshape(1, dh), w2, b2.reshape(1, d),
             g1.reshape(1, d), be1.reshape(1, d), g2.reshape(1, d), be2.reshape(1, d)]

    return pl.pallas_call(
        functools.partial(_block_kernel, has_res=has_res),
        grid=(pl.cdiv(n, tm),),
        in_specs=in_specs,
        out_specs=pl.BlockSpec((tm, d), lambda i: (i, 0)),
        out_shape=jax.ShapeDtypeStruct((n, d), jnp.float32),
        compiler_params=_cp(("parallel",)),
    )(*args)


# ----------------------------------------------------------------------------
# RKT attention with fused Q / K|V projections.
# grid = (batch, q_tiles); K|V projected once per batch under pl.when(q_tile == 0)
# into a persistent VMEM scratch; heads are a static in-kernel loop; output is
# written lane-dense per head straight into the (tq, E) output block.
# ----------------------------------------------------------------------------
def _rkt_attention_kernel(scal_ref, q_ref, x_ref, rel_ref, tc_ref, tr_ref,
                          wq_ref, bq_ref, wkv_ref, bkv_ref,
                          out_ref, *rest, num_heads, head_size, lam, return_attn):
    if return_attn:
        attn_ref, kv_vmem, q_vmem = rest
    else:
        attn_ref = None
        kv_vmem, q_vmem = rest

    embed = num_heads * head_size
    tq = q_ref.shape[1]
    seq_len = x_ref.shape[1]

    # ---- K|V projection of the full (L, E) key/value input, once per batch element.
    # q-tile axis is "arbitrary" so this scratch persists across the q-tile loop.
    @pl.when(pl.program_id(1) == 0)
    def _():
        xkv = x_ref[0].astype(_MM_DTYPE)                                    # (L, E)
        kv = jnp.dot(xkv, wkv_ref[...].astype(_MM_DTYPE),
                     preferred_element_type=jnp.float32) + bkv_ref[...]
        kv_vmem[...] = kv.astype(kv_vmem.dtype)                             # (L, 2E)

    # ---- Q projection of this query tile (stored to scratch so per-head reads are
    # VMEM offset loads instead of vreg lane shuffles).
    qp = jnp.dot(q_ref[0].astype(_MM_DTYPE), wq_ref[...].astype(_MM_DTYPE),
                 preferred_element_type=jnp.float32) + bq_ref[...]          # (tq, E)
    q_vmem[...] = qp.astype(q_vmem.dtype)

    su = scal_ref[0]
    inv_su = 1.0 / su                                    # one scalar divide
    q_start = pl.program_id(1) * tq

    # future_mask: True where col >= row (masked, diagonal included) — global row index.
    row = q_start + lax.broadcasted_iota(jnp.int32, (tq, seq_len), 0)
    col = lax.broadcasted_iota(jnp.int32, (tq, seq_len), 1)
    mask = col >= row

    # ---- head-independent relation/time branch (computed once per tile, not H times)
    rel = rel_ref[0].astype(jnp.float32)                          # (tq, L)
    rel_m = rel * mask.astype(jnp.float32)
    rel_attn = jnp.where(rel_m == 0.0, jnp.float32(-100000.0), rel_m)
    tmat = jnp.abs(tc_ref[0] - tr_ref[0])                         # (tq,1)-(1,L) -> (tq,L)
    tstamp = jnp.exp(-tmat * inv_su)
    tstamp = jnp.where(mask, jnp.float32(-100000.0), tstamp)

    r_logits = tstamp + rel_attn
    r_max = jnp.max(r_logits, axis=-1, keepdims=True)
    r_exp = jnp.exp(r_logits - r_max)
    r_attn = r_exp * pl.reciprocal(jnp.sum(r_exp, axis=-1, keepdims=True), approx=True)
    r_mix = (1.0 - lam) * r_attn                                  # shared across heads

    inv_sqrt_d = jnp.float32(1.0 / math.sqrt(head_size))
    neg_big = jnp.float32(-1e32)

    for h in range(num_heads):                                    # static unroll
        lo = h * head_size
        hi = lo + head_size
        qh = q_vmem[:, lo:hi]                                     # (tq, Dh) bf16
        kh = kv_vmem[:, lo:hi]                                    # (L,  Dh) bf16
        vh = kv_vmem[:, embed + lo:embed + hi]                    # (L,  Dh) bf16

        s = lax.dot_general(qh, kh, (((1,), (1,)), ((), ())),
                            preferred_element_type=jnp.float32) * inv_sqrt_d
        s = jnp.where(mask, neg_big, s)
        m = jnp.max(s, axis=-1, keepdims=True)
        e = jnp.exp(s - m)
        p = e * pl.reciprocal(jnp.sum(e, axis=-1, keepdims=True), approx=True)
        mix = lam * p + r_mix

        if return_attn:                                           # only last layer
            attn_ref[0, h] = mix
        # lane-dense store: head h's slice of the (tq, E) output block
        out_ref[0, :, lo:hi] = jnp.dot(mix.astype(_MM_DTYPE), vh,
                                       preferred_element_type=jnp.float32)


def pallas_rkt_attention(query, kv_input, rel, timestamp, lp, lam, num_heads,
                         return_attn):
    """query/kv_input: (B, L, E) raw activations (projections fused in-kernel);
    rel: (B, L, L); timestamp: (B, L); lp: layer params {wq, bq, wkv, bkv, su}."""
    B, L, E = query.shape
    Dh = E // num_heads
    tq = _q_tile(L)
    n_qt = pl.cdiv(L, tq)

    ts_col = timestamp[:, :, None]                 # (B, L, 1) query times
    ts_row = timestamp[:, None, :]                 # (B, 1, L) key times
    scal = jnp.asarray(lp["su"], jnp.float32).reshape(1)
    rel = rel.astype(_MM_DTYPE)                    # O(B*L^2) input: halve its DMA

    kernel = functools.partial(_rkt_attention_kernel, num_heads=num_heads,
                               head_size=Dh, lam=float(lam), return_attn=return_attn)

    in_specs = [
        pl.BlockSpec(memory_space=pltpu.MemorySpace.SMEM),        # [su] scalar
        pl.BlockSpec((1, tq, E), lambda b, i: (b, i, 0)),         # raw query tile
        pl.BlockSpec((1, L, E), lambda b, i: (b, 0, 0)),          # raw K/V input (per-b)
        pl.BlockSpec((1, tq, L), lambda b, i: (b, i, 0)),         # rel rows (bf16)
        pl.BlockSpec((1, tq, 1), lambda b, i: (b, i, 0)),         # query timestamps
        pl.BlockSpec((1, 1, L), lambda b, i: (b, 0, 0)),          # key timestamps
        pl.BlockSpec((E, E), lambda b, i: (0, 0)),                # Wq  resident
        pl.BlockSpec((1, E), lambda b, i: (0, 0)),                # bq
        pl.BlockSpec((E, 2 * E), lambda b, i: (0, 0)),            # Wkv resident
        pl.BlockSpec((1, 2 * E), lambda b, i: (0, 0)),            # bkv
    ]
    scratch_shapes = [
        pltpu.VMEM((L, 2 * E), _MM_DTYPE),                        # projected K|V
        pltpu.VMEM((tq, E), _MM_DTYPE),                           # projected Q tile
    ]

    if return_attn:
        out_shape = (jax.ShapeDtypeStruct((B, L, E), jnp.float32),
                     jax.ShapeDtypeStruct((B, num_heads, L, L), jnp.float32))
        out_specs = (pl.BlockSpec((1, tq, E), lambda b, i: (b, i, 0)),
                     pl.BlockSpec((1, num_heads, tq, L), lambda b, i: (b, 0, i, 0)))
    else:
        out_shape = jax.ShapeDtypeStruct((B, L, E), jnp.float32)
        out_specs = pl.BlockSpec((1, tq, E), lambda b, i: (b, i, 0))

    res = pl.pallas_call(
        kernel,
        grid=(B, n_qt),
        in_specs=in_specs,
        out_specs=out_specs,
        out_shape=out_shape,
        scratch_shapes=scratch_shapes,
        # q-tile axis must be "arbitrary": the K|V scratch carries state across it.
        compiler_params=_cp(("parallel", "arbitrary")),
    )(scal, query, kv_input, rel, ts_col, ts_row,
      lp["wq"], lp["bq"].reshape(1, E), lp["wkv"], lp["bkv"].reshape(1, 2 * E))

    if return_attn:
        return res[0], res[1]
    return res, None


# ----------------------------------------------------------------------------
# Module-level forward (gathers / reshapes in JAX, hot paths in Pallas)
# ----------------------------------------------------------------------------
def rkt_forward(params, dcur, corr_matrix, *, theta, lambda_, num_heads):
    q, r, t = dcur["qseqs"], dcur["rseqs"], dcur["tseqs"]
    qshft, rshft, tshft = dcur["shft_qseqs"], dcur["shft_rseqs"], dcur["shft_tseqs"]

    pid_data = jnp.concatenate([q[:, :1], qshft], axis=1)                      # (B, L)
    target = jnp.concatenate([r[:, :1], rshft], axis=1).astype(jnp.float32)
    timestamp = jnp.concatenate([t[:, :1], tshft], axis=1).astype(jnp.float32)

    B, L = pid_data.shape
    E = params["item_embeds"].shape[1]

    # get_inputs / get_query
    item_emb = params["item_embeds"][pid_data]                                 # (B, L, E)
    label = target[..., None]
    inputs = jnp.concatenate([item_emb * label, item_emb * (1.0 - label)], -1) # (B, L, 2E)
    query = item_emb

    # positional embeddings + lin_in + relu (relu fused into the dense kernel)
    inputs = inputs + params["pos_embeds"][:L][None, :, :]
    inputs = pallas_dense(inputs.reshape(B * L, 2 * E), params["w_in"],
                          params["b_in"], activation="relu").reshape(B, L, E)

    # compute_corr_matrix + threshold (gather stays in XLA)
    rel = corr_matrix[pid_data[:, :, None], pid_data[:, None, :]]              # (B, L, L)
    rel = jnp.where(rel < theta, 0.0, rel).astype(jnp.float32)

    n_layers = len(params["attn"])
    query_flat = query.reshape(B * L, E)

    # ---- first attention block ----
    outputs, attn = pallas_rkt_attention(query, inputs, rel, timestamp,
                                         params["attn"][0], lambda_, num_heads,
                                         return_attn=(n_layers == 1))
    outputs2 = pallas_transformer_block(
        query_flat, outputs.reshape(B * L, E), None,
        params["w1"], params["b1"], params["w2"], params["b2"],
        params["ln1_g"], params["ln1_b"], params["ln2_g"], params["ln2_b"])
    outputs2 = outputs2.reshape(B, L, E)

    # ---- remaining attention blocks ----
    for li, lp in enumerate(params["attn"][1:], start=1):
        is_last = li == n_layers - 1
        residual, attn_l = pallas_rkt_attention(query, outputs2, rel, timestamp, lp,
                                                lambda_, num_heads, return_attn=is_last)
        if attn_l is not None:
            attn = attn_l
        o2 = pallas_transformer_block(
            outputs2.reshape(B * L, E), residual.reshape(B * L, E), query_flat,
            params["w1"], params["b1"], params["w2"], params["b2"],
            params["ln1_g"], params["ln1_b"], params["ln2_g"], params["ln2_b"])
        outputs2 = o2.reshape(B, L, E)

    # pred = sigmoid(lin_out(outputs)) — uses FIRST layer's `outputs`, as in the
    # reference (its `outputs` variable is never reassigned in the loop).
    pred = pallas_dense(outputs.reshape(B * L, E), params["w_out"], params["b_out"],
                        activation="sigmoid").reshape(B, L)
    return pred, attn


# ----------------------------------------------------------------------------
# Deterministic parameter init (shapes match RKT_paper.__init__; K,V fused)
# ----------------------------------------------------------------------------
def init_params(key, *, num_items, embed_size, num_heads, num_layers, pos_len):
    E = embed_size
    ks = iter(jax.random.split(key, 64))

    def nrm(shape, scale=0.1):
        return scale * jax.random.normal(next(ks), shape, dtype=jnp.float32)

    params = {
        "item_embeds": nrm((num_items + 1, E)).at[0].set(0.0),   # padding_idx=0
        "pos_embeds": nrm((pos_len, 2 * E)),
        "w_in": nrm((2 * E, E)), "b_in": nrm((E,)),
        "ln1_g": jnp.ones((E,), jnp.float32), "ln1_b": jnp.zeros((E,), jnp.float32),
        "ln2_g": jnp.ones((E,), jnp.float32), "ln2_b": jnp.zeros((E,), jnp.float32),
        "w1": nrm((E, E)), "b1": nrm((E,)),
        "w2": nrm((E, E)), "b2": nrm((E,)),
        "w_out": nrm((E, 1)), "b_out": nrm((1,)),
    }
    attn = []
    for _ in range(num_layers):
        attn.append({
            "wq": nrm((E, E)), "bq": nrm((E,)),
            "wkv": nrm((E, 2 * E)), "bkv": nrm((2 * E,)),        # fused [Wk | Wv]
            "su": jax.random.uniform(next(ks), (), jnp.float32, 0.1, 1.0),
        })
    params["attn"] = tuple(attn)
    return params


# TODO(synk): compute_corr_dict branch (host-side Python dict lookups) has no device
# equivalent; only the compute_corr_matrix (dense corr table) branch is implemented.
# ----------------------------------------------------------------------------
if __name__ == "__main__":
    B, Lm1 = 2, 7                 # dcur sequences are (B, L-1); model sees L = 8
    E, H, NUM_LAYERS = 32, 4, 2   # embed_size, num_heads, num_attn_layers
    NUM_ITEMS = 50
    THETA, LAMBDA = 0.3, 0.4

    key = jax.random.PRNGKey(0)
    kp, kd = jax.random.split(key)
    params = init_params(kp, num_items=NUM_ITEMS, embed_size=E, num_heads=H,
                         num_layers=NUM_LAYERS, pos_len=Lm1 + 1)

    ks = jax.random.split(kd, 10)
    dcur = {
        "qseqs":       jax.random.randint(ks[0], (B, Lm1), 1, NUM_ITEMS + 1),
        "shft_qseqs":  jax.random.randint(ks[1], (B, Lm1), 1, NUM_ITEMS + 1),
        "cseqs":       jax.random.randint(ks[2], (B, Lm1), 1, NUM_ITEMS + 1),
        "shft_cseqs":  jax.random.randint(ks[3], (B, Lm1), 1, NUM_ITEMS + 1),
        "rseqs":       jax.random.randint(ks[4], (B, Lm1), 0, 2),
        "shft_rseqs":  jax.random.randint(ks[5], (B, Lm1), 0, 2),
        "tseqs":       jax.random.randint(ks[6], (B, Lm1), 0, 10000).astype(jnp.float32),
        "shft_tseqs":  jax.random.randint(ks[7], (B, Lm1), 0, 10000).astype(jnp.float32),
    }
    corr_matrix = jax.random.uniform(ks[8], (NUM_ITEMS + 1, NUM_ITEMS + 1), jnp.float32)

    fwd = jax.jit(functools.partial(rkt_forward, theta=THETA, lambda_=LAMBDA,
                                    num_heads=H))
    pred, attn = fwd(params, dcur, corr_matrix)
    jax.block_until_ready((pred, attn))

    L = Lm1 + 1
    assert pred.shape == (B, L), pred.shape
    assert attn.shape == (B, H, L, L), attn.shape
    assert bool(jnp.all(jnp.isfinite(pred))) and bool(jnp.all(jnp.isfinite(attn)))
    print("KERNEL_OK")
</pallas_src>

<mosaic_0001>
module attributes {stable_mosaic.version = 11 : i64} {
  func.func @_dense_kernel(%arg0: i32, %arg1: memref<16x64xf32, #tpu.memory_space<vmem>>, %arg2: memref<64x32xf32, #tpu.memory_space<vmem>>, %arg3: memref<1x32xf32, #tpu.memory_space<vmem>>, %arg4: memref<16x32xf32, #tpu.memory_space<vmem>>) attributes {dimension_semantics = [#tpu.dimension_semantics<parallel>], iteration_bounds = array<i64: 1>, scalar_prefetch = 0 : i64, scratch_operands = 0 : i64, tpu.core_type = #tpu.core_type<tc>, window_params = [{transform_indices = @transform_0, window_bounds = array<i64: 16, 64>}, {pipeline_mode = #tpu.pipeline_mode<synchronous>, transform_indices = @transform_1, window_bounds = array<i64: 64, 32>}, {pipeline_mode = #tpu.pipeline_mode<synchronous>, transform_indices = @transform_2, window_bounds = array<i64: 1, 32>}, {transform_indices = @transform_3, window_bounds = array<i64: 16, 32>}]} {
    %c0 = arith.constant 0 : index
    %c0_0 = arith.constant 0 : index
    %0 = vector.load %arg1[%c0, %c0_0] : memref<16x64xf32, #tpu.memory_space<vmem>>, vector<16x64xf32>
    %1 = arith.truncf %0 : vector<16x64xf32> to vector<16x64xbf16>
    %c0_1 = arith.constant 0 : index
    %c0_2 = arith.constant 0 : index
    %2 = vector.load %arg2[%c0_1, %c0_2] : memref<64x32xf32, #tpu.memory_space<vmem>>, vector<64x32xf32>
    %3 = arith.truncf %2 : vector<64x32xf32> to vector<64x32xbf16>
    %cst = arith.constant dense<0.000000e+00> : vector<16x32xf32>
    %4 = tpu.matmul %1, %3, %cst {dimension_numbers = #tpu.dot_dimension_numbers<[1], [0], [0], [1], [0, 0, 1, 1], [], []>} : vector<16x64xbf16>, vector<64x32xbf16>, vector<16x32xf32> -> vector<16x32xf32>
    %c0_3 = arith.constant 0 : index
    %c0_4 = arith.constant 0 : index
    %5 = vector.load %arg3[%c0_3, %c0_4] : memref<1x32xf32, #tpu.memory_space<vmem>>, vector<1x32xf32>
    %6 = vector.broadcast %5 : vector<1x32xf32> to vector<16x32xf32>
    %7 = arith.addf %4, %6 : vector<16x32xf32>
    %cst_5 = arith.constant 0.000000e+00 : f32
    %8 = vector.broadcast %cst_5 : f32 to vector<16x32xf32>
    %9 = arith.maximumf %7, %8 : vector<16x32xf32>
    %c0_6 = arith.constant 0 : index
    %c0_7 = arith.constant 0 : index
    %10 = vector.load %arg4[%c0_6, %c0_7] : memref<16x32xf32, #tpu.memory_space<vmem>>, vector<16x32xf32>
    tpu.vector_store %arg4[%c0_6, %c0_7], %9 {strides = array<i32>} : memref<16x32xf32, #tpu.memory_space<vmem>>, vector<16x32xf32>,
    return
  }
  func.func @transform_0(%arg0: i32) -> (i32, i32) {
    %c0_i32 = arith.constant 0 : i32
    %c0_i32_0 = arith.constant 0 : i32
    return %arg0, %c0_i32 : i32, i32
  }
  func.func @transform_1(%arg0: i32) -> (i32, i32) {
    %c0_i32 = arith.constant 0 : i32
    %c0_i32_0 = arith.constant 0 : i32
    %c0_i32_1 = arith.constant 0 : i32
    return %c0_i32, %c0_i32_0 : i32, i32
  }
  func.func @transform_2(%arg0: i32) -> (i32, i32) {
    %c0_i32 = arith.constant 0 : i32
    %c0_i32_0 = arith.constant 0 : i32
    %c0_i32_1 = arith.constant 0 : i32
    return %c0_i32, %c0_i32_0 : i32, i32
  }
  func.func @transform_3(%arg0: i32) -> (i32, i32) {
    %c0_i32 = arith.constant 0 : i32
    %c0_i32_0 = arith.constant 0 : i32
    return %arg0, %c0_i32 : i32, i32
  }
}

module attributes {stable_mosaic.version = 11 : i64} {
  func.func @_dense_kernel(%arg0: i32, %arg1: memref<16x32xf32, #tpu.memory_space<vmem>>, %arg2: memref<32x1xf32, #tpu.memory_space<vmem>>, %arg3: memref<1x1xf32, #tpu.memory_space<vmem>>, %arg4: memref<16x1xf32, #tpu.memory_space<vmem>>) attributes {dimension_semantics = [#tpu.dimension_semantics<parallel>], iteration_bounds = array<i64: 1>, scalar_prefetch = 0 : i64, scratch_operands = 0 : i64, tpu.core_type = #tpu.core_type<tc>, window_params = [{transform_indices = @transform_0, window_bounds = array<i64: 16, 32>}, {pipeline_mode = #tpu.pipeline_mode<synchronous>, transform_indices = @transform_1, window_bounds = array<i64: 32, 1>}, {pipeline_mode = #tpu.pipeline_mode<synchronous>, transform_indices = @transform_2, window_bounds = array<i64: 1, 1>}, {transform_indices = @transform_3, window_bounds = array<i64: 16, 1>}]} {
    %c0 = arith.constant 0 : index
    %c0_0 = arith.constant 0 : index
    %0 = vector.load %arg1[%c0, %c0_0] : memref<16x32xf32, #tpu.memory_space<vmem>>, vector<16x32xf32>
    %1 = arith.truncf %0 : vector<16x32xf32> to vector<16x32xbf16>
    %c0_1 = arith.constant 0 : index
    %c0_2 = arith.constant 0 : index
    %2 = vector.load %arg2[%c0_1, %c0_2] : memref<32x1xf32, #tpu.memory_space<vmem>>, vector<32x1xf32>
    %3 = arith.truncf %2 : vector<32x1xf32> to vector<32x1xbf16>
    %cst = arith.constant dense<0.000000e+00> : vector<16x1xf32>
    %4 = tpu.matmul %1, %3, %cst {dimension_numbers = #tpu.dot_dimension_numbers<[1], [0], [0], [1], [0, 0, 1, 1], [], []>} : vector<16x32xbf16>, vector<32x1xbf16>, vector<16x1xf32> -> vector<16x1xf32>
    %c0_3 = arith.constant 0 : index
    %c0_4 = arith.constant 0 : index
    %5 = vector.load %arg3[%c0_3, %c0_4] : memref<1x1xf32, #tpu.memory_space<vmem>>, vector<1x1xf32>
    %6 = vector.broadcast %5 : vector<1x1xf32> to vector<16x1xf32>
    %7 = arith.addf %4, %6 : vector<16x1xf32>
    %cst_5 = arith.constant 0.000000e+00 : f32
    %8 = vector.broadcast %cst_5 : f32 to vector<16x1xf32>
    %9 = arith.subf %8, %7 : vector<16x1xf32>
    %10 = math.exp %9 : vector<16x1xf32>
    %cst_6 = arith.constant 1.000000e+00 : f32
    %11 = vector.broadcast %cst_6 : f32 to vector<16x1xf32>
    %12 = arith.addf %11, %10 : vector<16x1xf32>
    %cst_7 = arith.constant 1.000000e+00 : f32
    %13 = vector.broadcast %cst_7 : f32 to vector<16x1xf32>
    %14 = arith.divf %13, %12 : vector<16x1xf32>
    %c0_8 = arith.constant 0 : index
    %c0_9 = arith.constant 0 : index
    %15 = vector.load %arg4[%c0_8, %c0_9] : memref<16x1xf32, #tpu.memory_space<vmem>>, vector<16x1xf32>
    tpu.vector_store %arg4[%c0_8, %c0_9], %14 {strides = array<i32>} : memref<16x1xf32, #tpu.memory_space<vmem>>, vector<16x1xf32>,
    return
  }
  func.func @transform_0(%arg0: i32) -> (i32, i32) {
    %c0_i32 = arith.constant 0 : i32
    %c0_i32_0 = arith.constant 0 : i32
    return %arg0, %c0_i32 : i32, i32
  }
  func.func @transform_1(%arg0: i32) -> (i32, i32) {
    %c0_i32 = arith.constant 0 : i32
    %c0_i32_0 = arith.constant 0 : i32
    %c0_i32_1 = arith.constant 0 : i32
    return %c0_i32, %c0_i32_0 : i32, i32
  }
  func.func @transform_2(%arg0: i32) -> (i32, i32) {
    %c0_i32 = arith.constant 0 : i32
    %c0_i32_0 = arith.constant 0 : i32
    %c0_i32_1 = arith.constant 0 : i32
    return %c0_i32, %c0_i32_0 : i32, i32
  }
  func.func @transform_3(%arg0: i32) -> (i32, i32) {
    %c0_i32 = arith.constant 0 : i32
    %c0_i32_0 = arith.constant 0 : i32
    return %arg0, %c0_i32 : i32, i32
  }
}

module attributes {stable_mosaic.version = 11 : i64} {
  func.func @_rkt_attention_kernel(%arg0: i32, %arg1: i32, %arg2: memref<1xf32, #tpu.memory_space<smem>>, %arg3: memref<1x8x32xf32, #tpu.memory_space<vmem>>, %arg4: memref<1x8x32xf32, #tpu.memory_space<vmem>>, %arg5: memref<1x8x8xbf16, #tpu.memory_space<vmem>>, %arg6: memref<1x8x1xf32, #tpu.memory_space<vmem>>, %arg7: memref<1x1x8xf32, #tpu.memory_space<vmem>>, %arg8: memref<32x32xf32, #tpu.memory_space<vmem>>, %arg9: memref<1x32xf32, #tpu.memory_space<vmem>>, %arg10: memref<32x64xf32, #tpu.memory_space<vmem>>, %arg11: memref<1x64xf32, #tpu.memory_space<vmem>>, %arg12: memref<1x8x32xf32, #tpu.memory_space<vmem>>, %arg13: memref<8x64xbf16, #tpu.memory_space<vmem>>, %arg14: memref<8x32xbf16, #tpu.memory_space<vmem>>) attributes {dimension_semantics = [#tpu.dimension_semantics<parallel>, #tpu.dimension_semantics<arbitrary>], iteration_bounds = array<i64: 2, 1>, scalar_prefetch = 0 : i64, scratch_operands = 2 : i64, tpu.core_type = #tpu.core_type<tc>, window_params = [{transform_indices = @transform_0, window_bounds = array<i64: 1>}, {transform_indices = @transform_1, window_bounds = array<i64: 1, 8, 32>}, {transform_indices = @transform_2, window_bounds = array<i64: 1, 8, 32>}, {transform_indices = @transform_3, window_bounds = array<i64: 1, 8, 8>}, {transform_indices = @transform_4, window_bounds = array<i64: 1, 8, 1>}, {transform_indices = @transform_5, window_bounds = array<i64: 1, 1, 8>}, {pipeline_mode = #tpu.pipeline_mode<synchronous>, transform_indices = @transform_6, window_bounds = array<i64: 32, 32>}, {pipeline_mode = #tpu.pipeline_mode<synchronous>, transform_indices = @transform_7, window_bounds = array<i64: 1, 32>}, {pipeline_mode = #tpu.pipeline_mode<synchronous>, transform_indices = @transform_8, window_bounds = array<i64: 32, 64>}, {pipeline_mode = #tpu.pipeline_mode<synchronous>, transform_indices = @transform_9, window_bounds = array<i64: 1, 64>}, {transform_indices = @transform_10, window_bounds = array<i64: 1, 8, 32>}]} {
    %c0_i32 = arith.constant 0 : i32
    %0 = arith.cmpi eq, %arg1, %c0_i32 : i32
    %1 = arith.extui %0 : i1 to i32
    %c0_i32_0 = arith.constant 0 : i32
    %2 = arith.cmpi ne, %1, %c0_i32_0 : i32
    scf.if %2 {
      %c0_84 = arith.constant 0 : index
      %c0_85 = arith.constant 0 : index
      %c0_86 = arith.constant 0 : index
      %164 = vector.load %arg4[%c0_84, %c0_85, %c0_86] : memref<1x8x32xf32, #tpu.memory_space<vmem>>, vector<1x8x32xf32>
      %165 = vector.shape_cast %164 : vector<1x8x32xf32> to vector<8x32xf32>
      %166 = arith.truncf %165 : vector<8x32xf32> to vector<8x32xbf16>
      %c0_87 = arith.constant 0 : index
      %c0_88 = arith.constant 0 : index
      %167 = vector.load %arg10[%c0_87, %c0_88] : memref<32x64xf32, #tpu.memory_space<vmem>>, vector<32x64xf32>
      %168 = arith.truncf %167 : vector<32x64xf32> to vector<32x64xbf16>
      %cst_89 = arith.constant dense<0.000000e+00> : vector<8x64xf32>
      %169 = tpu.matmul %166, %168, %cst_89 {dimension_numbers = #tpu.dot_dimension_numbers<[1], [0], [0], [1], [0, 0, 1, 1], [], []>} : vector<8x32xbf16>, vector<32x64xbf16>, vector<8x64xf32> -> vector<8x64xf32>
      %c0_90 = arith.constant 0 : index
      %c0_91 = arith.constant 0 : index
      %170 = vector.load %arg11[%c0_90, %c0_91] : memref<1x64xf32, #tpu.memory_space<vmem>>, vector<1x64xf32>
      %171 = vector.broadcast %170 : vector<1x64xf32> to vector<8x64xf32>
      %172 = arith.addf %169, %171 : vector<8x64xf32>
      %173 = arith.truncf %172 : vector<8x64xf32> to vector<8x64xbf16>
      %c0_92 = arith.constant 0 : index
      %c0_93 = arith.constant 0 : index
      %174 = vector.load %arg13[%c0_92, %c0_93] : memref<8x64xbf16, #tpu.memory_space<vmem>>, vector<8x64xbf16>
      tpu.vector_store %arg13[%c0_92, %c0_93], %173 {strides = array<i32>} : memref<8x64xbf16, #tpu.memory_space<vmem>>, vector<8x64xbf16>,
    } else {
    }
    %c0 = arith.constant 0 : index
    %c0_1 = arith.constant 0 : index
    %c0_2 = arith.constant 0 : index
    %3 = vector.load %arg3[%c0, %c0_1, %c0_2] : memref<1x8x32xf32, #tpu.memory_space<vmem>>, vector<1x8x32xf32>
    %4 = vector.shape_cast %3 : vector<1x8x32xf32> to vector<8x32xf32>
    %5 = arith.truncf %4 : vector<8x32xf32> to vector<8x32xbf16>
    %c0_3 = arith.constant 0 : index
    %c0_4 = arith.constant 0 : index
    %6 = vector.load %arg8[%c0_3, %c0_4] : memref<32x32xf32, #tpu.memory_space<vmem>>, vector<32x32xf32>
    %7 = arith.truncf %6 : vector<32x32xf32> to vector<32x32xbf16>
    %cst = arith.constant dense<0.000000e+00> : vector<8x32xf32>
    %8 = tpu.matmul %5, %7, %cst {dimension_numbers = #tpu.dot_dimension_numbers<[1], [0], [0], [1], [0, 0, 1, 1], [], []>} : vector<8x32xbf16>, vector<32x32xbf16>, vector<8x32xf32> -> vector<8x32xf32>
    %c0_5 = arith.constant 0 : index
    %c0_6 = arith.constant 0 : index
    %9 = vector.load %arg9[%c0_5, %c0_6] : memref<1x32xf32, #tpu.memory_space<vmem>>, vector<1x32xf32>
    %10 = vector.broadcast %9 : vector<1x32xf32> to vector<8x32xf32>
    %11 = arith.addf %8, %10 : vector<8x32xf32>
    %12 = arith.truncf %11 : vector<8x32xf32> to vector<8x32xbf16>
    %c0_7 = arith.constant 0 : index
    %c0_8 = arith.constant 0 : index
    %13 = vector.load %arg14[%c0_7, %c0_8] : memref<8x32xbf16, #tpu.memory_space<vmem>>, vector<8x32xbf16>
    tpu.vector_store %arg14[%c0_7, %c0_8], %12 {strides = array<i32>} : memref<8x32xbf16, #tpu.memory_space<vmem>>, vector<8x32xbf16>,
    %c0_9 = arith.constant 0 : index
    %14 = memref.load %arg2[%c0_9] : memref<1xf32, #tpu.memory_space<smem>>
    %cst_10 = arith.constant 1.000000e+00 : f32
    %15 = arith.divf %cst_10, %14 : f32
    %c8_i32 = arith.constant 8 : i32
    %16 = arith.muli %arg1, %c8_i32 : i32
    %17 = tpu.iota {dimensions = array<i32: 0>} : vector<8x8xi32>
    %18 = vector.broadcast %16 : i32 to vector<8x8xi32>
    %19 = arith.addi %18, %17 : vector<8x8xi32>
    %20 = tpu.iota {dimensions = array<i32: 1>} : vector<8x8xi32>
    %21 = arith.cmpi sge, %20, %19 : vector<8x8xi32>
    %c0_11 = arith.constant 0 : index
    %c0_12 = arith.constant 0 : index
    %c0_13 = arith.constant 0 : index
    %22 = vector.load %arg5[%c0_11, %c0_12, %c0_13] : memref<1x8x8xbf16, #tpu.memory_space<vmem>>, vector<1x8x8xbf16>
    %23 = vector.shape_cast %22 : vector<1x8x8xbf16> to vector<8x8xbf16>
    %24 = arith.extf %23 : vector<8x8xbf16> to vector<8x8xf32>
    %25 = arith.extui %21 : vector<8x8xi1> to vector<8x8xi32>
    %26 = arith.sitofp %25 : vector<8x8xi32> to vector<8x8xf32>
    %27 = arith.mulf %24, %26 : vector<8x8xf32>
    %cst_14 = arith.constant 0.000000e+00 : f32
    %28 = vector.broadcast %cst_14 : f32 to vector<8x8xf32>
    %29 = arith.cmpf oeq, %27, %28 : vector<8x8xf32>
    %cst_15 = arith.constant -1.000000e+05 : f32
    %30 = vector.broadcast %cst_15 : f32 to vector<8x8xf32>
    %31 = arith.select %29, %30, %27 : vector<8x8xi1>, vector<8x8xf32>
    %c0_16 = arith.constant 0 : index
    %c0_17 = arith.constant 0 : index
    %c0_18 = arith.constant 0 : index
    %32 = vector.load %arg6[%c0_16, %c0_17, %c0_18] : memref<1x8x1xf32, #tpu.memory_space<vmem>>, vector<1x8x1xf32>
    %33 = vector.shape_cast %32 : vector<1x8x1xf32> to vector<8x1xf32>
    %c0_19 = arith.constant 0 : index
    %c0_20 = arith.constant 0 : index
    %c0_21 = arith.constant 0 : index
    %34 = vector.load %arg7[%c0_19, %c0_20, %c0_21] : memref<1x1x8xf32, #tpu.memory_space<vmem>>, vector<1x1x8xf32>
    %35 = vector.shape_cast %34 : vector<1x1x8xf32> to vector<1x8xf32>
    %36 = vector.broadcast %33 : vector<8x1xf32> to vector<8x8xf32>
    %37 = vector.broadcast %35 : vector<1x8xf32> to vector<8x8xf32>
    %38 = arith.subf %36, %37 : vector<8x8xf32>
    %39 = math.absf %38 : vector<8x8xf32>
    %cst_22 = arith.constant 0.000000e+00 : f32
    %40 = vector.broadcast %cst_22 : f32 to vector<8x8xf32>
    %41 = arith.subf %40, %39 : vector<8x8xf32>
    %42 = vector.broadcast %15 : f32 to vector<8x8xf32>
    %43 = arith.mulf %41, %42 : vector<8x8xf32>
    %44 = math.exp %43 : vector<8x8xf32>
    %cst_23 = arith.constant -1.000000e+05 : f32
    %45 = vector.broadcast %cst_23 : f32 to vector<8x8xf32>
    %46 = arith.select %21, %45, %44 : vector<8x8xi1>, vector<8x8xf32>
    %47 = arith.addf %46, %31 : vector<8x8xf32>
    %cst_24 = arith.constant dense<0xFF800000> : vector<8xf32>
    %48 = vector.multi_reduction <maximumf>, %47, %cst_24 [1] : vector<8x8xf32> to vector<8xf32>
    %49 = vector.shape_cast %48 : vector<8xf32> to vector<8x1xf32>
    %50 = vector.broadcast %49 : vector<8x1xf32> to vector<8x8xf32>
    %51 = arith.subf %47, %50 : vector<8x8xf32>
    %52 = math.exp %51 : vector<8x8xf32>
    %cst_25 = arith.constant dense<0.000000e+00> : vector<8xf32>
    %53 = vector.multi_reduction <add>, %52, %cst_25 [1] : vector<8x8xf32> to vector<8xf32>
    %54 = vector.shape_cast %53 : vector<8xf32> to vector<8x1xf32>
    %55 = tpu.reciprocal %54 {approx = true} : vector<8x1xf32> -> vector<8x1xf32>
    %56 = vector.broadcast %55 : vector<8x1xf32> to vector<8x8xf32>
    %57 = arith.mulf %52, %56 : vector<8x8xf32>
    %cst_26 = arith.constant 6.000000e-01 : f32
    %58 = vector.broadcast %cst_26 : f32 to vector<8x8xf32>
    %59 = arith.mulf %58, %57 : vector<8x8xf32>
    %c0_27 = arith.constant 0 : index
    %c0_28 = arith.constant 0 : index
    %60 = vector.load %arg14[%c0_27, %c0_28] : memref<8x32xbf16, #tpu.memory_space<vmem>>, vector<8x8xbf16>
    %c0_29 = arith.constant 0 : index
    %c0_30 = arith.constant 0 : index
    %61 = vector.load %arg13[%c0_29, %c0_30] : memref<8x64xbf16, #tpu.memory_space<vmem>>, vector<8x8xbf16>
    %c0_31 = arith.constant 0 : index
    %c32 = arith.constant 32 : index
    %62 = vector.load %arg13[%c0_31, %c32] : memref<8x64xbf16, #tpu.memory_space<vmem>>, vector<8x8xbf16>
    %cst_32 = arith.constant dense<0.000000e+00> : vector<8x8xf32>
    %63 = tpu.matmul %60, %61, %cst_32 {dimension_numbers = #tpu.dot_dimension_numbers<[1], [1], [0], [0], [0, 0, 1, 0], [], []>} : vector<8x8xbf16>, vector<8x8xbf16>, vector<8x8xf32> -> vector<8x8xf32>
    %cst_33 = arith.constant 0.353553385 : f32
    %64 = vector.broadcast %cst_33 : f32 to vector<8x8xf32>
    %65 = arith.mulf %63, %64 : vector<8x8xf32>
    %cst_34 = arith.constant -1.000000e+32 : f32
    %66 = vector.broadcast %cst_34 : f32 to vector<8x8xf32>
    %67 = arith.select %21, %66, %65 : vector<8x8xi1>, vector<8x8xf32>
    %cst_35 = arith.constant dense<0xFF800000> : vector<8xf32>
    %68 = vector.multi_reduction <maximumf>, %67, %cst_35 [1] : vector<8x8xf32> to vector<8xf32>
    %69 = vector.shape_cast %68 : vector<8xf32> to vector<8x1xf32>
    %70 = vector.broadcast %69 : vector<8x1xf32> to vector<8x8xf32>
    %71 = arith.subf %67, %70 : vector<8x8xf32>
    %72 = math.exp %71 : vector<8x8xf32>
    %cst_36 = arith.constant dense<0.000000e+00> : vector<8xf32>
    %73 = vector.multi_reduction <add>, %72, %cst_36 [1] : vector<8x8xf32> to vector<8xf32>
    %74 = vector.shape_cast %73 : vector<8xf32> to vector<8x1xf32>
    %75 = tpu.reciprocal %74 {approx = true} : vector<8x1xf32> -> vector<8x1xf32>
    %76 = vector.broadcast %75 : vector<8x1xf32> to vector<8x8xf32>
    %77 = arith.mulf %72, %76 : vector<8x8xf32>
    %cst_37 = arith.constant 4.000000e-01 : f32
    %78 = vector.broadcast %cst_37 : f32 to vector<8x8xf32>
    %79 = arith.mulf %78, %77 : vector<8x8xf32>
    %80 = arith.addf %79, %59 : vector<8x8xf32>
    %81 = arith.truncf %80 : vector<8x8xf32> to vector<8x8xbf16>
    %cst_38 = arith.constant dense<0.000000e+00> : vector<8x8xf32>
    %82 = tpu.matmul %81, %62, %cst_38 {dimension_numbers = #tpu.dot_dimension_numbers<[1], [0], [0], [1], [0, 0, 1, 1], [], []>} : vector<8x8xbf16>, vector<8x8xbf16>, vector<8x8xf32> -> vector<8x8xf32>
    %c0_39 = arith.constant 0 : index
    %c0_40 = arith.constant 0 : index
    %c0_41 = arith.constant 0 : index
    %83 = vector.load %arg12[%c0_39, %c0_40, %c0_41] : memref<1x8x32xf32, #tpu.memory_space<vmem>>, vector<1x8x8xf32>
    %84 = vector.shape_cast %83 : vector<1x8x8xf32> to vector<8x8xf32>
    %85 = vector.shape_cast %82 : vector<8x8xf32> to vector<1x8x8xf32>
    tpu.vector_store %arg12[%c0_39, %c0_40, %c0_41], %85 {strides = array<i32>} : memref<1x8x32xf32, #tpu.memory_space<vmem>>, vector<1x8x8xf32>,
    %c0_42 = arith.constant 0 : index
    %c8 = arith.constant 8 : index
    %86 = vector.load %arg14[%c0_42, %c8] : memref<8x32xbf16, #tpu.memory_space<vmem>>, vector<8x8xbf16>
    %c0_43 = arith.constant 0 : index
    %c8_44 = arith.constant 8 : index
    %87 = vector.load %arg13[%c0_43, %c8_44] : memref<8x64xbf16, #tpu.memory_space<vmem>>, vector<8x8xbf16>
    %c0_45 = arith.constant 0 : index
    %c40 = arith.constant 40 : index
    %88 = vector.load %arg13[%c0_45, %c40] : memref<8x64xbf16, #tpu.memory_space<vmem>>, vector<8x8xbf16>
    %cst_46 = arith.constant dense<0.000000e+00> : vector<8x8xf32>
    %89 = tpu.matmul %86, %87, %cst_46 {dimension_numbers = #tpu.dot_dimension_numbers<[1], [1], [0], [0], [0, 0, 1, 0], [], []>} : vector<8x8xbf16>, vector<8x8xbf16>, vector<8x8xf32> -> vector<8x8xf32>
    %cst_47 = arith.constant 0.353553385 : f32
    %90 = vector.broadcast %cst_47 : f32 to vector<8x8xf32>
    %91 = arith.mulf %89, %90 : vector<8x8xf32>
    %cst_48 = arith.constant -1.000000e+32 : f32
    %92 = vector.broadcast %cst_48 : f32 to vector<8x8xf32>
    %93 = arith.select %21, %92, %91 : vector<8x8xi1>, vector<8x8xf32>
    %cst_49 = arith.constant dense<0xFF800000> : vector<8xf32>
    %94 = vector.multi_reduction <maximumf>, %93, %cst_49 [1] : vector<8x8xf32> to vector<8xf32>
    %95 = vector.shape_cast %94 : vector<8xf32> to vector<8x1xf32>
    %96 = vector.broadcast %95 : vector<8x1xf32> to vector<8x8xf32>
    %97 = arith.subf %93, %96 : vector<8x8xf32>
    %98 = math.exp %97 : vector<8x8xf32>
    %cst_50 = arith.constant dense<0.000000e+00> : vector<8xf32>
    %99 = vector.multi_reduction <add>, %98, %cst_50 [1] : vector<8x8xf32> to vector<8xf32>
    %100 = vector.shape_cast %99 : vector<8xf32> to vector<8x1xf32>
    %101 = tpu.reciprocal %100 {approx = true} : vector<8x1xf32> -> vector<8x1xf32>
    %102 = vector.broadcast %101 : vector<8x1xf32> to vector<8x8xf32>
    %103 = arith.mulf %98, %102 : vector<8x8xf32>
    %cst_51 = arith.constant 4.000000e-01 : f32
    %104 = vector.broadcast %cst_51 : f32 to vector<8x8xf32>
    %105 = arith.mulf %104, %103 : vector<8x8xf32>
    %106 = arith.addf %105, %59 : vector<8x8xf32>
    %107 = arith.truncf %106 : vector<8x8xf32> to vector<8x8xbf16>
    %cst_52 = arith.constant dense<0.000000e+00> : vector<8x8xf32>
    %108 = tpu.matmul %107, %88, %cst_52 {dimension_numbers = #tpu.dot_dimension_numbers<[1], [0], [0], [1], [0, 0, 1, 1], [], []>} : vector<8x8xbf16>, vector<8x8xbf16>, vector<8x8xf32> -> vector<8x8xf32>
    %c0_53 = arith.constant 0 : index
    %c0_54 = arith.constant 0 : index
    %c8_55 = arith.constant 8 : index
    %109 = vector.load %arg12[%c0_53, %c0_54, %c8_55] : memref<1x8x32xf32, #tpu.memory_space<vmem>>, vector<1x8x8xf32>
    %110 = vector.shape_cast %109 : vector<1x8x8xf32> to vector<8x8xf32>
    %111 = vector.shape_cast %108 : vector<8x8xf32> to vector<1x8x8xf32>
    tpu.vector_store %arg12[%c0_53, %c0_54, %c8_55], %111 {strides = array<i32>} : memref<1x8x32xf32, #tpu.memory_space<vmem>>, vector<1x8x8xf32>,
    %c0_56 = arith.constant 0 : index
    %c16 = arith.constant 16 : index
    %112 = vector.load %arg14[%c0_56, %c16] : memref<8x32xbf16, #tpu.memory_space<vmem>>, vector<8x8xbf16>
    %c0_57 = arith.constant 0 : index
    %c16_58 = arith.constant 16 : index
    %113 = vector.load %arg13[%c0_57, %c16_58] : memref<8x64xbf16, #tpu.memory_space<vmem>>, vector<8x8xbf16>
    %c0_59 = arith.constant 0 : index
    %c48 = arith.constant 48 : index
    %114 = vector.load %arg13[%c0_59, %c48] : memref<8x64xbf16, #tpu.memory_space<vmem>>, vector<8x8xbf16>
    %cst_60 = arith.constant dense<0.000000e+00> : vector<8x8xf32>
    %115 = tpu.matmul %112, %113, %cst_60 {dimension_numbers = #tpu.dot_dimension_numbers<[1], [1], [0], [0], [0, 0, 1, 0], [], []>} : vector<8x8xbf16>, vector<8x8xbf16>, vector<8x8xf32> -> vector<8x8xf32>
    %cst_61 = arith.constant 0.353553385 : f32
    %116 = vector.broadcast %cst_61 : f32 to vector<8x8xf32>
    %117 = arith.mulf %115, %116 : vector<8x8xf32>
    %cst_62 = arith.constant -1.000000e+32 : f32
    %118 = vector.broadcast %cst_62 : f32 to vector<8x8xf32>
    %119 = arith.select %21, %118, %117 : vector<8x8xi1>, vector<8x8xf32>
    %cst_63 = arith.constant dense<0xFF800000> : vector<8xf32>
    %120 = vector.multi_reduction <maximumf>, %119, %cst_63 [1] : vector<8x8xf32> to vector<8xf32>
    %121 = vector.shape_cast %120 : vector<8xf32> to vector<8x1xf32>
    %122 = vector.broadcast %121 : vector<8x1xf32> to vector<8x8xf32>
    %123 = arith.subf %119, %122 : vector<8x8xf32>
    %124 = math.exp %123 : vector<8x8xf32>
    %cst_64 = arith.constant dense<0.000000e+00> : vector<8xf32>
    %125 = vector.multi_reduction <add>, %124, %cst_64 [1] : vector<8x8xf32> to vector<8xf32>
    %126 = vector.shape_cast %125 : vector<8xf32> to vector<8x1xf32>
    %127 = tpu.reciprocal %126 {approx = true} : vector<8x1xf32> -> vector<8x1xf32>
    %128 = vector.broadcast %127 : vector<8x1xf32> to vector<8x8xf32>
    %129 = arith.mulf %124, %128 : vector<8x8xf32>
    %cst_65 = arith.constant 4.000000e-01 : f32
    %130 = vector.broadcast %cst_65 : f32 to vector<8x8xf32>
    %131 = arith.mulf %130, %129 : vector<8x8xf32>
    %132 = arith.addf %131, %59 : vector<8x8xf32>
    %133 = arith.truncf %132 : vector<8x8xf32> to vector<8x8xbf16>
    %cst_66 = arith.constant dense<0.000000e+00> : vector<8x8xf32>
    %134 = tpu.matmul %133, %114, %cst_66 {dimension_numbers = #tpu.dot_dimension_numbers<[1], [0], [0], [1], [0, 0, 1, 1], [], []>} : vector<8x8xbf16>, vector<8x8xbf16>, vector<8x8xf32> -> vector<8x8xf32>
    %c0_67 = arith.constant 0 : index
    %c0_68 = arith.constant 0 : index
    %c16_69 = arith.constant 16 : index
    %135 = vector.load %arg12[%c0_67, %c0_68, %c16_69] : memref<1x8x32xf32, #tpu.memory_space<vmem>>, vector<1x8x8xf32>
    %136 = vector.shape_cast %135 : vector<1x8x8xf32> to vector<8x8xf32>
    %137 = vector.shape_cast %134 : vector<8x8xf32> to vector<1x8x8xf32>
    tpu.vector_store %arg12[%c0_67, %c0_68, %c16_69], %137 {strides = array<i32>} : memref<1x8x32xf32, #tpu.memory_space<vmem>>, vector<1x8x8xf32>,
    %c0_70 = arith.constant 0 : index
    %c24 = arith.constant 24 : index
    %138 = vector.load %arg14[%c0_70, %c24] : memref<8x32xbf16, #tpu.memory_space<vmem>>, vector<8x8xbf16>
    %c0_71 = arith.constant 0 : index
    %c24_72 = arith.constant 24 : index
    %139 = vector.load %arg13[%c0_71, %c24_72] : memref<8x64xbf16, #tpu.memory_space<vmem>>, vector<8x8xbf16>
    %c0_73 = arith.constant 0 : index
    %c56 = arith.constant 56 : index
    %140 = vector.load %arg13[%c0_73, %c56] : memref<8x64xbf16, #tpu.memory_space<vmem>>, vector<8x8xbf16>
    %cst_74 = arith.constant dense<0.000000e+00> : vector<8x8xf32>
    %141 = tpu.matmul %138, %139, %cst_74 {dimension_numbers = #tpu.dot_dimension_numbers<[1], [1], [0], [0], [0, 0, 1, 0], [], []>} : vector<8x8xbf16>, vector<8x8xbf16>, vector<8x8xf32> -> vector<8x8xf32>
    %cst_75 = arith.constant 0.353553385 : f32
    %142 = vector.broadcast %cst_75 : f32 to vector<8x8xf32>
    %143 = arith.mulf %141, %142 : vector<8x8xf32>
    %cst_76 = arith.constant -1.000000e+32 : f32
    %144 = vector.broadcast %cst_76 : f32 to vector<8x8xf32>
    %145 = arith.select %21, %144, %143 : vector<8x8xi1>, vector<8x8xf32>
    %cst_77 = arith.constant dense<0xFF800000> : vector<8xf32>
    %146 = vector.multi_reduction <maximumf>, %145, %cst_77 [1] : vector<8x8xf32> to vector<8xf32>
    %147 = vector.shape_cast %146 : vector<8xf32> to vector<8x1xf32>
    %148 = vector.broadcast %147 : vector<8x1xf32> to vector<8x8xf32>
    %149 = arith.subf %145, %148 : vector<8x8xf32>
    %150 = math.exp %149 : vector<8x8xf32>
    %cst_78 = arith.constant dense<0.000000e+00> : vector<8xf32>
    %151 = vector.multi_reduction <add>, %150, %cst_78 [1] : vector<8x8xf32> to vector<8xf32>
    %152 = vector.shape_cast %151 : vector<8xf32> to vector<8x1xf32>
    %153 = tpu.reciprocal %152 {approx = true} : vector<8x1xf32> -> vector<8x1xf32>
    %154 = vector.broadcast %153 : vector<8x1xf32> to vector<8x8xf32>
    %155 = arith.mulf %150, %154 : vector<8x8xf32>
    %cst_79 = arith.constant 4.000000e-01 : f32
    %156 = vector.broadcast %cst_79 : f32 to vector<8x8xf32>
    %157 = arith.mulf %156, %155 : vector<8x8xf32>
    %158 = arith.addf %157, %59 : vector<8x8xf32>
    %159 = arith.truncf %158 : vector<8x8xf32> to vector<8x8xbf16>
    %cst_80 = arith.constant dense<0.000000e+00> : vector<8x8xf32>
    %160 = tpu.matmul %159, %140, %cst_80 {dimension_numbers = #tpu.dot_dimension_numbers<[1], [0], [0], [1], [0, 0, 1, 1], [], []>} : vector<8x8xbf16>, vector<8x8xbf16>, vector<8x8xf32> -> vector<8x8xf32>
    %c0_81 = arith.constant 0 : index
    %c0_82 = arith.constant 0 : index
    %c24_83 = arith.constant 24 : index
    %161 = vector.load %arg12[%c0_81, %c0_82, %c24_83] : memref<1x8x32xf32, #tpu.memory_space<vmem>>, vector<1x8x8xf32>
    %162 = vector.shape_cast %161 : vector<1x8x8xf32> to vector<8x8xf32>
    %163 = vector.shape_cast %160 : vector<8x8xf32> to vector<1x8x8xf32>
    tpu.vector_store %arg12[%c0_81, %c0_82, %c24_83], %163 {strides = array<i32>} : memref<1x8x32xf32, #tpu.memory_space<vmem>>, vector<1x8x8xf32>,
    return
  }
  func.func @transform_0(%arg0: i32, %arg1: i32) -> i32 {
    %c0_i32 = arith.constant 0 : i32
    %c0_i32_0 = arith.constant 0 : i32
    return %c0_i32 : i32
  }
  func.func @transform_1(%arg0: i32, %arg1: i32) -> (i32, i32, i32) {
    %c0_i32 = arith.constant 0 : i32
    %c0_i32_0 = arith.constant 0 : i32
    return %arg0, %arg1, %c0_i32 : i32, i32, i32
  }
  func.func @transform_2(%arg0: i32, %arg1: i32) -> (i32, i32, i32) {
    %c0_i32 = arith.constant 0 : i32
    %c0_i32_0 = arith.constant 0 : i32
    %c0_i32_1 = arith.constant 0 : i32
    return %arg0, %c0_i32, %c0_i32_0 : i32, i32, i32
  }
  func.func @transform_3(%arg0: i32, %arg1: i32) -> (i32, i32, i32) {
    %c0_i32 = arith.constant 0 : i32
    %c0_i32_0 = arith.constant 0 : i32
    return %arg0, %arg1, %c0_i32 : i32, i32, i32
  }
  func.func @transform_4(%arg0: i32, %arg1: i32) -> (i32, i32, i32) {
    %c0_i32 = arith.constant 0 : i32
    %c0_i32_0 = arith.constant 0 : i32
    return %arg0, %arg1, %c0_i32 : i32, i32, i32
  }
  func.func @transform_5(%arg0: i32, %arg1: i32) -> (i32, i32, i32) {
    %c0_i32 = arith.constant 0 : i32
    %c0_i32_0 = arith.constant 0 : i32
    %c0_i32_1 = arith.constant 0 : i32
    return %arg0, %c0_i32, %c0_i32_0 : i32, i32, i32
  }
  func.func @transform_6(%arg0: i32, %arg1: i32) -> (i32, i32) {
    %c0_i32 = arith.constant 0 : i32
    %c0_i32_0 = arith.constant 0 : i32
    %c0_i32_1 = arith.constant 0 : i32
    return %c0_i32, %c0_i32_0 : i32, i32
  }
  func.func @transform_7(%arg0: i32, %arg1: i32) -> (i32, i32) {
    %c0_i32 = arith.constant 0 : i32
    %c0_i32_0 = arith.constant 0 : i32
    %c0_i32_1 = arith.constant 0 : i32
    return %c0_i32, %c0_i32_0 : i32, i32
  }
  func.func @transform_8(%arg0: i32, %arg1: i32) -> (i32, i32) {
    %c0_i32 = arith.constant 0 : i32
    %c0_i32_0 = arith.constant 0 : i32
    %c0_i32_1 = arith.constant 0 : i32
    return %c0_i32, %c0_i32_0 : i32, i32
  }
  func.func @transform_9(%arg0: i32, %arg1: i32) -> (i32, i32) {
    %c0_i32 = arith.constant 0 : i32
    %c0_i32_0 = arith.constant 0 : i32
    %c0_i32_1 = arith.constant 0 : i32
    return %c0_i32, %c0_i32_0 : i32, i32
  }
  func.func @transform_10(%arg0: i32, %arg1: i32) -> (i32, i32, i32) {
    %c0_i32 = arith.constant 0 : i32
    %c0_i32_0 = arith.constant 0 : i32
    return %arg0, %arg1, %c0_i32 : i32, i32, i32
  }
}

module attributes {stable_mosaic.version = 11 : i64} {
  func.func @_block_kernel(%arg0: i32, %arg1: memref<16x32xf32, #tpu.memory_space<vmem>>, %arg2: memref<16x32xf32, #tpu.memory_space<vmem>>, %arg3: memref<32x32xf32, #tpu.memory_space<vmem>>, %arg4: memref<1x32xf32, #tpu.memory_space<vmem>>, %arg5: memref<32x32xf32, #tpu.memory_space<vmem>>, %arg6: memref<1x32xf32, #tpu.memory_space<vmem>>, %arg7: memref<1x32xf32, #tpu.memory_space<vmem>>, %arg8: memref<1x32xf32, #tpu.memory_space<vmem>>, %arg9: memref<1x32xf32, #tpu.memory_space<vmem>>, %arg10: memref<1x32xf32, #tpu.memory_space<vmem>>, %arg11: memref<16x32xf32, #tpu.memory_space<vmem>>) attributes {dimension_semantics = [#tpu.dimension_semantics<parallel>], iteration_bounds = array<i64: 1>, scalar_prefetch = 0 : i64, scratch_operands = 0 : i64, tpu.core_type = #tpu.core_type<tc>, window_params = [{transform_indices = @transform_0, window_bounds = array<i64: 16, 32>}, {transform_indices = @transform_1, window_bounds = array<i64: 16, 32>}, {pipeline_mode = #tpu.pipeline_mode<synchronous>, transform_indices = @transform_2, window_bounds = array<i64: 32, 32>}, {pipeline_mode = #tpu.pipeline_mode<synchronous>, transform_indices = @transform_3, window_bounds = array<i64: 1, 32>}, {pipeline_mode = #tpu.pipeline_mode<synchronous>, transform_indices = @transform_4, window_bounds = array<i64: 32, 32>}, {pipeline_mode = #tpu.pipeline_mode<synchronous>, transform_indices = @transform_5, window_bounds = array<i64: 1, 32>}, {pipeline_mode = #tpu.pipeline_mode<synchronous>, transform_indices = @transform_6, window_bounds = array<i64: 1, 32>}, {pipeline_mode = #tpu.pipeline_mode<synchronous>, transform_indices = @transform_7, window_bounds = array<i64: 1, 32>}, {pipeline_mode = #tpu.pipeline_mode<synchronous>, transform_indices = @transform_8, window_bounds = array<i64: 1, 32>}, {pipeline_mode = #tpu.pipeline_mode<synchronous>, transform_indices = @transform_9, window_bounds = array<i64: 1, 32>}, {transform_indices = @transform_10, window_bounds = array<i64: 16, 32>}]} {
    %c0 = arith.constant 0 : index
    %c0_0 = arith.constant 0 : index
    %0 = vector.load %arg1[%c0, %c0_0] : memref<16x32xf32, #tpu.memory_space<vmem>>, vector<16x32xf32>
    %c0_1 = arith.constant 0 : index
    %c0_2 = arith.constant 0 : index
    %1 = vector.load %arg2[%c0_1, %c0_2] : memref<16x32xf32, #tpu.memory_space<vmem>>, vector<16x32xf32>
    %2 = arith.addf %0, %1 : vector<16x32xf32>
    %cst = arith.constant dense<0.000000e+00> : vector<16xf32>
    %3 = vector.multi_reduction <add>, %2, %cst [1] : vector<16x32xf32> to vector<16xf32>
    %4 = vector.shape_cast %3 : vector<16xf32> to vector<16x1xf32>
    %cst_3 = arith.constant 3.200000e+01 : f32
    %5 = vector.broadcast %cst_3 : f32 to vector<16x1xf32>
    %6 = arith.divf %4, %5 : vector<16x1xf32>
    %7 = vector.broadcast %6 : vector<16x1xf32> to vector<16x32xf32>
    %8 = arith.subf %2, %7 : vector<16x32xf32>
    %9 = arith.mulf %8, %8 : vector<16x32xf32>
    %cst_4 = arith.constant dense<0.000000e+00> : vector<16xf32>
    %10 = vector.multi_reduction <add>, %9, %cst_4 [1] : vector<16x32xf32> to vector<16xf32>
    %11 = vector.shape_cast %10 : vector<16xf32> to vector<16x1xf32>
    %cst_5 = arith.constant 3.200000e+01 : f32
    %12 = vector.broadcast %cst_5 : f32 to vector<16x1xf32>
    %13 = arith.divf %11, %12 : vector<16x1xf32>
    %14 = vector.broadcast %6 : vector<16x1xf32> to vector<16x32xf32>
    %15 = arith.subf %2, %14 : vector<16x32xf32>
    %cst_6 = arith.constant 9.99999974E-6 : f32
    %16 = vector.broadcast %cst_6 : f32 to vector<16x1xf32>
    %17 = arith.addf %13, %16 : vector<16x1xf32>
    %18 = math.rsqrt %17 : vector<16x1xf32>
    %19 = vector.broadcast %18 : vector<16x1xf32> to vector<16x32xf32>
    %20 = arith.mulf %15, %19 : vector<16x32xf32>
    %c0_7 = arith.constant 0 : index
    %c0_8 = arith.constant 0 : index
    %21 = vector.load %arg7[%c0_7, %c0_8] : memref<1x32xf32, #tpu.memory_space<vmem>>, vector<1x32xf32>
    %22 = vector.broadcast %21 : vector<1x32xf32> to vector<16x32xf32>
    %23 = arith.mulf %20, %22 : vector<16x32xf32>
    %c0_9 = arith.constant 0 : index
    %c0_10 = arith.constant 0 : index
    %24 = vector.load %arg8[%c0_9, %c0_10] : memref<1x32xf32, #tpu.memory_space<vmem>>, vector<1x32xf32>
    %25 = vector.broadcast %24 : vector<1x32xf32> to vector<16x32xf32>
    %26 = arith.addf %23, %25 : vector<16x32xf32>
    %27 = arith.truncf %26 : vector<16x32xf32> to vector<16x32xbf16>
    %c0_11 = arith.constant 0 : index
    %c0_12 = arith.constant 0 : index
    %28 = vector.load %arg3[%c0_11, %c0_12] : memref<32x32xf32, #tpu.memory_space<vmem>>, vector<32x32xf32>
    %29 = arith.truncf %28 : vector<32x32xf32> to vector<32x32xbf16>
    %cst_13 = arith.constant dense<0.000000e+00> : vector<16x32xf32>
    %30 = tpu.matmul %27, %29, %cst_13 {dimension_numbers = #tpu.dot_dimension_numbers<[1], [0], [0], [1], [0, 0, 1, 1], [], []>} : vector<16x32xbf16>, vector<32x32xbf16>, vector<16x32xf32> -> vector<16x32xf32>
    %c0_14 = arith.constant 0 : index
    %c0_15 = arith.constant 0 : index
    %31 = vector.load %arg4[%c0_14, %c0_15] : memref<1x32xf32, #tpu.memory_space<vmem>>, vector<1x32xf32>
    %32 = vector.broadcast %31 : vector<1x32xf32> to vector<16x32xf32>
    %33 = arith.addf %30, %32 : vector<16x32xf32>
    %cst_16 = arith.constant 0.000000e+00 : f32
    %34 = vector.broadcast %cst_16 : f32 to vector<16x32xf32>
    %35 = arith.maximumf %33, %34 : vector<16x32xf32>
    %36 = arith.truncf %35 : vector<16x32xf32> to vector<16x32xbf16>
    %c0_17 = arith.constant 0 : index
    %c0_18 = arith.constant 0 : index
    %37 = vector.load %arg5[%c0_17, %c0_18] : memref<32x32xf32, #tpu.memory_space<vmem>>, vector<32x32xf32>
    %38 = arith.truncf %37 : vector<32x32xf32> to vector<32x32xbf16>
    %cst_19 = arith.constant dense<0.000000e+00> : vector<16x32xf32>
    %39 = tpu.matmul %36, %38, %cst_19 {dimension_numbers = #tpu.dot_dimension_numbers<[1], [0], [0], [1], [0, 0, 1, 1], [], []>} : vector<16x32xbf16>, vector<32x32xbf16>, vector<16x32xf32> -> vector<16x32xf32>
    %c0_20 = arith.constant 0 : index
    %c0_21 = arith.constant 0 : index
    %40 = vector.load %arg6[%c0_20, %c0_21] : memref<1x32xf32, #tpu.memory_space<vmem>>, vector<1x32xf32>
    %41 = vector.broadcast %40 : vector<1x32xf32> to vector<16x32xf32>
    %42 = arith.addf %39, %41 : vector<16x32xf32>
    %43 = arith.addf %42, %26 : vector<16x32xf32>
    %cst_22 = arith.constant dense<0.000000e+00> : vector<16xf32>
    %44 = vector.multi_reduction <add>, %43, %cst_22 [1] : vector<16x32xf32> to vector<16xf32>
    %45 = vector.shape_cast %44 : vector<16xf32> to vector<16x1xf32>
    %cst_23 = arith.constant 3.200000e+01 : f32
    %46 = vector.broadcast %cst_23 : f32 to vector<16x1xf32>
    %47 = arith.divf %45, %46 : vector<16x1xf32>
    %48 = vector.broadcast %47 : vector<16x1xf32> to vector<16x32xf32>
    %49 = arith.subf %43, %48 : vector<16x32xf32>
    %50 = arith.mulf %49, %49 : vector<16x32xf32>
    %cst_24 = arith.constant dense<0.000000e+00> : vector<16xf32>
    %51 = vector.multi_reduction <add>, %50, %cst_24 [1] : vector<16x32xf32> to vector<16xf32>
    %52 = vector.shape_cast %51 : vector<16xf32> to vector<16x1xf32>
    %cst_25 = arith.constant 3.200000e+01 : f32
    %53 = vector.broadcast %cst_25 : f32 to vector<16x1xf32>
    %54 = arith.divf %52, %53 : vector<16x1xf32>
    %55 = vector.broadcast %47 : vector<16x1xf32> to vector<16x32xf32>
    %56 = arith.subf %43, %55 : vector<16x32xf32>
    %cst_26 = arith.constant 9.99999974E-6 : f32
    %57 = vector.broadcast %cst_26 : f32 to vector<16x1xf32>
    %58 = arith.addf %54, %57 : vector<16x1xf32>
    %59 = math.rsqrt %58 : vector<16x1xf32>
    %60 = vector.broadcast %59 : vector<16x1xf32> to vector<16x32xf32>
    %61 = arith.mulf %56, %60 : vector<16x32xf32>
    %c0_27 = arith.constant 0 : index
    %c0_28 = arith.constant 0 : index
    %62 = vector.load %arg9[%c0_27, %c0_28] : memref<1x32xf32, #tpu.memory_space<vmem>>, vector<1x32xf32>
    %63 = vector.broadcast %62 : vector<1x32xf32> to vector<16x32xf32>
    %64 = arith.mulf %61, %63 : vector<16x32xf32>
    %c0_29 = arith.constant 0 : index
    %c0_30 = arith.constant 0 : index
    %65 = vector.load %arg10[%c0_29, %c0_30] : memref<1x32xf32, #tpu.memory_space<vmem>>, vector<1x32xf32>
    %66 = vector.broadcast %65 : vector<1x32xf32> to vector<16x32xf32>
    %67 = arith.addf %64, %66 : vector<16x32xf32>
    %c0_31 = arith.constant 0 : index
    %c0_32 = arith.constant 0 : index
    %68 = vector.load %arg11[%c0_31, %c0_32] : memref<16x32xf32, #tpu.memory_space<vmem>>, vector<16x32xf32>
    tpu.vector_store %arg11[%c0_31, %c0_32], %67 {strides = array<i32>} : memref<16x32xf32, #tpu.memory_space<vmem>>, vector<16x32xf32>,
    return
  }
  func.func @transform_0(%arg0: i32) -> (i32, i32) {
    %c0_i32 = arith.constant 0 : i32
    %c0_i32_0 = arith.constant 0 : i32
    return %arg0, %c0_i32 : i32, i32
  }
  func.func @transform_1(%arg0: i32) -> (i32, i32) {
    %c0_i32 = arith.constant 0 : i32
    %c0_i32_0 = arith.constant 0 : i32
    return %arg0, %c0_i32 : i32, i32
  }
  func.func @transform_2(%arg0: i32) -> (i32, i32) {
    %c0_i32 = arith.constant 0 : i32
    %c0_i32_0 = arith.constant 0 : i32
    %c0_i32_1 = arith.constant 0 : i32
    return %c0_i32, %c0_i32_0 : i32, i32
  }
  func.func @transform_3(%arg0: i32) -> (i32, i32) {
    %c0_i32 = arith.constant 0 : i32
    %c0_i32_0 = arith.constant 0 : i32
    %c0_i32_1 = arith.constant 0 : i32
    return %c0_i32, %c0_i32_0 : i32, i32
  }
  func.func @transform_4(%arg0: i32) -> (i32, i32) {
    %c0_i32 = arith.constant 0 : i32
    %c0_i32_0 = arith.constant 0 : i32
    %c0_i32_1 = arith.constant 0 : i32
    return %c0_i32, %c0_i32_0 : i32, i32
  }
  func.func @transform_5(%arg0: i32) -> (i32, i32) {
    %c0_i32 = arith.constant 0 : i32
    %c0_i32_0 = arith.constant 0 : i32
    %c0_i32_1 = arith.constant 0 : i32
    return %c0_i32, %c0_i32_0 : i32, i32
  }
  func.func @transform_6(%arg0: i32) -> (i32, i32) {
    %c0_i32 = arith.constant 0 : i32
    %c0_i32_0 = arith.constant 0 : i32
    %c0_i32_1 = arith.constant 0 : i32
    return %c0_i32, %c0_i32_0 : i32, i32
  }
  func.func @transform_7(%arg0: i32) -> (i32, i32) {
    %c0_i32 = arith.constant 0 : i32
    %c0_i32_0 = arith.constant 0 : i32
    %c0_i32_1 = arith.constant 0 : i32
    return %c0_i32, %c0_i32_0 : i32, i32
  }
  func.func @transform_8(%arg0: i32) -> (i32, i32) {
    %c0_i32 = arith.constant 0 : i32
    %c0_i32_0 = arith.constant 0 : i32
    %c0_i32_1 = arith.constant 0 : i32
    return %c0_i32, %c0_i32_0 : i32, i32
  }
  func.func @transform_9(%arg0: i32) -> (i32, i32) {
    %c0_i32 = arith.constant 0 : i32
    %c0_i32_0 = arith.constant 0 : i32
    %c0_i32_1 = arith.constant 0 : i32
    return %c0_i32, %c0_i32_0 : i32, i32
  }
  func.func @transform_10(%arg0: i32) -> (i32, i32) {
    %c0_i32 = arith.constant 0 : i32
    %c0_i32_0 = arith.constant 0 : i32
    return %arg0, %c0_i32 : i32, i32
  }
}

module attributes {stable_mosaic.version = 11 : i64} {
  func.func @_rkt_attention_kernel(%arg0: i32, %arg1: i32, %arg2: memref<1xf32, #tpu.memory_space<smem>>, %arg3: memref<1x8x32xf32, #tpu.memory_space<vmem>>, %arg4: memref<1x8x32xf32, #tpu.memory_space<vmem>>, %arg5: memref<1x8x8xbf16, #tpu.memory_space<vmem>>, %arg6: memref<1x8x1xf32, #tpu.memory_space<vmem>>, %arg7: memref<1x1x8xf32, #tpu.memory_space<vmem>>, %arg8: memref<32x32xf32, #tpu.memory_space<vmem>>, %arg9: memref<1x32xf32, #tpu.memory_space<vmem>>, %arg10: memref<32x64xf32, #tpu.memory_space<vmem>>, %arg11: memref<1x64xf32, #tpu.memory_space<vmem>>, %arg12: memref<1x8x32xf32, #tpu.memory_space<vmem>>, %arg13: memref<1x4x8x8xf32, #tpu.memory_space<vmem>>, %arg14: memref<8x64xbf16, #tpu.memory_space<vmem>>, %arg15: memref<8x32xbf16, #tpu.memory_space<vmem>>) attributes {dimension_semantics = [#tpu.dimension_semantics<parallel>, #tpu.dimension_semantics<arbitrary>], iteration_bounds = array<i64: 2, 1>, scalar_prefetch = 0 : i64, scratch_operands = 2 : i64, tpu.core_type = #tpu.core_type<tc>, window_params = [{transform_indices = @transform_0, window_bounds = array<i64: 1>}, {transform_indices = @transform_1, window_bounds = array<i64: 1, 8, 32>}, {transform_indices = @transform_2, window_bounds = array<i64: 1, 8, 32>}, {transform_indices = @transform_3, window_bounds = array<i64: 1, 8, 8>}, {transform_indices = @transform_4, window_bounds = array<i64: 1, 8, 1>}, {transform_indices = @transform_5, window_bounds = array<i64: 1, 1, 8>}, {pipeline_mode = #tpu.pipeline_mode<synchronous>, transform_indices = @transform_6, window_bounds = array<i64: 32, 32>}, {pipeline_mode = #tpu.pipeline_mode<synchronous>, transform_indices = @transform_7, window_bounds = array<i64: 1, 32>}, {pipeline_mode = #tpu.pipeline_mode<synchronous>, transform_indices = @transform_8, window_bounds = array<i64: 32, 64>}, {pipeline_mode = #tpu.pipeline_mode<synchronous>, transform_indices = @transform_9, window_bounds = array<i64: 1, 64>}, {transform_indices = @transform_10, window_bounds = array<i64: 1, 8, 32>}, {transform_indices = @transform_11, window_bounds = array<i64: 1, 4, 8, 8>}]} {
    %c0_i32 = arith.constant 0 : i32
    %0 = arith.cmpi eq, %arg1, %c0_i32 : i32
    %1 = arith.extui %0 : i1 to i32
    %c0_i32_0 = arith.constant 0 : i32
    %2 = arith.cmpi ne, %1, %c0_i32_0 : i32
    scf.if %2 {
      %c0_97 = arith.constant 0 : index
      %c0_98 = arith.constant 0 : index
      %c0_99 = arith.constant 0 : index
      %176 = vector.load %arg4[%c0_97, %c0_98, %c0_99] : memref<1x8x32xf32, #tpu.memory_space<vmem>>, vector<1x8x32xf32>
      %177 = vector.shape_cast %176 : vector<1x8x32xf32> to vector<8x32xf32>
      %178 = arith.truncf %177 : vector<8x32xf32> to vector<8x32xbf16>
      %c0_100 = arith.constant 0 : index
      %c0_101 = arith.constant 0 : index
      %179 = vector.load %arg10[%c0_100, %c0_101] : memref<32x64xf32, #tpu.memory_space<vmem>>, vector<32x64xf32>
      %180 = arith.truncf %179 : vector<32x64xf32> to vector<32x64xbf16>
      %cst_102 = arith.constant dense<0.000000e+00> : vector<8x64xf32>
      %181 = tpu.matmul %178, %180, %cst_102 {dimension_numbers = #tpu.dot_dimension_numbers<[1], [0], [0], [1], [0, 0, 1, 1], [], []>} : vector<8x32xbf16>, vector<32x64xbf16>, vector<8x64xf32> -> vector<8x64xf32>
      %c0_103 = arith.constant 0 : index
      %c0_104 = arith.constant 0 : index
      %182 = vector.load %arg11[%c0_103, %c0_104] : memref<1x64xf32, #tpu.memory_space<vmem>>, vector<1x64xf32>
      %183 = vector.broadcast %182 : vector<1x64xf32> to vector<8x64xf32>
      %184 = arith.addf %181, %183 : vector<8x64xf32>
      %185 = arith.truncf %184 : vector<8x64xf32> to vector<8x64xbf16>
      %c0_105 = arith.constant 0 : index
      %c0_106 = arith.constant 0 : index
      %186 = vector.load %arg14[%c0_105, %c0_106] : memref<8x64xbf16, #tpu.memory_space<vmem>>, vector<8x64xbf16>
      tpu.vector_store %arg14[%c0_105, %c0_106], %185 {strides = array<i32>} : memref<8x64xbf16, #tpu.memory_space<vmem>>, vector<8x64xbf16>,
    } else {
    }
    %c0 = arith.constant 0 : index
    %c0_1 = arith.constant 0 : index
    %c0_2 = arith.constant 0 : index
    %3 = vector.load %arg3[%c0, %c0_1, %c0_2] : memref<1x8x32xf32, #tpu.memory_space<vmem>>, vector<1x8x32xf32>
    %4 = vector.shape_cast %3 : vector<1x8x32xf32> to vector<8x32xf32>
    %5 = arith.truncf %4 : vector<8x32xf32> to vector<8x32xbf16>
    %c0_3 = arith.constant 0 : index
    %c0_4 = arith.constant 0 : index
    %6 = vector.load %arg8[%c0_3, %c0_4] : memref<32x32xf32, #tpu.memory_space<vmem>>, vector<32x32xf32>
    %7 = arith.truncf %6 : vector<32x32xf32> to vector<32x32xbf16>
    %cst = arith.constant dense<0.000000e+00> : vector<8x32xf32>
    %8 = tpu.matmul %5, %7, %cst {dimension_numbers = #tpu.dot_dimension_numbers<[1], [0], [0], [1], [0, 0, 1, 1], [], []>} : vector<8x32xbf16>, vector<32x32xbf16>, vector<8x32xf32> -> vector<8x32xf32>
    %c0_5 = arith.constant 0 : index
    %c0_6 = arith.constant 0 : index
    %9 = vector.load %arg9[%c0_5, %c0_6] : memref<1x32xf32, #tpu.memory_space<vmem>>, vector<1x32xf32>
    %10 = vector.broadcast %9 : vector<1x32xf32> to vector<8x32xf32>
    %11 = arith.addf %8, %10 : vector<8x32xf32>
    %12 = arith.truncf %11 : vector<8x32xf32> to vector<8x32xbf16>
    %c0_7 = arith.constant 0 : index
    %c0_8 = arith.constant 0 : index
    %13 = vector.load %arg15[%c0_7, %c0_8] : memref<8x32xbf16, #tpu.memory_space<vmem>>, vector<8x32xbf16>
    tpu.vector_store %arg15[%c0_7, %c0_8], %12 {strides = array<i32>} : memref<8x32xbf16, #tpu.memory_space<vmem>>, vector<8x32xbf16>,
    %c0_9 = arith.constant 0 : index
    %14 = memref.load %arg2[%c0_9] : memref<1xf32, #tpu.memory_space<smem>>
    %cst_10 = arith.constant 1.000000e+00 : f32
    %15 = arith.divf %cst_10, %14 : f32
    %c8_i32 = arith.constant 8 : i32
    %16 = arith.muli %arg1, %c8_i32 : i32
    %17 = tpu.iota {dimensions = array<i32: 0>} : vector<8x8xi32>
    %18 = vector.broadcast %16 : i32 to vector<8x8xi32>
    %19 = arith.addi %18, %17 : vector<8x8xi32>
    %20 = tpu.iota {dimensions = array<i32: 1>} : vector<8x8xi32>
    %21 = arith.cmpi sge, %20, %19 : vector<8x8xi32>
    %c0_11 = arith.constant 0 : index
    %c0_12 = arith.constant 0 : index
    %c0_13 = arith.constant 0 : index
    %22 = vector.load %arg5[%c0_11, %c0_12, %c0_13] : memref<1x8x8xbf16, #tpu.memory_space<vmem>>, vector<1x8x8xbf16>
    %23 = vector.shape_cast %22 : vector<1x8x8xbf16> to vector<8x8xbf16>
    %24 = arith.extf %23 : vector<8x8xbf16> to vector<8x8xf32>
    %25 = arith.extui %21 : vector<8x8xi1> to vector<8x8xi32>
    %26 = arith.sitofp %25 : vector<8x8xi32> to vector<8x8xf32>
    %27 = arith.mulf %24, %26 : vector<8x8xf32>
    %cst_14 = arith.constant 0.000000e+00 : f32
    %28 = vector.broadcast %cst_14 : f32 to vector<8x8xf32>
    %29 = arith.cmpf oeq, %27, %28 : vector<8x8xf32>
    %cst_15 = arith.constant -1.000000e+05 : f32
    %30 = vector.broadcast %cst_15 : f32 to vector<8x8xf32>
    %31 = arith.select %29, %30, %27 : vector<8x8xi1>, vector<8x8xf32>
    %c0_16 = arith.constant 0 : index
    %c0_17 = arith.constant 0 : index
    %c0_18 = arith.constant 0 : index
    %32 = vector.load %arg6[%c0_16, %c0_17, %c0_18] : memref<1x8x1xf32, #tpu.memory_space<vmem>>, vector<1x8x1xf32>
    %33 = vector.shape_cast %32 : vector<1x8x1xf32> to vector<8x1xf32>
    %c0_19 = arith.constant 0 : index
    %c0_20 = arith.constant 0 : index
    %c0_21 = arith.constant 0 : index
    %34 = vector.load %arg7[%c0_19, %c0_20, %c0_21] : memref<1x1x8xf32, #tpu.memory_space<vmem>>, vector<1x1x8xf32>
    %35 = vector.shape_cast %34 : vector<1x1x8xf32> to vector<1x8xf32>
    %36 = vector.broadcast %33 : vector<8x1xf32> to vector<8x8xf32>
    %37 = vector.broadcast %35 : vector<1x8xf32> to vector<8x8xf32>
    %38 = arith.subf %36, %37 : vector<8x8xf32>
    %39 = math.absf %38 : vector<8x8xf32>
    %cst_22 = arith.constant 0.000000e+00 : f32
    %40 = vector.broadcast %cst_22 : f32 to vector<8x8xf32>
    %41 = arith.subf %40, %39 : vector<8x8xf32>
    %42 = vector.broadcast %15 : f32 to vector<8x8xf32>
    %43 = arith.mulf %41, %42 : vector<8x8xf32>
    %44 = math.exp %43 : vector<8x8xf32>
    %cst_23 = arith.constant -1.000000e+05 : f32
    %45 = vector.broadcast %cst_23 : f32 to vector<8x8xf32>
    %46 = arith.select %21, %45, %44 : vector<8x8xi1>, vector<8x8xf32>
    %47 = arith.addf %46, %31 : vector<8x8xf32>
    %cst_24 = arith.constant dense<0xFF800000> : vector<8xf32>
    %48 = vector.multi_reduction <maximumf>, %47, %cst_24 [1] : vector<8x8xf32> to vector<8xf32>
    %49 = vector.shape_cast %48 : vector<8xf32> to vector<8x1xf32>
    %50 = vector.broadcast %49 : vector<8x1xf32> to vector<8x8xf32>
    %51 = arith.subf %47, %50 : vector<8x8xf32>
    %52 = math.exp %51 : vector<8x8xf32>
    %cst_25 = arith.constant dense<0.000000e+00> : vector<8xf32>
    %53 = vector.multi_reduction <add>, %52, %cst_25 [1] : vector<8x8xf32> to vector<8xf32>
    %54 = vector.shape_cast %53 : vector<8xf32> to vector<8x1xf32>
    %55 = tpu.reciprocal %54 {approx = true} : vector<8x1xf32> -> vector<8x1xf32>
    %56 = vector.broadcast %55 : vector<8x1xf32> to vector<8x8xf32>
    %57 = arith.mulf %52, %56 : vector<8x8xf32>
    %cst_26 = arith.constant 6.000000e-01 : f32
    %58 = vector.broadcast %cst_26 : f32 to vector<8x8xf32>
    %59 = arith.mulf %58, %57 : vector<8x8xf32>
    %c0_27 = arith.constant 0 : index
    %c0_28 = arith.constant 0 : index
    %60 = vector.load %arg15[%c0_27, %c0_28] : memref<8x32xbf16, #tpu.memory_space<vmem>>, vector<8x8xbf16>
    %c0_29 = arith.constant 0 : index
    %c0_30 = arith.constant 0 : index
    %61 = vector.load %arg14[%c0_29, %c0_30] : memref<8x64xbf16, #tpu.memory_space<vmem>>, vector<8x8xbf16>
    %c0_31 = arith.constant 0 : index
    %c32 = arith.constant 32 : index
    %62 = vector.load %arg14[%c0_31, %c32] : memref<8x64xbf16, #tpu.memory_space<vmem>>, vector<8x8xbf16>
    %cst_32 = arith.constant dense<0.000000e+00> : vector<8x8xf32>
    %63 = tpu.matmul %60, %61, %cst_32 {dimension_numbers = #tpu.dot_dimension_numbers<[1], [1], [0], [0], [0, 0, 1, 0], [], []>} : vector<8x8xbf16>, vector<8x8xbf16>, vector<8x8xf32> -> vector<8x8xf32>
    %cst_33 = arith.constant 0.353553385 : f32
    %64 = vector.broadcast %cst_33 : f32 to vector<8x8xf32>
    %65 = arith.mulf %63, %64 : vector<8x8xf32>
    %cst_34 = arith.constant -1.000000e+32 : f32
    %66 = vector.broadcast %cst_34 : f32 to vector<8x8xf32>
    %67 = arith.select %21, %66, %65 : vector<8x8xi1>, vector<8x8xf32>
    %cst_35 = arith.constant dense<0xFF800000> : vector<8xf32>
    %68 = vector.multi_reduction <maximumf>, %67, %cst_35 [1] : vector<8x8xf32> to vector<8xf32>
    %69 = vector.shape_cast %68 : vector<8xf32> to vector<8x1xf32>
    %70 = vector.broadcast %69 : vector<8x1xf32> to vector<8x8xf32>
    %71 = arith.subf %67, %70 : vector<8x8xf32>
    %72 = math.exp %71 : vector<8x8xf32>
    %cst_36 = arith.constant dense<0.000000e+00> : vector<8xf32>
    %73 = vector.multi_reduction <add>, %72, %cst_36 [1] : vector<8x8xf32> to vector<8xf32>
    %74 = vector.shape_cast %73 : vector<8xf32> to vector<8x1xf32>
    %75 = tpu.reciprocal %74 {approx = true} : vector<8x1xf32> -> vector<8x1xf32>
    %76 = vector.broadcast %75 : vector<8x1xf32> to vector<8x8xf32>
    %77 = arith.mulf %72, %76 : vector<8x8xf32>
    %cst_37 = arith.constant 4.000000e-01 : f32
    %78 = vector.broadcast %cst_37 : f32 to vector<8x8xf32>
    %79 = arith.mulf %78, %77 : vector<8x8xf32>
    %80 = arith.addf %79, %59 : vector<8x8xf32>
    %c0_38 = arith.constant 0 : index
    %c0_39 = arith.constant 0 : index
    %c0_40 = arith.constant 0 : index
    %c0_41 = arith.constant 0 : index
    %81 = vector.load %arg13[%c0_38, %c0_39, %c0_40, %c0_41] : memref<1x4x8x8xf32, #tpu.memory_space<vmem>>, vector<1x1x8x8xf32>
    %82 = vector.shape_cast %81 : vector<1x1x8x8xf32> to vector<8x8xf32>
    %83 = vector.shape_cast %80 : vector<8x8xf32> to vector<1x1x8x8xf32>
    tpu.vector_store %arg13[%c0_38, %c0_39, %c0_40, %c0_41], %83 {strides = array<i32>} : memref<1x4x8x8xf32, #tpu.memory_space<vmem>>, vector<1x1x8x8xf32>,
    %84 = arith.truncf %80 : vector<8x8xf32> to vector<8x8xbf16>
    %cst_42 = arith.constant dense<0.000000e+00> : vector<8x8xf32>
    %85 = tpu.matmul %84, %62, %cst_42 {dimension_numbers = #tpu.dot_dimension_numbers<[1], [0], [0], [1], [0, 0, 1, 1], [], []>} : vector<8x8xbf16>, vector<8x8xbf16>, vector<8x8xf32> -> vector<8x8xf32>
    %c0_43 = arith.constant 0 : index
    %c0_44 = arith.constant 0 : index
    %c0_45 = arith.constant 0 : index
    %86 = vector.load %arg12[%c0_43, %c0_44, %c0_45] : memref<1x8x32xf32, #tpu.memory_space<vmem>>, vector<1x8x8xf32>
    %87 = vector.shape_cast %86 : vector<1x8x8xf32> to vector<8x8xf32>
    %88 = vector.shape_cast %85 : vector<8x8xf32> to vector<1x8x8xf32>
    tpu.vector_store %arg12[%c0_43, %c0_44, %c0_45], %88 {strides = array<i32>} : memref<1x8x32xf32, #tpu.memory_space<vmem>>, vector<1x8x8xf32>,
    %c0_46 = arith.constant 0 : index
    %c8 = arith.constant 8 : index
    %89 = vector.load %arg15[%c0_46, %c8] : memref<8x32xbf16, #tpu.memory_space<vmem>>, vector<8x8xbf16>
    %c0_47 = arith.constant 0 : index
    %c8_48 = arith.constant 8 : index
    %90 = vector.load %arg14[%c0_47, %c8_48] : memref<8x64xbf16, #tpu.memory_space<vmem>>, vector<8x8xbf16>
    %c0_49 = arith.constant 0 : index
    %c40 = arith.constant 40 : index
    %91 = vector.load %arg14[%c0_49, %c40] : memref<8x64xbf16, #tpu.memory_space<vmem>>, vector<8x8xbf16>
    %cst_50 = arith.constant dense<0.000000e+00> : vector<8x8xf32>
    %92 = tpu.matmul %89, %90, %cst_50 {dimension_numbers = #tpu.dot_dimension_numbers<[1], [1], [0], [0], [0, 0, 1, 0], [], []>} : vector<8x8xbf16>, vector<8x8xbf16>, vector<8x8xf32> -> vector<8x8xf32>
    %cst_51 = arith.constant 0.353553385 : f32
    %93 = vector.broadcast %cst_51 : f32 to vector<8x8xf32>
    %94 = arith.mulf %92, %93 : vector<8x8xf32>
    %cst_52 = arith.constant -1.000000e+32 : f32
    %95 = vector.broadcast %cst_52 : f32 to vector<8x8xf32>
    %96 = arith.select %21, %95, %94 : vector<8x8xi1>, vector<8x8xf32>
    %cst_53 = arith.constant dense<0xFF800000> : vector<8xf32>
    %97 = vector.multi_reduction <maximumf>, %96, %cst_53 [1] : vector<8x8xf32> to vector<8xf32>
    %98 = vector.shape_cast %97 : vector<8xf32> to vector<8x1xf32>
    %99 = vector.broadcast %98 : vector<8x1xf32> to vector<8x8xf32>
    %100 = arith.subf %96, %99 : vector<8x8xf32>
    %101 = math.exp %100 : vector<8x8xf32>
    %cst_54 = arith.constant dense<0.000000e+00> : vector<8xf32>
    %102 = vector.multi_reduction <add>, %101, %cst_54 [1] : vector<8x8xf32> to vector<8xf32>
    %103 = vector.shape_cast %102 : vector<8xf32> to vector<8x1xf32>
    %104 = tpu.reciprocal %103 {approx = true} : vector<8x1xf32> -> vector<8x1xf32>
    %105 = vector.broadcast %104 : vector<8x1xf32> to vector<8x8xf32>
    %106 = arith.mulf %101, %105 : vector<8x8xf32>
    %cst_55 = arith.constant 4.000000e-01 : f32
    %107 = vector.broadcast %cst_55 : f32 to vector<8x8xf32>
    %108 = arith.mulf %107, %106 : vector<8x8xf32>
    %109 = arith.addf %108, %59 : vector<8x8xf32>
    %c0_56 = arith.constant 0 : index
    %c1 = arith.constant 1 : index
    %c0_57 = arith.constant 0 : index
    %c0_58 = arith.constant 0 : index
    %110 = vector.load %arg13[%c0_56, %c1, %c0_57, %c0_58] : memref<1x4x8x8xf32, #tpu.memory_space<vmem>>, vector<1x1x8x8xf32>
    %111 = vector.shape_cast %110 : vector<1x1x8x8xf32> to vector<8x8xf32>
    %112 = vector.shape_cast %109 : vector<8x8xf32> to vector<1x1x8x8xf32>
    tpu.vector_store %arg13[%c0_56, %c1, %c0_57, %c0_58], %112 {strides = array<i32>} : memref<1x4x8x8xf32, #tpu.memory_space<vmem>>, vector<1x1x8x8xf32>,
    %113 = arith.truncf %109 : vector<8x8xf32> to vector<8x8xbf16>
    %cst_59 = arith.constant dense<0.000000e+00> : vector<8x8xf32>
    %114 = tpu.matmul %113, %91, %cst_59 {dimension_numbers = #tpu.dot_dimension_numbers<[1], [0], [0], [1], [0, 0, 1, 1], [], []>} : vector<8x8xbf16>, vector<8x8xbf16>, vector<8x8xf32> -> vector<8x8xf32>
    %c0_60 = arith.constant 0 : index
    %c0_61 = arith.constant 0 : index
    %c8_62 = arith.constant 8 : index
    %115 = vector.load %arg12[%c0_60, %c0_61, %c8_62] : memref<1x8x32xf32, #tpu.memory_space<vmem>>, vector<1x8x8xf32>
    %116 = vector.shape_cast %115 : vector<1x8x8xf32> to vector<8x8xf32>
    %117 = vector.shape_cast %114 : vector<8x8xf32> to vector<1x8x8xf32>
    tpu.vector_store %arg12[%c0_60, %c0_61, %c8_62], %117 {strides = array<i32>} : memref<1x8x32xf32, #tpu.memory_space<vmem>>, vector<1x8x8xf32>,
    %c0_63 = arith.constant 0 : index
    %c16 = arith.constant 16 : index
    %118 = vector.load %arg15[%c0_63, %c16] : memref<8x32xbf16, #tpu.memory_space<vmem>>, vector<8x8xbf16>
    %c0_64 = arith.constant 0 : index
    %c16_65 = arith.constant 16 : index
    %119 = vector.load %arg14[%c0_64, %c16_65] : memref<8x64xbf16, #tpu.memory_space<vmem>>, vector<8x8xbf16>
    %c0_66 = arith.constant 0 : index
    %c48 = arith.constant 48 : index
    %120 = vector.load %arg14[%c0_66, %c48] : memref<8x64xbf16, #tpu.memory_space<vmem>>, vector<8x8xbf16>
    %cst_67 = arith.constant dense<0.000000e+00> : vector<8x8xf32>
    %121 = tpu.matmul %118, %119, %cst_67 {dimension_numbers = #tpu.dot_dimension_numbers<[1], [1], [0], [0], [0, 0, 1, 0], [], []>} : vector<8x8xbf16>, vector<8x8xbf16>, vector<8x8xf32> -> vector<8x8xf32>
    %cst_68 = arith.constant 0.353553385 : f32
    %122 = vector.broadcast %cst_68 : f32 to vector<8x8xf32>
    %123 = arith.mulf %121, %122 : vector<8x8xf32>
    %cst_69 = arith.constant -1.000000e+32 : f32
    %124 = vector.broadcast %cst_69 : f32 to vector<8x8xf32>
    %125 = arith.select %21, %124, %123 : vector<8x8xi1>, vector<8x8xf32>
    %cst_70 = arith.constant dense<0xFF800000> : vector<8xf32>
    %126 = vector.multi_reduction <maximumf>, %125, %cst_70 [1] : vector<8x8xf32> to vector<8xf32>
    %127 = vector.shape_cast %126 : vector<8xf32> to vector<8x1xf32>
    %128 = vector.broadcast %127 : vector<8x1xf32> to vector<8x8xf32>
    %129 = arith.subf %125, %128 : vector<8x8xf32>
    %130 = math.exp %129 : vector<8x8xf32>
    %cst_71 = arith.constant dense<0.000000e+00> : vector<8xf32>
    %131 = vector.multi_reduction <add>, %130, %cst_71 [1] : vector<8x8xf32> to vector<8xf32>
    %132 = vector.shape_cast %131 : vector<8xf32> to vector<8x1xf32>
    %133 = tpu.reciprocal %132 {approx = true} : vector<8x1xf32> -> vector<8x1xf32>
    %134 = vector.broadcast %133 : vector<8x1xf32> to vector<8x8xf32>
    %135 = arith.mulf %130, %134 : vector<8x8xf32>
    %cst_72 = arith.constant 4.000000e-01 : f32
    %136 = vector.broadcast %cst_72 : f32 to vector<8x8xf32>
    %137 = arith.mulf %136, %135 : vector<8x8xf32>
    %138 = arith.addf %137, %59 : vector<8x8xf32>
    %c0_73 = arith.constant 0 : index
    %c2 = arith.constant 2 : index
    %c0_74 = arith.constant 0 : index
    %c0_75 = arith.constant 0 : index
    %139 = vector.load %arg13[%c0_73, %c2, %c0_74, %c0_75] : memref<1x4x8x8xf32, #tpu.memory_space<vmem>>, vector<1x1x8x8xf32>
    %140 = vector.shape_cast %139 : vector<1x1x8x8xf32> to vector<8x8xf32>
    %141 = vector.shape_cast %138 : vector<8x8xf32> to vector<1x1x8x8xf32>
    tpu.vector_store %arg13[%c0_73, %c2, %c0_74, %c0_75], %141 {strides = array<i32>} : memref<1x4x8x8xf32, #tpu.memory_space<vmem>>, vector<1x1x8x8xf32>,
    %142 = arith.truncf %138 : vector<8x8xf32> to vector<8x8xbf16>
    %cst_76 = arith.constant dense<0.000000e+00> : vector<8x8xf32>
    %143 = tpu.matmul %142, %120, %cst_76 {dimension_numbers = #tpu.dot_dimension_numbers<[1], [0], [0], [1], [0, 0, 1, 1], [], []>} : vector<8x8xbf16>, vector<8x8xbf16>, vector<8x8xf32> -> vector<8x8xf32>
    %c0_77 = arith.constant 0 : index
    %c0_78 = arith.constant 0 : index
    %c16_79 = arith.constant 16 : index
    %144 = vector.load %arg12[%c0_77, %c0_78, %c16_79] : memref<1x8x32xf32, #tpu.memory_space<vmem>>, vector<1x8x8xf32>
    %145 = vector.shape_cast %144 : vector<1x8x8xf32> to vector<8x8xf32>
    %146 = vector.shape_cast %143 : vector<8x8xf32> to vector<1x8x8xf32>
    tpu.vector_store %arg12[%c0_77, %c0_78, %c16_79], %146 {strides = array<i32>} : memref<1x8x32xf32, #tpu.memory_space<vmem>>, vector<1x8x8xf32>,
    %c0_80 = arith.constant 0 : index
    %c24 = arith.constant 24 : index
    %147 = vector.load %arg15[%c0_80, %c24] : memref<8x32xbf16, #tpu.memory_space<vmem>>, vector<8x8xbf16>
    %c0_81 = arith.constant 0 : index
    %c24_82 = arith.constant 24 : index
    %148 = vector.load %arg14[%c0_81, %c24_82] : memref<8x64xbf16, #tpu.memory_space<vmem>>, vector<8x8xbf16>
    %c0_83 = arith.constant 0 : index
    %c56 = arith.constant 56 : index
    %149 = vector.load %arg14[%c0_83, %c56] : memref<8x64xbf16, #tpu.memory_space<vmem>>, vector<8x8xbf16>
    %cst_84 = arith.constant dense<0.000000e+00> : vector<8x8xf32>
    %150 = tpu.matmul %147, %148, %cst_84 {dimension_numbers = #tpu.dot_dimension_numbers<[1], [1], [0], [0], [0, 0, 1, 0], [], []>} : vector<8x8xbf16>, vector<8x8xbf16>, vector<8x8xf32> -> vector<8x8xf32>
    %cst_85 = arith.constant 0.353553385 : f32
    %151 = vector.broadcast %cst_85 : f32 to vector<8x8xf32>
    %152 = arith.mulf %150, %151 : vector<8x8xf32>
    %cst_86 = arith.constant -1.000000e+32 : f32
    %153 = vector.broadcast %cst_86 : f32 to vector<8x8xf32>
    %154 = arith.select %21, %153, %152 : vector<8x8xi1>, vector<8x8xf32>
    %cst_87 = arith.constant dense<0xFF800000> : vector<8xf32>
    %155 = vector.multi_reduction <maximumf>, %154, %cst_87 [1] : vector<8x8xf32> to vector<8xf32>
    %156 = vector.shape_cast %155 : vector<8xf32> to vector<8x1xf32>
    %157 = vector.broadcast %156 : vector<8x1xf32> to vector<8x8xf32>
    %158 = arith.subf %154, %157 : vector<8x8xf32>
    %159 = math.exp %158 : vector<8x8xf32>
    %cst_88 = arith.constant dense<0.000000e+00> : vector<8xf32>
    %160 = vector.multi_reduction <add>, %159, %cst_88 [1] : vector<8x8xf32> to vector<8xf32>
    %161 = vector.shape_cast %160 : vector<8xf32> to vector<8x1xf32>
    %162 = tpu.reciprocal %161 {approx = true} : vector<8x1xf32> -> vector<8x1xf32>
    %163 = vector.broadcast %162 : vector<8x1xf32> to vector<8x8xf32>
    %164 = arith.mulf %159, %163 : vector<8x8xf32>
    %cst_89 = arith.constant 4.000000e-01 : f32
    %165 = vector.broadcast %cst_89 : f32 to vector<8x8xf32>
    %166 = arith.mulf %165, %164 : vector<8x8xf32>
    %167 = arith.addf %166, %59 : vector<8x8xf32>
    %c0_90 = arith.constant 0 : index
    %c3 = arith.constant 3 : index
    %c0_91 = arith.constant 0 : index
    %c0_92 = arith.constant 0 : index
    %168 = vector.load %arg13[%c0_90, %c3, %c0_91, %c0_92] : memref<1x4x8x8xf32, #tpu.memory_space<vmem>>, vector<1x1x8x8xf32>
    %169 = vector.shape_cast %168 : vector<1x1x8x8xf32> to vector<8x8xf32>
    %170 = vector.shape_cast %167 : vector<8x8xf32> to vector<1x1x8x8xf32>
    tpu.vector_store %arg13[%c0_90, %c3, %c0_91, %c0_92], %170 {strides = array<i32>} : memref<1x4x8x8xf32, #tpu.memory_space<vmem>>, vector<1x1x8x8xf32>,
    %171 = arith.truncf %167 : vector<8x8xf32> to vector<8x8xbf16>
    %cst_93 = arith.constant dense<0.000000e+00> : vector<8x8xf32>
    %172 = tpu.matmul %171, %149, %cst_93 {dimension_numbers = #tpu.dot_dimension_numbers<[1], [0], [0], [1], [0, 0, 1, 1], [], []>} : vector<8x8xbf16>, vector<8x8xbf16>, vector<8x8xf32> -> vector<8x8xf32>
    %c0_94 = arith.constant 0 : index
    %c0_95 = arith.constant 0 : index
    %c24_96 = arith.constant 24 : index
    %173 = vector.load %arg12[%c0_94, %c0_95, %c24_96] : memref<1x8x32xf32, #tpu.memory_space<vmem>>, vector<1x8x8xf32>
    %174 = vector.shape_cast %173 : vector<1x8x8xf32> to vector<8x8xf32>
    %175 = vector.shape_cast %172 : vector<8x8xf32> to vector<1x8x8xf32>
    tpu.vector_store %arg12[%c0_94, %c0_95, %c24_96], %175 {strides = array<i32>} : memref<1x8x32xf32, #tpu.memory_space<vmem>>, vector<1x8x8xf32>,
    return
  }
  func.func @transform_0(%arg0: i32, %arg1: i32) -> i32 {
    %c0_i32 = arith.constant 0 : i32
    %c0_i32_0 = arith.constant 0 : i32
    return %c0_i32 : i32
  }
  func.func @transform_1(%arg0: i32, %arg1: i32) -> (i32, i32, i32) {
    %c0_i32 = arith.constant 0 : i32
    %c0_i32_0 = arith.constant 0 : i32
    return %arg0, %arg1, %c0_i32 : i32, i32, i32
  }
  func.func @transform_2(%arg0: i32, %arg1: i32) -> (i32, i32, i32) {
    %c0_i32 = arith.constant 0 : i32
    %c0_i32_0 = arith.constant 0 : i32
    %c0_i32_1 = arith.constant 0 : i32
    return %arg0, %c0_i32, %c0_i32_0 : i32, i32, i32
  }
  func.func @transform_3(%arg0: i32, %arg1: i32) -> (i32, i32, i32) {
    %c0_i32 = arith.constant 0 : i32
    %c0_i32_0 = arith.constant 0 : i32
    return %arg0, %arg1, %c0_i32 : i32, i32, i32
  }
  func.func @transform_4(%arg0: i32, %arg1: i32) -> (i32, i32, i32) {
    %c0_i32 = arith.constant 0 : i32
    %c0_i32_0 = arith.constant 0 : i32
    return %arg0, %arg1, %c0_i32 : i32, i32, i32
  }
  func.func @transform_5(%arg0: i32, %arg1: i32) -> (i32, i32, i32) {
    %c0_i32 = arith.constant 0 : i32
    %c0_i32_0 = arith.constant 0 : i32
    %c0_i32_1 = arith.constant 0 : i32
    return %arg0, %c0_i32, %c0_i32_0 : i32, i32, i32
  }
  func.func @transform_6(%arg0: i32, %arg1: i32) -> (i32, i32) {
    %c0_i32 = arith.constant 0 : i32
    %c0_i32_0 = arith.constant 0 : i32
    %c0_i32_1 = arith.constant 0 : i32
    return %c0_i32, %c0_i32_0 : i32, i32
  }
  func.func @transform_7(%arg0: i32, %arg1: i32) -> (i32, i32) {
    %c0_i32 = arith.constant 0 : i32
    %c0_i32_0 = arith.constant 0 : i32
    %c0_i32_1 = arith.constant 0 : i32
    return %c0_i32, %c0_i32_0 : i32, i32
  }
  func.func @transform_8(%arg0: i32, %arg1: i32) -> (i32, i32) {
    %c0_i32 = arith.constant 0 : i32
    %c0_i32_0 = arith.constant 0 : i32
    %c0_i32_1 = arith.constant 0 : i32
    return %c0_i32, %c0_i32_0 : i32, i32
  }
  func.func @transform_9(%arg0: i32, %arg1: i32) -> (i32, i32) {
    %c0_i32 = arith.constant 0 : i32
    %c0_i32_0 = arith.constant 0 : i32
    %c0_i32_1 = arith.constant 0 : i32
    return %c0_i32, %c0_i32_0 : i32, i32
  }
  func.func @transform_10(%arg0: i32, %arg1: i32) -> (i32, i32, i32) {
    %c0_i32 = arith.constant 0 : i32
    %c0_i32_0 = arith.constant 0 : i32
    return %arg0, %arg1, %c0_i32 : i32, i32, i32
  }
  func.func @transform_11(%arg0: i32, %arg1: i32) -> (i32, i32, i32, i32) {
    %c0_i32 = arith.constant 0 : i32
    %c0_i32_0 = arith.constant 0 : i32
    %c0_i32_1 = arith.constant 0 : i32
    return %arg0, %c0_i32, %arg1, %c0_i32_0 : i32, i32, i32, i32
  }
}

</mosaic_0001>

<llo_original>
// kernel: rkt_forward.5
$region0: #{rkt_forward.5}
  #allocation0 [shape = 'u32[]', space=smem, size = 0x4, offset = 0x4, fixed_abs, tag = 'smem constant byte address 0x4 - core index']
  #allocation1 [shape = 'u32[72,128]{1,0:T(1,128)}', space=vmem, size = 0x9000, scoped, tag = 'internal scratch']
  %s0 = inlined_call_operand.vmem [shape: f32[16,64], index: 0, kind: input, shape index: {}]
  %s1 = inlined_call_operand.vmem [shape: f32[64,32], index: 1, kind: input, shape index: {}]
  %s2 = inlined_call_operand.vmem [shape: f32[1,32], index: 2, kind: input, shape index: {}]
  %s3 = inlined_call_operand.vmem [shape: f32[16,32], index: 3, kind: output, shape index: {}]
  %s4 = sld [smem:[#allocation0]]
  $region22: #{rkt_forward.5} parent=0
    _
  %s6 = ssub.s32 1, %s4
  %s7 = scalar_select 0, %s6, %s4
  // Predicated region
  $region2: #{rkt_forward.5} parent=0 // pred_check
    _
  $region3: #{rkt_forward.5} parent=0 // pred_check_branch
    %9 = sbr.rel (0) target = $region5
  $region4: #{rkt_forward.5} parent=0 // pred_region
    _
  $region5: #{rkt_forward.5} parent=0 // pred_fallthru
    _
  // Predicated region
  $region6: #{rkt_forward.5} parent=0 // pred_check
    _
  $region7: #{rkt_forward.5} parent=0 // pred_check_branch
    %11 = sbr.rel (0) target = $region9
  $region8: #{rkt_forward.5} parent=0 // pred_region
    _
  $region9: #{rkt_forward.5} parent=0 // pred_fallthru
    _
  // Predicated region
  $region10: #{rkt_forward.5} parent=0 // pred_check
    _
  $region11: #{rkt_forward.5} parent=0 // pred_check_branch
    %13 = sbr.rel (0) target = $region13
  $region12: #{rkt_forward.5} parent=0 // pred_region
    _
  $region13: #{rkt_forward.5} parent=0 // pred_fallthru
    _
  %v15 = vld [vmem:[%s0] sm:$0xff]
  %v16 = vld [vmem:[%s0 + $0x8] sm:$0xff]
  %v17 = vpack.c.bf16 %v16, %v15
  %v18 = vld [vmem:[%s1] sm:$0xff]
  %v19 = vld [vmem:[%s1 + $0x8] sm:$0xff]
  %v20 = vld [vmem:[%s1 + $0x10] sm:$0xff]
  %v21 = vld [vmem:[%s1 + $0x18] sm:$0xff]
  %v22 = vld [vmem:[%s1 + $0x20] sm:$0xff]
  %v23 = vld [vmem:[%s1 + $0x28] sm:$0xff]
  %v24 = vld [vmem:[%s1 + $0x30] sm:$0xff]
  %v25 = vld [vmem:[%s1 + $0x38] sm:$0xff]
  %v26 = vpack.c.bf16 %v19, %v18
  %v27 = vpack.c.bf16 %v21, %v20
  %v28 = vpack.c.bf16 %v23, %v22
  %v29 = vpack.c.bf16 %v25, %v24
  %v30 = vld [vmem:[%s2] sm:$0x1]
  %v32 = vperm.slane %v30, 0
  %vm34 = vcmask 523264
  %v36 = vsel %vm34, %v17, 0
  %38 = vmatpush.bf16.msra.mxu0 0
  %39 = vmatpush.bf16.msra.mxu0 0
  %40 = vmatpush.bf16.msra.mxu0 0
  %41 = vmatpush.bf16.msra.mxu0 0
  %42 = vmatpush.bf16.msra.mxu0 %v29
  %43 = vmatpush.bf16.msra.mxu0 %v28
  %44 = vmatpush.bf16.msra.mxu0 %v27
  %45 = vmatpush.bf16.msra.mxu0 %v26
  %46 = vmatmul.bf16.gmra.mxu0 %v36
  %v47 = vpop.f32.mrf.mxu0
  %v48 = vadd.f32 %v32, %v47
  %v49 = vpop.f32.mrf.mxu0
  %v50 = vadd.f32 %v32, %v49
  %51 = vdwg.mxu0
  %v52 = vmax.f32 %v48, 0.0
  %v53 = vmax.f32 %v50, 0.0
  %vm54 = vcmask 261120
  %55 = vst.msk [vmem:[%s3] sm:$0xff] %vm54, %v52
  %56 = vst.msk [vmem:[%s3 + $0x8] sm:$0xff] %vm54, %v53
  // Predicated region
  $region14: #{rkt_forward.5} parent=0 // pred_check
    _
  $region15: #{rkt_forward.5} parent=0 // pred_check_branch
    %58 = sbr.rel (0) target = $region17
  $region16: #{rkt_forward.5} parent=0 // pred_region
    _
  $region17: #{rkt_forward.5} parent=0 // pred_fallthru
    _
  // Predicated region
  $region18: #{rkt_forward.5} parent=0 // pred_check
    _
  $region19: #{rkt_forward.5} parent=0 // pred_check_branch
    %60 = sbr.rel (0) target = $region21
  $region20: #{rkt_forward.5} parent=0 // pred_region
    _
  $region21: #{rkt_forward.5} parent=0 // pred_fallthru
    _

// kernel: rkt_forward.9
$region0: #{rkt_forward.9}
  #allocation0 [shape = 'u32[]', space=smem, size = 0x4, offset = 0x4, fixed_abs, tag = 'smem constant byte address 0x4 - core index']
  #allocation1 [shape = 'u32[72,128]{1,0:T(1,128)}', space=vmem, size = 0x9000, scoped, tag = 'internal scratch']
  #allocation2 [shape = 'f32[1,1]{1,0:T(1,128)S(1)}', space=vmem, size = 0x200, scoped, tag = 'scoped memory for rkt_forward.9']
  %s0 = inlined_call_operand.vmem [shape: f32[16,32], index: 0, kind: input, shape index: {}]
  %s1 = inlined_call_operand.vmem [shape: f32[32,1], index: 1, kind: input, shape index: {}]
  %s2 = inlined_call_operand.<no memory space> [shape: f32[1,1], index: 2, kind: input, shape index: {}]
  %s3 = inlined_call_operand.vmem [shape: f32[16,1], index: 3, kind: output, shape index: {}]
  %s4 = sld [smem:[#allocation0]]
  $region22: #{rkt_forward.9} parent=0
    _
  %s6 = ssub.s32 1, %s4
  %s7 = scalar_select 0, %s6, %s4
  %v8 = vstv %s2
  %9 = vst [vmem:[#allocation2] sm:$0x1] %v8
  // Predicated region
  $region2: #{rkt_forward.9} parent=0 // pred_check
    _
  $region3: #{rkt_forward.9} parent=0 // pred_check_branch
    %11 = sbr.rel (0) target = $region5
  $region4: #{rkt_forward.9} parent=0 // pred_region
    _
  $region5: #{rkt_forward.9} parent=0 // pred_fallthru
    _
  // Predicated region
  $region6: #{rkt_forward.9} parent=0 // pred_check
    _
  $region7: #{rkt_forward.9} parent=0 // pred_check_branch
    %13 = sbr.rel (0) target = $region9
  $region8: #{rkt_forward.9} parent=0 // pred_region
    _
  $region9: #{rkt_forward.9} parent=0 // pred_fallthru
    _
  // Predicated region
  $region10: #{rkt_forward.9} parent=0 // pred_check
    _
  $region11: #{rkt_forward.9} parent=0 // pred_check_branch
    %15 = sbr.rel (0) target = $region13
  $region12: #{rkt_forward.9} parent=0 // pred_region
    _
  $region13: #{rkt_forward.9} parent=0 // pred_fallthru
    _
  %v17 = vld [vmem:[%s0] sm:$0xff]
  %v18 = vld [vmem:[%s0 + $0x8] sm:$0xff]
  %v19 = vpack.c.bf16 %v18, %v17
  %v20 = vld [vmem:[%s1] sm:$0xff]
  %v21 = vld [vmem:[%s1 + $0x8] sm:$0xff]
  %v22 = vld [vmem:[%s1 + $0x10] sm:$0xff]
  %v23 = vld [vmem:[%s1 + $0x18] sm:$0xff]
  %v24 = vpack.c.bf16 %v21, %v20
  %v25 = vpack.c.bf16 %v23, %v22
  %v26 = vld [vmem:[#allocation2] sm:$0x1]
  %v28 = vperm.slane %v26, 0
  %vm30 = vcmask 261120
  %v32 = vsel %vm30, %v19, 0
  %34 = vmatpush.bf16.msra.mxu0 0
  %35 = vmatpush.bf16.msra.mxu0 0
  %36 = vmatpush.bf16.msra.mxu0 0
  %37 = vmatpush.bf16.msra.mxu0 0
  %38 = vmatpush.bf16.msra.mxu0 0
  %39 = vmatpush.bf16.msra.mxu0 0
  %40 = vmatpush.bf16.msra.mxu0 %v25
  %41 = vmatpush.bf16.msra.mxu0 %v24
  %42 = vmatmul.bf16.gmra.mxu0 %v32
  %v43 = vpop.f32.mrf.mxu0
  %v44 = vadd.f32 %v28, %v43
  %v45 = vpop.f32.mrf.mxu0
  %v46 = vadd.f32 %v28, %v45
  %47 = vdwg.mxu0
  %v48 = vsub.f32 0.0, %v44
  %v49 = vsub.f32 0.0, %v46
  %v50 = vmul.f32 %v48, 1.442695
  %v51 = vpow.pop %v50
  %v52 = vmul.f32 %v49, 1.442695
  %v53 = vpow.pop %v52
  %v54 = vadd.f32 %v51, 1.0
  %v55 = vadd.f32 %v53, 1.0
  %v56 = vrcp.pop %v54
  %v57 = vmul.f32 %v54, %v56
  %v58 = vsub.f32 1.0, %v57
  %v59 = vmul.f32 %v56, %v58
  %v60 = vadd.f32 %v56, %v59
  %vm61 = vweird.f32 %v54
  %vm62 = vweird.f32 %v56
  %vm63 = vmor %vm61, %vm62
  %v64 = vsel %vm63, %v56, %v60
  %v65 = vand.u32 2147483647, %v54
  %vm66 = vcmp.eq.f32.partialorder %v65, 8.507059e+37
  %v67 = vand.u32 %v54, 2147483648
  %v68 = vor.u32 1.1754944e-38, %v67
  %v69 = vsel %vm66, %v68, %v64
  %v70 = vmul.f32 1.0, %v69
  %v71 = vrcp.pop %v55
  %v72 = vmul.f32 %v55, %v71
  %v73 = vsub.f32 1.0, %v72
  %v74 = vmul.f32 %v71, %v73
  %v75 = vadd.f32 %v71, %v74
  %vm76 = vweird.f32 %v55
  %vm77 = vweird.f32 %v71
  %vm78 = vmor %vm76, %vm77
  %v79 = vsel %vm78, %v71, %v75
  %v80 = vand.u32 2147483647, %v55
  %vm81 = vcmp.eq.f32.partialorder %v80, 8.507059e+37
  %v82 = vand.u32 %v55, 2147483648
  %v83 = vor.u32 1.1754944e-38, %v82
  %v84 = vsel %vm81, %v83, %v79
  %v85 = vmul.f32 1.0, %v84
  %vm86 = vcmask 7168
  %87 = vst.msk [vmem:[%s3] sm:$0xff] %vm86, %v70
  %88 = vst.msk [vmem:[%s3 + $0x8] sm:$0xff] %vm86, %v85
  // Predicated region
  $region14: #{rkt_forward.9} parent=0 // pred_check
    _
  $region15: #{rkt_forward.9} parent=0 // pred_check_branch
    %90 = sbr.rel (0) target = $region17
  $region16: #{rkt_forward.9} parent=0 // pred_region
    _
  $region17: #{rkt_forward.9} parent=0 // pred_fallthru
    _
  // Predicated region
  $region18: #{rkt_forward.9} parent=0 // pred_check
    _
  $region19: #{rkt_forward.9} parent=0 // pred_check_branch
    %92 = sbr.rel (0) target = $region21
  $region20: #{rkt_forward.9} parent=0 // pred_region
    _
  $region21: #{rkt_forward.9} parent=0 // pred_fallthru
    _

// kernel: rkt_forward.6
$region0: #{rkt_forward.6}
  #allocation0 [shape = 'u32[]', space=smem, size = 0x4, offset = 0x4, fixed_abs, tag = 'smem constant byte address 0x4 - core index']
  #allocation1 [shape = 'u32[72,128]{1,0:T(1,128)}', space=vmem, size = 0x9000, scoped, tag = 'internal scratch']
  #allocation2 [shape = 'bf16[8,64]{1,0:T(8,128)(2,1)}', space=vmem, size = 0x800, scoped, tag = 'scratch operand']
  #allocation3 [shape = 'bf16[8,32]{1,0:T(8,128)(2,1)}', space=vmem, size = 0x800, scoped, tag = 'scratch operand']
  #allocation4 [shape = 'f32[1]{0:T(128)S(6)}', space=smem, size = 0x200, scoped, tag = 'scoped memory for rkt_forward.6']
  %s0 = inlined_call_operand.<no memory space> [shape: f32[1], index: 0, kind: input, shape index: {}]
  %s1 = inlined_call_operand.vmem [shape: f32[2,8,32], index: 1, kind: input, shape index: {}]
  %s2 = inlined_call_operand.vmem [shape: f32[2,8,32], index: 2, kind: input, shape index: {}]
  %s3 = inlined_call_operand.vmem [shape: bf16[2,8,8], index: 3, kind: input, shape index: {}]
  %s4 = inlined_call_operand.vmem [shape: f32[2,8,1], index: 4, kind: input, shape index: {}]
  %s5 = inlined_call_operand.vmem [shape: f32[2,1,8], index: 5, kind: input, shape index: {}]
  %s6 = inlined_call_operand.vmem [shape: f32[32,32], index: 6, kind: input, shape index: {}]
  %s7 = inlined_call_operand.vmem [shape: f32[1,32], index: 7, kind: input, shape index: {}]
  %s8 = inlined_call_operand.vmem [shape: f32[32,64], index: 8, kind: input, shape index: {}]
  %s9 = inlined_call_operand.vmem [shape: f32[1,64], index: 9, kind: input, shape index: {}]
  %s10 = inlined_call_operand.vmem [shape: f32[2,8,32], index: 10, kind: output, shape index: {}]
  %s11 = sld [smem:[#allocation0]]
  $region77: #{rkt_forward.6} parent=0
    _
  %s13 = ssub.s32 1, %s11
  %s14 = scalar_select 0, %s13, %s11
  %15 = sst [smem:[#allocation4]] %s0
  loop: start=0, step=1, limit=4
  $region2: #{rkt_forward.6} parent=0 // loop_pre_header
    _
  $region3: #{rkt_forward.6} parent=0 // loop_header
    %s17 = sphi 0, %s21
    %p18 = scmp.ge.s32.totalorder %s17, 4
    %s24 = sphi 0, %s36
    %s25 = sphi 0, %s32
    %s26 = sphi 0, %s24
    %s27 = sphi 0, %s25
    %s28 = sphi 0, %s26
    %s29 = sphi 0, %s27
    %s37 = sphi 0, %s37
    %s39 = sphi 0, %s37
    %s40 = sphi 0, %s39
    %s54 = sphi 0, %s40
    %s62 = sphi 0, %s64
    %s65 = sphi 0, %s62
    %s66 = sphi 0, %s65
    %s82 = sphi 0, %s66
    %s88 = sphi 0, %s90
    %s91 = sphi 0, %s88
    %s92 = sphi 0, %s91
    %s108 = sphi 0, %s92
    %s116 = sphi 0, %s118
    %s119 = sphi 0, %s116
    %s120 = sphi 0, %s119
    %s136 = sphi 0, %s120
    %s144 = sphi 0, %s146
    %s147 = sphi 0, %s144
    %s148 = sphi 0, %s147
    %s164 = sphi 0, %s148
    %s170 = sphi 0, %s172
    %s173 = sphi 0, %s170
    %s174 = sphi 0, %s173
    %s190 = sphi 0, %s174
    %s194 = sphi 0, %s194
    %s196 = sphi 0, %s194
    %s197 = sphi 0, %s196
    %s211 = sphi 0, %s197
    %s215 = sphi 0, %s215
    %s217 = sphi 0, %s215
    %s218 = sphi 0, %s217
    %s232 = sphi 0, %s218
    %s236 = sphi 0, %s236
    %s238 = sphi 0, %s236
    %s239 = sphi 0, %s238
    %s253 = sphi 0, %s239
    %s257 = sphi 0, %s257
    %s259 = sphi 0, %s257
    %s260 = sphi 0, %s259
    %s274 = sphi 0, %s260
    %s282 = sphi 0, %s284
    %s285 = sphi 0, %s282
    %s286 = sphi 0, %s285
    %s302 = sphi 0, %s286
  $region4: #{rkt_forward.6} parent=0 // loop_header_branch
    %20 = sbr.rel (%p18) target = $region8
  $region5: #{rkt_forward.6} parent=0 // loop_body
    %s22 = ssub.s32 %s17, 1
    %s23 = ssub.s32 %s17, 2
    %s30 = sadd.s32 1, %s25
    %p31 = scmp.ge.s32.totalorder %s30, 1
    %s32 = scalar_select %p31, 0, %s30
    %s33 = sadd.s32 1, %s24
    %s34 = scalar_select %p31, %s33, %s24
    %p35 = scmp.ge.s32.totalorder %s34, 2
    %s36 = scalar_select %p35, 0, %s34
    %s38 = sadd.s32 %s37, 1
    %p41 = scmp.eq.s32.totalorder %s17, 1
    %p42 = scmp.ne.s32.totalorder %s37, %s39
    %p43 = scmp.eq.s32.totalorder %s17, 0
    %p44 = por %p42, %p43
    %p45 = scmp.ne.s32.totalorder %s37, %s39
    %p46 = scmp.eq.s32.totalorder %s22, 1
    %p47 = por %p45, %p46
    %p48 = scmp.ne.s32.totalorder %s39, %s40
    %p49 = scmp.eq.s32.totalorder %s22, 0
    %p50 = por %p48, %p49
    %p51 = scmp.ne.s32.totalorder %s39, %s40
    %p52 = scmp.eq.s32.totalorder %s23, 1
    %p53 = por %p51, %p52
    %p55 = scmp.ne.s32.totalorder %s40, %s54
    %p56 = scmp.eq.s32.totalorder %s23, 0
    %p57 = por %p55, %p56
    %s58 = ssub.s32 %s24, %s36
    %s59 = ssub.s32 %s25, %s32
    %s60 = sor.u32 %s58, %s59
    %p61 = scmp.eq.s32.totalorder %s60, 0
    %s63 = sadd.s32 %s62, 1
    %s64 = scalar_select %p61, %s62, %s63
    %p67 = pneg %p61
    %p68 = scmp.eq.s32.totalorder %s17, 1
    %p69 = por %p67, %p68
    %p70 = scmp.ne.s32.totalorder %s62, %s65
    %p71 = scmp.eq.s32.totalorder %s17, 0
    %p72 = por %p70, %p71
    %p73 = scmp.ne.s32.totalorder %s62, %s65
    %p74 = scmp.eq.s32.totalorder %s22, 1
    %p75 = por %p73, %p74
    %p76 = scmp.ne.s32.totalorder %s65, %s66
    %p77 = scmp.eq.s32.totalorder %s22, 0
    %p78 = por %p76, %p77
    %p79 = scmp.ne.s32.totalorder %s65, %s66
    %p80 = scmp.eq.s32.totalorder %s23, 1
    %p81 = por %p79, %p80
    %p83 = scmp.ne.s32.totalorder %s66, %s82
    %p84 = scmp.eq.s32.totalorder %s23, 0
    %p85 = por %p83, %p84
    %s86 = ssub.s32 %s24, %s36
    %p87 = scmp.eq.s32.totalorder %s86, 0
    %s89 = sadd.s32 %s88, 1
    %s90 = scalar_select %p87, %s88, %s89
    %p93 = pneg %p87
    %p94 = scmp.eq.s32.totalorder %s17, 1
    %p95 = por %p93, %p94
    %p96 = scmp.ne.s32.totalorder %s88, %s91
    %p97 = scmp.eq.s32.totalorder %s17, 0
    %p98 = por %p96, %p97
    %p99 = scmp.ne.s32.totalorder %s88, %s91
    %p100 = scmp.eq.s32.totalorder %s22, 1
    %p101 = por %p99, %p100
    %p102 = scmp.ne.s32.totalorder %s91, %s92
    %p103 = scmp.eq.s32.totalorder %s22, 0
    %p104 = por %p102, %p103
    %p105 = scmp.ne.s32.totalorder %s91, %s92
    %p106 = scmp.eq.s32.totalorder %s23, 1
    %p107 = por %p105, %p106
    %p109 = scmp.ne.s32.totalorder %s92, %s108
    %p110 = scmp.eq.s32.totalorder %s23, 0
    %p111 = por %p109, %p110
    %s112 = ssub.s32 %s24, %s36
    %s113 = ssub.s32 %s25, %s32
    %s114 = sor.u32 %s112, %s113
    %p115 = scmp.eq.s32.totalorder %s114, 0
    %s117 = sadd.s32 %s116, 1
    %s118 = scalar_select %p115, %s116, %s117
    %p121 = pneg %p115
    %p122 = scmp.eq.s32.totalorder %s17, 1
    %p123 = por %p121, %p122
    %p124 = scmp.ne.s32.totalorder %s116, %s119
    %p125 = scmp.eq.s32.totalorder %s17, 0
    %p126 = por %p124, %p125
    %p127 = scmp.ne.s32.totalorder %s116, %s119
    %p128 = scmp.eq.s32.totalorder %s22, 1
    %p129 = por %p127, %p128
    %p130 = scmp.ne.s32.totalorder %s119, %s120
    %p131 = scmp.eq.s32.totalorder %s22, 0
    %p132 = por %p130, %p131
    %p133 = scmp.ne.s32.totalorder %s119, %s120
    %p134 = scmp.eq.s32.totalorder %s23, 1
    %p135 = por %p133, %p134
    %p137 = scmp.ne.s32.totalorder %s120, %s136
    %p138 = scmp.eq.s32.totalorder %s23, 0
    %p139 = por %p137, %p138
    %s140 = ssub.s32 %s24, %s36
    %s141 = ssub.s32 %s25, %s32
    %s142 = sor.u32 %s140, %s141
    %p143 = scmp.eq.s32.totalorder %s142, 0
    %s145 = sadd.s32 %s144, 1
    %s146 = scalar_select %p143, %s144, %s145
    %p149 = pneg %p143
    %p150 = scmp.eq.s32.totalorder %s17, 1
    %p151 = por %p149, %p150
    %p152 = scmp.ne.s32.totalorder %s144, %s147
    %p153 = scmp.eq.s32.totalorder %s17, 0
    %p154 = por %p152, %p153
    %p155 = scmp.ne.s32.totalorder %s144, %s147
    %p156 = scmp.eq.s32.totalorder %s22, 1
    %p157 = por %p155, %p156
    %p158 = scmp.ne.s32.totalorder %s147, %s148
    %p159 = scmp.eq.s32.totalorder %s22, 0
    %p160 = por %p158, %p159
    %p161 = scmp.ne.s32.totalorder %s147, %s148
    %p162 = scmp.eq.s32.totalorder %s23, 1
    %p163 = por %p161, %p162
    %p165 = scmp.ne.s32.totalorder %s148, %s164
    %p166 = scmp.eq.s32.totalorder %s23, 0
    %p167 = por %p165, %p166
    %s168 = ssub.s32 %s24, %s36
    %p169 = scmp.eq.s32.totalorder %s168, 0
    %s171 = sadd.s32 %s170, 1
    %s172 = scalar_select %p169, %s170, %s171
    %p175 = pneg %p169
    %p176 = scmp.eq.s32.totalorder %s17, 1
    %p177 = por %p175, %p176
    %p178 = scmp.ne.s32.totalorder %s170, %s173
    %p179 = scmp.eq.s32.totalorder %s17, 0
    %p180 = por %p178, %p179
    %p181 = scmp.ne.s32.totalorder %s170, %s173
    %p182 = scmp.eq.s32.totalorder %s22, 1
    %p183 = por %p181, %p182
    %p184 = scmp.ne.s32.totalorder %s173, %s174
    %p185 = scmp.eq.s32.totalorder %s22, 0
    %p186 = por %p184, %p185
    %p187 = scmp.ne.s32.totalorder %s173, %s174
    %p188 = scmp.eq.s32.totalorder %s23, 1
    %p189 = por %p187, %p188
    %p191 = scmp.ne.s32.totalorder %s174, %s190
    %p192 = scmp.eq.s32.totalorder %s23, 0
    %p193 = por %p191, %p192
    %s195 = sadd.s32 %s194, 1
    %p198 = scmp.eq.s32.totalorder %s17, 1
    %p199 = scmp.ne.s32.totalorder %s194, %s196
    %p200 = scmp.eq.s32.totalorder %s17, 0
    %p201 = por %p199, %p200
    %p202 = scmp.ne.s32.totalorder %s194, %s196
    %p203 = scmp.eq.s32.totalorder %s22, 1
    %p204 = por %p202, %p203
    %p205 = scmp.ne.s32.totalorder %s196, %s197
    %p206 = scmp.eq.s32.totalorder %s22, 0
    %p207 = por %p205, %p206
    %p208 = scmp.ne.s32.totalorder %s196, %s197
    %p209 = scmp.eq.s32.totalorder %s23, 1
    %p210 = por %p208, %p209
    %p212 = scmp.ne.s32.totalorder %s197, %s211
    %p213 = scmp.eq.s32.totalorder %s23, 0
    %p214 = por %p212, %p213
    %s216 = sadd.s32 %s215, 1
    %p219 = scmp.eq.s32.totalorder %s17, 1
    %p220 = scmp.ne.s32.totalorder %s215, %s217
    %p221 = scmp.eq.s32.totalorder %s17, 0
    %p222 = por %p220, %p221
    %p223 = scmp.ne.s32.totalorder %s215, %s217
    %p224 = scmp.eq.s32.totalorder %s22, 1
    %p225 = por %p223, %p224
    %p226 = scmp.ne.s32.totalorder %s217, %s218
    %p227 = scmp.eq.s32.totalorder %s22, 0
    %p228 = por %p226, %p227
    %p229 = scmp.ne.s32.totalorder %s217, %s218
    %p230 = scmp.eq.s32.totalorder %s23, 1
    %p231 = por %p229, %p230
    %p233 = scmp.ne.s32.totalorder %s218, %s232
    %p234 = scmp.eq.s32.totalorder %s23, 0
    %p235 = por %p233, %p234
    %s237 = sadd.s32 %s236, 1
    %p240 = scmp.eq.s32.totalorder %s17, 1
    %p241 = scmp.ne.s32.totalorder %s236, %s238
    %p242 = scmp.eq.s32.totalorder %s17, 0
    %p243 = por %p241, %p242
    %p244 = scmp.ne.s32.totalorder %s236, %s238
    %p245 = scmp.eq.s32.totalorder %s22, 1
    %p246 = por %p244, %p245
    %p247 = scmp.ne.s32.totalorder %s238, %s239
    %p248 = scmp.eq.s32.totalorder %s22, 0
    %p249 = por %p247, %p248
    %p250 = scmp.ne.s32.totalorder %s238, %s239
    %p251 = scmp.eq.s32.totalorder %s23, 1
    %p252 = por %p250, %p251
    %p254 = scmp.ne.s32.totalorder %s239, %s253
    %p255 = scmp.eq.s32.totalorder %s23, 0
    %p256 = por %p254, %p255
    %s258 = sadd.s32 %s257, 1
    %p261 = scmp.eq.s32.totalorder %s17, 1
    %p262 = scmp.ne.s32.totalorder %s257, %s259
    %p263 = scmp.eq.s32.totalorder %s17, 0
    %p264 = por %p262, %p263
    %p265 = scmp.ne.s32.totalorder %s257, %s259
    %p266 = scmp.eq.s32.totalorder %s22, 1
    %p267 = por %p265, %p266
    %p268 = scmp.ne.s32.totalorder %s259, %s260
    %p269 = scmp.eq.s32.totalorder %s22, 0
    %p270 = por %p268, %p269
    %p271 = scmp.ne.s32.totalorder %s259, %s260
    %p272 = scmp.eq.s32.totalorder %s23, 1
    %p273 = por %p271, %p272
    %p275 = scmp.ne.s32.totalorder %s260, %s274
    %p276 = scmp.eq.s32.totalorder %s23, 0
    %p277 = por %p275, %p276
    %s278 = ssub.s32 %s24, %s36
    %s279 = ssub.s32 %s25, %s32
    %s280 = sor.u32 %s278, %s279
    %p281 = scmp.eq.s32.totalorder %s280, 0
    %s283 = sadd.s32 %s282, 1
    %s284 = scalar_select %p281, %s282, %s283
    %p287 = pneg %p281
    %p288 = scmp.eq.s32.totalorder %s17, 1
    %p289 = por %p287, %p288
    %p290 = scmp.ne.s32.totalorder %s282, %s285
    %p291 = scmp.eq.s32.totalorder %s17, 0
    %p292 = por %p290, %p291
    %p293 = scmp.ne.s32.totalorder %s282, %s285
    %p294 = scmp.eq.s32.totalorder %s22, 1
    %p295 = por %p293, %p294
    %p296 = scmp.ne.s32.totalorder %s285, %s286
    %p297 = scmp.eq.s32.totalorder %s22, 0
    %p298 = por %p296, %p297
    %p299 = scmp.ne.s32.totalorder %s285, %s286
    %p300 = scmp.eq.s32.totalorder %s23, 1
    %p301 = por %p299, %p300
    %p303 = scmp.ne.s32.totalorder %s286, %s302
    %p304 = scmp.eq.s32.totalorder %s23, 0
    %p305 = por %p303, %p304
    %p306 = scmp.le.s32.totalorder 1, %s17
    %p307 = scmp.lt.s32.totalorder %s17, 3
    %p308 = pnand %p306, %p307
    %p309 = pneg %p308
    // Predicated region
    $region9: #{rkt_forward.6} parent=5 // pred_check
      _
    $region10: #{rkt_forward.6} parent=5 // pred_check_branch
      %311 = sbr.rel (%p308) target = $region12
    $region11: #{rkt_forward.6} parent=5 // pred_region
      %s312 = ssub.s32 %s17, 1
      // Predicated region
      $region13: #{rkt_forward.6} parent=11 // pred_check
        %p313 = pneg %p50
      $region14: #{rkt_forward.6} parent=11 // pred_check_branch
        %315 = sbr.rel (%p313) target = $region16
      $region15: #{rkt_forward.6} parent=11 // pred_region
        _
      $region16: #{rkt_forward.6} parent=11 // pred_fallthru
        _
      // Predicated region
      $region17: #{rkt_forward.6} parent=11 // pred_check
        %p316 = pneg %p207
      $region18: #{rkt_forward.6} parent=11 // pred_check_branch
        %318 = sbr.rel (%p316) target = $region20
      $region19: #{rkt_forward.6} parent=11 // pred_region
        _
      $region20: #{rkt_forward.6} parent=11 // pred_fallthru
        _
      // Predicated region
      $region21: #{rkt_forward.6} parent=11 // pred_check
        %p319 = pneg %p228
      $region22: #{rkt_forward.6} parent=11 // pred_check_branch
        %321 = sbr.rel (%p319) target = $region24
      $region23: #{rkt_forward.6} parent=11 // pred_region
        _
      $region24: #{rkt_forward.6} parent=11 // pred_fallthru
        _
      // Predicated region
      $region25: #{rkt_forward.6} parent=11 // pred_check
        %p322 = pneg %p249
      $region26: #{rkt_forward.6} parent=11 // pred_check_branch
        %324 = sbr.rel (%p322) target = $region28
      $region27: #{rkt_forward.6} parent=11 // pred_region
        _
      $region28: #{rkt_forward.6} parent=11 // pred_fallthru
        _
      // Predicated region
      $region29: #{rkt_forward.6} parent=11 // pred_check
        %p325 = pneg %p270
      $region30: #{rkt_forward.6} parent=11 // pred_check_branch
        %327 = sbr.rel (%p325) target = $region32
      $region31: #{rkt_forward.6} parent=11 // pred_region
        _
      $region32: #{rkt_forward.6} parent=11 // pred_fallthru
        _
    $region12: #{rkt_forward.6} parent=5 // pred_fallthru
      _
    %p328 = scmp.lt.s32.totalorder %s17, 2
    // Predicated region
    $region33: #{rkt_forward.6} parent=5 // pred_check
      %p329 = pneg %p328
    $region34: #{rkt_forward.6} parent=5 // pred_check_branch
      %331 = sbr.rel (%p329) target = $region36
    $region35: #{rkt_forward.6} parent=5 // pred_region
      // Predicated region
      $region37: #{rkt_forward.6} parent=35 // pred_check
        %p332 = pneg %p72
      $region38: #{rkt_forward.6} parent=35 // pred_check_branch
        %334 = sbr.rel (%p332) target = $region40
      $region39: #{rkt_forward.6} parent=35 // pred_region
        %p335 = scmp.lt.s32.totalorder %s24, 1
        %s336 = scalar_select %p335, %s24, 1
        %p337 = scmp.lt.s32.totalorder %s25, 0
        %s338 = scalar_select %p337, %s25, 0
        %s339 = sadd.s32 %s338, %s336
        %s340 = smul.addr %s339, 8
        %s341 = scalar_lea.vmem %s1, %s340
      $region40: #{rkt_forward.6} parent=35 // pred_fallthru
        _
      // Predicated region
      $region41: #{rkt_forward.6} parent=35 // pred_check
        %p342 = pneg %p98
      $region42: #{rkt_forward.6} parent=35 // pred_check_branch
        %344 = sbr.rel (%p342) target = $region44
      $region43: #{rkt_forward.6} parent=35 // pred_region
        %p345 = scmp.lt.s32.totalorder %s24, 1
        %s346 = scalar_select %p345, %s24, 1
        %s347 = smul.addr %s346, 8
        %s348 = scalar_lea.vmem %s2, %s347
      $region44: #{rkt_forward.6} parent=35 // pred_fallthru
        _
      // Predicated region
      $region45: #{rkt_forward.6} parent=35 // pred_check
        %p349 = pneg %p126
      $region46: #{rkt_forward.6} parent=35 // pred_check_branch
        %351 = sbr.rel (%p349) target = $region48
      $region47: #{rkt_forward.6} parent=35 // pred_region
        %p352 = scmp.lt.s32.totalorder %s24, 1
        %s353 = scalar_select %p352, %s24, 1
        %p354 = scmp.lt.s32.totalorder %s25, 0
        %s355 = scalar_select %p354, %s25, 0
        %s356 = sadd.s32 %s355, %s353
        %s357 = smul.addr %s356, 4
        %s358 = scalar_lea.vmem %s3, %s357
      $region48: #{rkt_forward.6} parent=35 // pred_fallthru
        _
      // Predicated region
      $region49: #{rkt_forward.6} parent=35 // pred_check
        %p359 = pneg %p154
      $region50: #{rkt_forward.6} parent=35 // pred_check_branch
        %361 = sbr.rel (%p359) target = $region52
      $region51: #{rkt_forward.6} parent=35 // pred_region
        %p362 = scmp.lt.s32.totalorder %s24, 1
        %s363 = scalar_select %p362, %s24, 1
        %p364 = scmp.lt.s32.totalorder %s25, 0
        %s365 = scalar_select %p364, %s25, 0
        %s366 = sadd.s32 %s365, %s363
        %s367 = smul.addr %s366, 8
        %s368 = scalar_lea.vmem %s4, %s367
      $region52: #{rkt_forward.6} parent=35 // pred_fallthru
        _
      // Predicated region
      $region53: #{rkt_forward.6} parent=35 // pred_check
        %p369 = pneg %p180
      $region54: #{rkt_forward.6} parent=35 // pred_check_branch
        %371 = sbr.rel (%p369) target = $region56
      $region55: #{rkt_forward.6} parent=35 // pred_region
        %p372 = scmp.lt.s32.totalorder %s24, 1
        %s373 = scalar_select %p372, %s24, 1
        %s374 = scalar_lea.vmem %s5, %s373
      $region56: #{rkt_forward.6} parent=35 // pred_fallthru
        _
    $region36: #{rkt_forward.6} parent=5 // pred_fallthru
      _
    %p375 = scmp.le.s32.totalorder 1, %s17
    %p376 = scmp.lt.s32.totalorder %s17, 3
    %p377 = pnand %p375, %p376
    %p378 = pneg %p377
    // Predicated region
    $region57: #{rkt_forward.6} parent=5 // pred_check
      _
    $region58: #{rkt_forward.6} parent=5 // pred_check_branch
      %380 = sbr.rel (%p377) target = $region60
    $region59: #{rkt_forward.6} parent=5 // pred_region
      %s381 = ssub.s32 %s17, 1
      %p382 = pneg %p50
      %p383 = pneg %p47
      %p384 = scmp.lt.s32.totalorder %s26, 1
      %s385 = scalar_select %p384, %s26, 1
      %p386 = scmp.lt.s32.totalorder %s27, 0
      %s387 = scalar_select %p386, %s27, 0
      %s388 = sadd.s32 %s387, %s385
      %s389 = smul.addr %s388, 8
      %s390 = scalar_lea.vmem %s1, %s389
      %p391 = pneg %p78
      %p392 = pneg %p75
      %p393 = scmp.lt.s32.totalorder %s26, 1
      %s394 = scalar_select %p393, %s26, 1
      %s395 = smul.addr %s394, 8
      %s396 = scalar_lea.vmem %s2, %s395
      %p397 = pneg %p104
      %p398 = pneg %p101
      %p399 = scmp.lt.s32.totalorder %s26, 1
      %s400 = scalar_select %p399, %s26, 1
      %p401 = scmp.lt.s32.totalorder %s27, 0
      %s402 = scalar_select %p401, %s27, 0
      %s403 = sadd.s32 %s402, %s400
      %s404 = smul.addr %s403, 4
      %s405 = scalar_lea.vmem %s3, %s404
      %p406 = pneg %p132
      %p407 = pneg %p129
      %p408 = scmp.lt.s32.totalorder %s26, 1
      %s409 = scalar_select %p408, %s26, 1
      %p410 = scmp.lt.s32.totalorder %s27, 0
      %s411 = scalar_select %p410, %s27, 0
      %s412 = sadd.s32 %s411, %s409
      %s413 = smul.addr %s412, 8
      %s414 = scalar_lea.vmem %s4, %s413
      %p415 = pneg %p160
      %p416 = pneg %p157
      %p417 = scmp.lt.s32.totalorder %s26, 1
      %s418 = scalar_select %p417, %s26, 1
      %s419 = scalar_lea.vmem %s5, %s418
      %p420 = pneg %p186
      %p421 = pneg %p183
      %p422 = pneg %p207
      %p423 = pneg %p204
      %p424 = pneg %p228
      %p425 = pneg %p225
      %p426 = pneg %p249
      %p427 = pneg %p246
      %p428 = pneg %p270
      %p429 = pneg %p267
      %p430 = pneg %p298
      %p431 = pneg %p295
      %p432 = scmp.lt.s32.totalorder %s26, 1
      %s433 = scalar_select %p432, %s26, 1
      %p434 = scmp.lt.s32.totalorder %s27, 0
      %s435 = scalar_select %p434, %s27, 0
      %s436 = sadd.s32 %s435, %s433
      %s437 = smul.addr %s436, 8
      %s438 = scalar_lea.vmem %s10, %s437
      %p439 = scmp.lt.s32.totalorder %s26, 1
      %s440 = scalar_select %p439, %s26, 1
      %p441 = scmp.lt.s32.totalorder %s27, 0
      %s442 = scalar_select %p441, %s27, 0
      %s443 = sadd.s32 %s442, %s440
      %s444 = smul.addr %s443, 8
      %s445 = scalar_lea.vmem %s1, %s444
      %p446 = scmp.lt.s32.totalorder %s26, 1
      %s447 = scalar_select %p446, %s26, 1
      %s448 = smul.addr %s447, 8
      %s449 = scalar_lea.vmem %s2, %s448
      %p450 = scmp.lt.s32.totalorder %s26, 1
      %s451 = scalar_select %p450, %s26, 1
      %p452 = scmp.lt.s32.totalorder %s27, 0
      %s453 = scalar_select %p452, %s27, 0
      %s454 = sadd.s32 %s453, %s451
      %s455 = smul.addr %s454, 4
      %s456 = scalar_lea.vmem %s3, %s455
      %p457 = scmp.lt.s32.totalorder %s26, 1
      %s458 = scalar_select %p457, %s26, 1
      %p459 = scmp.lt.s32.totalorder %s27, 0
      %s460 = scalar_select %p459, %s27, 0
      %s461 = sadd.s32 %s460, %s458
      %s462 = smul.addr %s461, 8
      %s463 = scalar_lea.vmem %s4, %s462
      %p464 = scmp.lt.s32.totalorder %s26, 1
      %s465 = scalar_select %p464, %s26, 1
      %s466 = scalar_lea.vmem %s5, %s465
      %p467 = scmp.lt.s32.totalorder %s26, 1
      %s468 = scalar_select %p467, %s26, 1
      %p469 = scmp.lt.s32.totalorder %s27, 0
      %s470 = scalar_select %p469, %s27, 0
      %s471 = sadd.s32 %s470, %s468
      %s472 = smul.addr %s471, 8
      %s473 = scalar_lea.vmem %s10, %s472
      %p475 = scmp.eq.s32.totalorder %s27, 0
      // Predicated region
      $region61: #{rkt_forward.6} parent=59 // pred_check
        %p476 = pneg %p475
      $region62: #{rkt_forward.6} parent=59 // pred_check_branch
        %478 = sbr.rel (%p476) target = $region64
      $region63: #{rkt_forward.6} parent=59 // pred_region
        %v479 = vld [vmem:[%s449] sm:$0xff]
        %v480 = vpack.c.bf16 %v479, %v479
        %v481 = vld [vmem:[%s8] sm:$0xff]
        %v482 = vld [vmem:[%s8 + $0x8] sm:$0xff]
        %v483 = vld [vmem:[%s8 + $0x10] sm:$0xff]
        %v484 = vld [vmem:[%s8 + $0x18] sm:$0xff]
        %v485 = vpack.c.bf16 %v482, %v481
        %v486 = vpack.c.bf16 %v484, %v483
        %v487 = vld [vmem:[%s9] sm:$0x1]
        %v489 = vperm.slane %v487, 0
        %vm491 = vcmask 261120
        %v493 = vsel %vm491, %v480, 0
        %495 = vmatpush.bf16.msra.mxu0 0
        %496 = vmatpush.bf16.msra.mxu0 0
        %497 = vmatpush.bf16.msra.mxu0 0
        %498 = vmatpush.bf16.msra.mxu0 0
        %499 = vmatpush.bf16.msra.mxu0 0
        %500 = vmatpush.bf16.msra.mxu0 0
        %501 = vmatpush.bf16.msra.mxu0 %v486
        %502 = vmatpush.bf16.msra.mxu0 %v485
        %503 = vmatmul.bf16.gmra.mxu0 %v493
        %v504 = vpop.f32.mrf.mxu0
        %v505 = vadd.f32 %v489, %v504
        %v506 = vpop.f32.mrf.mxu0
        %507 = vdwg.mxu0
        %v508 = vpack.c.bf16 %v505, %v505
        %vm509 = vcmask 519168
        %510 = vst.msk [vmem:[#allocation2] sm:$0xf] %vm509, %v508
      $region64: #{rkt_forward.6} parent=59 // pred_fallthru
        _
      %v511 = vld [vmem:[%s445] sm:$0xff]
      %v512 = vpack.c.bf16 %v511, %v511
      %v513 = vld [vmem:[%s6] sm:$0xff]
      %v514 = vld [vmem:[%s6 + $0x8] sm:$0xff]
      %v515 = vld [vmem:[%s6 + $0x10] sm:$0xff]
      %v516 = vld [vmem:[%s6 + $0x18] sm:$0xff]
      %v517 = vpack.c.bf16 %v514, %v513
      %v518 = vpack.c.bf16 %v516, %v515
      %v519 = vld [vmem:[%s7] sm:$0x1]
      %v521 = vperm.slane %v519, 0
      %vm523 = vcmask 261120
      %v525 = vsel %vm523, %v512, 0
      %527 = vmatpush.bf16.msra.mxu0 0
      %528 = vmatpush.bf16.msra.mxu0 0
      %529 = vmatpush.bf16.msra.mxu0 0
      %530 = vmatpush.bf16.msra.mxu0 0
      %531 = vmatpush.bf16.msra.mxu0 0
      %532 = vmatpush.bf16.msra.mxu0 0
      %533 = vmatpush.bf16.msra.mxu0 %v518
      %534 = vmatpush.bf16.msra.mxu0 %v517
      %535 = vmatmul.bf16.gmra.mxu0 %v525
      %v536 = vpop.f32.mrf.mxu0
      %v537 = vadd.f32 %v521, %v536
      %v538 = vpop.f32.mrf.mxu0
      %539 = vdwg.mxu0
      %v540 = vpack.c.bf16 %v537, %v537
      %vm541 = vcmask 257024
      %542 = vst.msk [vmem:[#allocation3] sm:$0xf] %vm541, %v540
      %s543 = sld [smem:[#allocation4]]
      %v544 = vstv %s543
      %v545 = vrcp.pop %v544
      %v546 = vmul.f32 %v544, %v545
      %v547 = vsub.f32 1.0, %v546
      %v548 = vmul.f32 %v545, %v547
      %v549 = vadd.f32 %v545, %v548
      %vm550 = vweird.f32 %v544
      %vm551 = vweird.f32 %v545
      %vm552 = vmor %vm550, %vm551
      %v553 = vsel %vm552, %v545, %v549
      %v554 = vand.u32 2147483647, %v544
      %vm555 = vcmp.eq.f32.partialorder %v554, 8.507059e+37
      %v556 = vand.u32 %v544, 2147483648
      %v557 = vor.u32 1.1754944e-38, %v556
      %v558 = vsel %vm555, %v557, %v553
      %s559 = vtos %v558
      %s560 = smul.u32 %s27, 8
      %v561 = vlaneseq
      %v562 = vshrl.u32 %v561, 7
      %v563 = vstv %s560
      %v564 = vadd.s32 %v563, %v562
      %v565 = vlaneseq
      %v566 = vand.u32 %v565, 127
      %vm567 = vcmp.ge.s32.totalorder %v566, %v564
      %v568 = vld [vmem:[%s456] sm:$0xf]
      %v569 = vunpack.c.l.bf16 %v568
      %v570 = vsel %vm567, 1, 0
      %v571 = vcvt.s32.f32 %v570
      %v572 = vmul.f32 %v569, %v571
      %vm573 = vcmp.eq.f32.partialorder %v572, 0.0
      %v574 = vsel %vm573, -100000.0, %v572
      %v575 = vld [vmem:[%s463] sm:$0xff]
      %v576 = vld [vmem:[%s466] sm:$0x1]
      %578 = vset.pattern.permute.xlu0 0
      %579 = vperm.xlu0 %578, %v575
      %v580 = vpop.permute.xlu0 %579
      %v583 = vperm.slane %v576, 0
      %v585 = vsub.f32 %v580, %v583
      %v586 = vand.u32 2147483647, %v585
      %v587 = vsub.f32 0.0, %v586
      %v588 = vstv %s559
      %v589 = vmul.f32 %v587, %v588
      %v590 = vmul.f32 %v589, 1.442695
      %v591 = vpow.pop %v590
      %v592 = vsel %vm567, -100000.0, %v591
      %v593 = vadd.f32 %v592, %v574
      %vm594 = vcmask 64512
      %v595 = vsel %vm594, %v593, -inf
      %596 = vmax.xlane.f32.xlu0 %v595
      %v597 = vpop.xlane.xlu0 %596
      %v598 = vsub.f32 %v593, %v597
      %v599 = vmul.f32 %v598, 1.442695
      %v600 = vpow.pop %v599
      %v601 = vsel %vm594, %v600, 0.0
      %602 = vadd.xlane.f32.xlu0 %v601
      %v603 = vpop.xlane.xlu0 %602
      %v604 = vrcp.pop %v603
      %v605 = vmul.f32 %v600, %v604
      %v606 = vmul.f32 %v605, 0.6
      %v607 = vld [vmem:[#allocation3] sm:$0xf]
      %v608 = vld [vmem:[#allocation2] sm:$0xf]
      %v610 = vsel %vm594, %v607, 0
      %v613 = vsel %vm594, %v608, 0
      %615 = vmatpush.bf16.xpose.msra.mxu0 0
      %616 = vmatpush.bf16.xpose.msra.mxu0 0
      %617 = vmatpush.bf16.xpose.msra.mxu0 0
      %618 = vmatpush.bf16.xpose.msra.mxu0 0
      %619 = vmatpush.bf16.xpose.msra.mxu0 0
      %620 = vmatpush.bf16.xpose.msra.mxu0 0
      %621 = vmatpush.bf16.xpose.msra.mxu0 0
      %622 = vmatpush.bf16.xpose.msra.mxu0 %v613
      %623 = vmatmul.bf16.gmra.mxu0 %v610
      %v624 = vpop.f32.mrf.mxu0
      %v625 = vadd.f32 0.0, %v624
      %v626 = vpop.f32.mrf.mxu0
      %627 = vdwg.mxu0
      %v628 = vmul.f32 %v625, 0.35355338
      %v629 = vsel %vm567, -1e+32, %v628
      %v630 = vsel %vm594, %v629, -inf
      %631 = vmax.xlane.f32.xlu0 %v630
      %v632 = vpop.xlane.xlu0 %631
      %v633 = vsub.f32 %v629, %v632
      %v634 = vmul.f32 %v633, 1.442695
      %v635 = vpow.pop %v634
      %v636 = vsel %vm594, %v635, 0.0
      %637 = vadd.xlane.f32.xlu0 %v636
      %v638 = vpop.xlane.xlu0 %637
      %v639 = vrcp.pop %v638
      %v640 = vmul.f32 %v635, %v639
      %v641 = vmul.f32 %v640, 0.4
      %v642 = vadd.f32 %v641, %v606
      %v643 = vpack.c.bf16 %v642, %v642
      %v645 = vunpack.c.l.b16 %v608
      %v646 = vpack.c.b16 %v645, %v645
      %647 = vrot.lane.b32.xlu0 %v646, 96
      %v648 = vpop.permute.xlu0 %647
      %v650 = vsel %vm594, %v643, 0
      %vm652 = vcmask 1043456
      %v654 = vsel %vm652, %v648, 0
      %656 = vmatpush.bf16.msra.mxu0 0
      %657 = vmatpush.bf16.msra.mxu0 0
      %658 = vmatpush.bf16.msra.mxu0 0
      %659 = vmatpush.bf16.msra.mxu0 0
      %660 = vmatpush.bf16.msra.mxu0 0
      %661 = vmatpush.bf16.msra.mxu0 0
      %662 = vmatpush.bf16.msra.mxu0 0
      %663 = vmatpush.bf16.msra.mxu0 %v654
      %664 = vmatmul.bf16.gmra.mxu0 %v650
      %v665 = vpop.f32.mrf.mxu0
      %v666 = vadd.f32 0.0, %v665
      %v667 = vpop.f32.mrf.mxu0
      %668 = vdwg.mxu0
      %669 = vst.msk [vmem:[%s473] sm:$0xff] %vm594, %v666
      %v670 = vld [vmem:[#allocation3] sm:$0xf]
      %v671 = vld [vmem:[#allocation2] sm:$0xf]
      %v673 = vunpack.c.l.b16 %v670
      %v674 = vpack.c.b16 %v673, %v673
      %675 = vrot.lane.b32.xlu0 %v674, 120
      %v676 = vpop.permute.xlu0 %675
      %v678 = vunpack.c.l.b16 %v671
      %v679 = vpack.c.b16 %v678, %v678
      %680 = vrot.lane.b32.xlu0 %v679, 120
      %v681 = vpop.permute.xlu0 %680
      %v683 = vsel %vm594, %v676, 0
      %v686 = vsel %vm594, %v681, 0
      %688 = vmatpush.bf16.xpose.msra.mxu0 0
      %689 = vmatpush.bf16.xpose.msra.mxu0 0
      %690 = vmatpush.bf16.xpose.msra.mxu0 0
      %691 = vmatpush.bf16.xpose.msra.mxu0 0
      %692 = vmatpush.bf16.xpose.msra.mxu0 0
      %693 = vmatpush.bf16.xpose.msra.mxu0 0
      %694 = vmatpush.bf16.xpose.msra.mxu0 0
      %695 = vmatpush.bf16.xpose.msra.mxu0 %v686
      %696 = vmatmul.bf16.gmra.mxu0 %v683
      %v697 = vpop.f32.mrf.mxu0
      %v698 = vadd.f32 0.0, %v697
      %v699 = vpop.f32.mrf.mxu0
      %700 = vdwg.mxu0
      %v701 = vmul.f32 %v698, 0.35355338
      %v702 = vsel %vm567, -1e+32, %v701
      %v703 = vsel %vm594, %v702, -inf
      %704 = vmax.xlane.f32.xlu0 %v703
      %v705 = vpop.xlane.xlu0 %704
      %v706 = vsub.f32 %v702, %v705
      %v707 = vmul.f32 %v706, 1.442695
      %v708 = vpow.pop %v707
      %v709 = vsel %vm594, %v708, 0.0
      %710 = vadd.xlane.f32.xlu0 %v709
      %v711 = vpop.xlane.xlu0 %710
      %v712 = vrcp.pop %v711
      %v713 = vmul.f32 %v708, %v712
      %v714 = vmul.f32 %v713, 0.4
      %v715 = vadd.f32 %v714, %v606
      %v716 = vpack.c.bf16 %v715, %v715
      %717 = vrot.lane.b32.xlu0 %v679, 88
      %v718 = vpop.permute.xlu0 %717
      %v720 = vsel %vm594, %v716, 0
      %v723 = vsel %vm652, %v718, 0
      %725 = vmatpush.bf16.msra.mxu0 0
      %726 = vmatpush.bf16.msra.mxu0 0
      %727 = vmatpush.bf16.msra.mxu0 0
      %728 = vmatpush.bf16.msra.mxu0 0
      %729 = vmatpush.bf16.msra.mxu0 0
      %730 = vmatpush.bf16.msra.mxu0 0
      %731 = vmatpush.bf16.msra.mxu0 0
      %732 = vmatpush.bf16.msra.mxu0 %v723
      %733 = vmatmul.bf16.gmra.mxu0 %v720
      %v734 = vpop.f32.mrf.mxu0
      %v735 = vadd.f32 0.0, %v734
      %v736 = vpop.f32.mrf.mxu0
      %737 = vdwg.mxu0
      %739 = vrot.lane.b32.xlu0 %v735, 8
      %v740 = vpop.permute.xlu0 %739
      %vm742 = vcmask 130112
      %743 = vst.msk [vmem:[%s473] sm:$0xff] %vm742, %v740
      %v744 = vld [vmem:[#allocation3] sm:$0xf]
      %v745 = vld [vmem:[#allocation2] sm:$0xf]
      %v747 = vunpack.c.l.b16 %v744
      %v748 = vpack.c.b16 %v747, %v747
      %749 = vrot.lane.b32.xlu0 %v748, 112
      %v750 = vpop.permute.xlu0 %749
      %v752 = vunpack.c.l.b16 %v745
      %v753 = vpack.c.b16 %v752, %v752
      %754 = vrot.lane.b32.xlu0 %v753, 112
      %v755 = vpop.permute.xlu0 %754
      %v757 = vsel %vm594, %v750, 0
      %v760 = vsel %vm594, %v755, 0
      %762 = vmatpush.bf16.xpose.msra.mxu0 0
      %763 = vmatpush.bf16.xpose.msra.mxu0 0
      %764 = vmatpush.bf16.xpose.msra.mxu0 0
      %765 = vmatpush.bf16.xpose.msra.mxu0 0
      %766 = vmatpush.bf16.xpose.msra.mxu0 0
      %767 = vmatpush.bf16.xpose.msra.mxu0 0
      %768 = vmatpush.bf16.xpose.msra.mxu0 0
      %769 = vmatpush.bf16.xpose.msra.mxu0 %v760
      %770 = vmatmul.bf16.gmra.mxu0 %v757
      %v771 = vpop.f32.mrf.mxu0
      %v772 = vadd.f32 0.0, %v771
      %v773 = vpop.f32.mrf.mxu0
      %774 = vdwg.mxu0
      %v775 = vmul.f32 %v772, 0.35355338
      %v776 = vsel %vm567, -1e+32, %v775
      %v777 = vsel %vm594, %v776, -inf
      %778 = vmax.xlane.f32.xlu0 %v777
      %v779 = vpop.xlane.xlu0 %778
      %v780 = vsub.f32 %v776, %v779
      %v781 = vmul.f32 %v780, 1.442695
      %v782 = vpow.pop %v781
      %v783 = vsel %vm594, %v782, 0.0
      %784 = vadd.xlane.f32.xlu0 %v783
      %v785 = vpop.xlane.xlu0 %784
      %v786 = vrcp.pop %v785
      %v787 = vmul.f32 %v782, %v786
      %v788 = vmul.f32 %v787, 0.4
      %v789 = vadd.f32 %v788, %v606
      %v790 = vpack.c.bf16 %v789, %v789
      %791 = vrot.lane.b32.xlu0 %v753, 80
      %v792 = vpop.permute.xlu0 %791
      %v794 = vsel %vm594, %v790, 0
      %v797 = vsel %vm652, %v792, 0
      %799 = vmatpush.bf16.msra.mxu0 0
      %800 = vmatpush.bf16.msra.mxu0 0
      %801 = vmatpush.bf16.msra.mxu0 0
      %802 = vmatpush.bf16.msra.mxu0 0
      %803 = vmatpush.bf16.msra.mxu0 0
      %804 = vmatpush.bf16.msra.mxu0 0
      %805 = vmatpush.bf16.msra.mxu0 0
      %806 = vmatpush.bf16.msra.mxu0 %v797
      %807 = vmatmul.bf16.gmra.mxu0 %v794
      %v808 = vpop.f32.mrf.mxu0
      %v809 = vadd.f32 0.0, %v808
      %v810 = vpop.f32.mrf.mxu0
      %811 = vdwg.mxu0
      %813 = vrot.lane.b32.xlu0 %v809, 16
      %v814 = vpop.permute.xlu0 %813
      %vm816 = vcmask 195712
      %817 = vst.msk [vmem:[%s473] sm:$0xff] %vm816, %v814
      %v818 = vld [vmem:[#allocation3] sm:$0xf]
      %v819 = vld [vmem:[#allocation2] sm:$0xf]
      %v821 = vunpack.c.l.b16 %v818
      %v822 = vpack.c.b16 %v821, %v821
      %823 = vrot.lane.b32.xlu0 %v822, 104
      %v824 = vpop.permute.xlu0 %823
      %v826 = vunpack.c.l.b16 %v819
      %v827 = vpack.c.b16 %v826, %v826
      %828 = vrot.lane.b32.xlu0 %v827, 104
      %v829 = vpop.permute.xlu0 %828
      %v831 = vsel %vm594, %v824, 0
      %v834 = vsel %vm594, %v829, 0
      %836 = vmatpush.bf16.xpose.msra.mxu0 0
      %837 = vmatpush.bf16.xpose.msra.mxu0 0
      %838 = vmatpush.bf16.xpose.msra.mxu0 0
      %839 = vmatpush.bf16.xpose.msra.mxu0 0
      %840 = vmatpush.bf16.xpose.msra.mxu0 0
      %841 = vmatpush.bf16.xpose.msra.mxu0 0
      %842 = vmatpush.bf16.xpose.msra.mxu0 0
      %843 = vmatpush.bf16.xpose.msra.mxu0 %v834
      %844 = vmatmul.bf16.gmra.mxu0 %v831
      %v845 = vpop.f32.mrf.mxu0
      %v846 = vadd.f32 0.0, %v845
      %v847 = vpop.f32.mrf.mxu0
      %848 = vdwg.mxu0
      %v849 = vmul.f32 %v846, 0.35355338
      %v850 = vsel %vm567, -1e+32, %v849
      %v851 = vsel %vm594, %v850, -inf
      %852 = vmax.xlane.f32.xlu0 %v851
      %v853 = vpop.xlane.xlu0 %852
      %v854 = vsub.f32 %v850, %v853
      %v855 = vmul.f32 %v854, 1.442695
      %v856 = vpow.pop %v855
      %v857 = vsel %vm594, %v856, 0.0
      %858 = vadd.xlane.f32.xlu0 %v857
      %v859 = vpop.xlane.xlu0 %858
      %v860 = vrcp.pop %v859
      %v861 = vmul.f32 %v856, %v860
      %v862 = vmul.f32 %v861, 0.4
      %v863 = vadd.f32 %v862, %v606
      %v864 = vpack.c.bf16 %v863, %v863
      %865 = vrot.lane.b32.xlu0 %v827, 72
      %v866 = vpop.permute.xlu0 %865
      %v868 = vsel %vm594, %v864, 0
      %v871 = vsel %vm652, %v866, 0
      %873 = vmatpush.bf16.msra.mxu0 0
      %874 = vmatpush.bf16.msra.mxu0 0
      %875 = vmatpush.bf16.msra.mxu0 0
      %876 = vmatpush.bf16.msra.mxu0 0
      %877 = vmatpush.bf16.msra.mxu0 0
      %878 = vmatpush.bf16.msra.mxu0 0
      %879 = vmatpush.bf16.msra.mxu0 0
      %880 = vmatpush.bf16.msra.mxu0 %v871
      %881 = vmatmul.bf16.gmra.mxu0 %v868
      %v882 = vpop.f32.mrf.mxu0
      %v883 = vadd.f32 0.0, %v882
      %v884 = vpop.f32.mrf.mxu0
      %885 = vdwg.mxu0
      %887 = vrot.lane.b32.xlu0 %v883, 24
      %v888 = vpop.permute.xlu0 %887
      %vm890 = vcmask 261312
      %891 = vst.msk [vmem:[%s473] sm:$0xff] %vm890, %v888
      %p892 = scmp.lt.s32.totalorder %s26, 1
      %s893 = scalar_select %p892, %s26, 1
      %p894 = scmp.lt.s32.totalorder %s27, 0
      %s895 = scalar_select %p894, %s27, 0
      %s896 = sadd.s32 %s895, %s893
      %s897 = smul.addr %s896, 8
      %s898 = scalar_lea.vmem %s10, %s897
      // Predicated region
      $region65: #{rkt_forward.6} parent=59 // pred_check
        %p899 = pneg %p295
      $region66: #{rkt_forward.6} parent=59 // pred_check_branch
        %901 = sbr.rel (%p899) target = $region68
      $region67: #{rkt_forward.6} parent=59 // pred_region
        _
      $region68: #{rkt_forward.6} parent=59 // pred_fallthru
        _
    $region60: #{rkt_forward.6} parent=5 // pred_fallthru
      _
    %p902 = scmp.le.s32.totalorder 2, %s17
    // Predicated region
    $region69: #{rkt_forward.6} parent=5 // pred_check
      %p903 = pneg %p902
    $region70: #{rkt_forward.6} parent=5 // pred_check_branch
      %905 = sbr.rel (%p903) target = $region72
    $region71: #{rkt_forward.6} parent=5 // pred_region
      %s906 = ssub.s32 %s17, 2
      // Predicated region
      $region73: #{rkt_forward.6} parent=71 // pred_check
        %p907 = pneg %p301
      $region74: #{rkt_forward.6} parent=71 // pred_check_branch
        %909 = sbr.rel (%p907) target = $region76
      $region75: #{rkt_forward.6} parent=71 // pred_region
        %p910 = scmp.lt.s32.totalorder %s28, 1
        %s911 = scalar_select %p910, %s28, 1
        %p912 = scmp.lt.s32.totalorder %s29, 0
        %s913 = scalar_select %p912, %s29, 0
        %s914 = sadd.s32 %s913, %s911
        %s915 = smul.addr %s914, 8
        %s916 = scalar_lea.vmem %s10, %s915
      $region76: #{rkt_forward.6} parent=71 // pred_fallthru
        _
    $region72: #{rkt_forward.6} parent=5 // pred_fallthru
      _
  $region6: #{rkt_forward.6} parent=0 // loop_footer
    %s21 = sadd.s32 1, %s17
  $region7: #{rkt_forward.6} parent=0 // loop_footer_branch
    %16 = sbr.rel target = $region3
  $region8: #{rkt_forward.6} parent=0 // loop_exit
    _

// kernel: rkt_forward.7
$region0: #{rkt_forward.7}
  #allocation0 [shape = 'u32[]', space=smem, size = 0x4, offset = 0x4, fixed_abs, tag = 'smem constant byte address 0x4 - core index']
  #allocation1 [shape = 'u32[72,128]{1,0:T(1,128)}', space=vmem, size = 0x9000, scoped, tag = 'internal scratch']
  %s0 = inlined_call_operand.vmem [shape: f32[16,32], index: 0, kind: input, shape index: {}]
  %s1 = inlined_call_operand.vmem [shape: f32[16,32], index: 1, kind: input, shape index: {}]
  %s2 = inlined_call_operand.vmem [shape: f32[32,32], index: 2, kind: input, shape index: {}]
  %s3 = inlined_call_operand.vmem [shape: f32[1,32], index: 3, kind: input, shape index: {}]
  %s4 = inlined_call_operand.vmem [shape: f32[32,32], index: 4, kind: input, shape index: {}]
  %s5 = inlined_call_operand.vmem [shape: f32[1,32], index: 5, kind: input, shape index: {}]
  %s6 = inlined_call_operand.vmem [shape: f32[1,32], index: 6, kind: input, shape index: {}]
  %s7 = inlined_call_operand.vmem [shape: f32[1,32], index: 7, kind: input, shape index: {}]
  %s8 = inlined_call_operand.vmem [shape: f32[1,32], index: 8, kind: input, shape index: {}]
  %s9 = inlined_call_operand.vmem [shape: f32[1,32], index: 9, kind: input, shape index: {}]
  %s10 = inlined_call_operand.vmem [shape: f32[16,32], index: 10, kind: output, shape index: {}]
  %s11 = sld [smem:[#allocation0]]
  $region50: #{rkt_forward.7} parent=0
    _
  %s13 = ssub.s32 1, %s11
  %s14 = scalar_select 0, %s13, %s11
  // Predicated region
  $region2: #{rkt_forward.7} parent=0 // pred_check
    _
  $region3: #{rkt_forward.7} parent=0 // pred_check_branch
    %16 = sbr.rel (0) target = $region5
  $region4: #{rkt_forward.7} parent=0 // pred_region
    _
  $region5: #{rkt_forward.7} parent=0 // pred_fallthru
    _
  // Predicated region
  $region6: #{rkt_forward.7} parent=0 // pred_check
    _
  $region7: #{rkt_forward.7} parent=0 // pred_check_branch
    %18 = sbr.rel (0) target = $region9
  $region8: #{rkt_forward.7} parent=0 // pred_region
    _
  $region9: #{rkt_forward.7} parent=0 // pred_fallthru
    _
  // Predicated region
  $region10: #{rkt_forward.7} parent=0 // pred_check
    _
  $region11: #{rkt_forward.7} parent=0 // pred_check_branch
    %20 = sbr.rel (0) target = $region13
  $region12: #{rkt_forward.7} parent=0 // pred_region
    _
  $region13: #{rkt_forward.7} parent=0 // pred_fallthru
    _
  // Predicated region
  $region14: #{rkt_forward.7} parent=0 // pred_check
    _
  $region15: #{rkt_forward.7} parent=0 // pred_check_branch
    %22 = sbr.rel (0) target = $region17
  $region16: #{rkt_forward.7} parent=0 // pred_region
    _
  $region17: #{rkt_forward.7} parent=0 // pred_fallthru
    _
  // Predicated region
  $region18: #{rkt_forward.7} parent=0 // pred_check
    _
  $region19: #{rkt_forward.7} parent=0 // pred_check_branch
    %24 = sbr.rel (0) target = $region21
  $region20: #{rkt_forward.7} parent=0 // pred_region
    _
  $region21: #{rkt_forward.7} parent=0 // pred_fallthru
    _
  // Predicated region
  $region22: #{rkt_forward.7} parent=0 // pred_check
    _
  $region23: #{rkt_forward.7} parent=0 // pred_check_branch
    %26 = sbr.rel (0) target = $region25
  $region24: #{rkt_forward.7} parent=0 // pred_region
    _
  $region25: #{rkt_forward.7} parent=0 // pred_fallthru
    _
  // Predicated region
  $region26: #{rkt_forward.7} parent=0 // pred_check
    _
  $region27: #{rkt_forward.7} parent=0 // pred_check_branch
    %28 = sbr.rel (0) target = $region29
  $region28: #{rkt_forward.7} parent=0 // pred_region
    _
  $region29: #{rkt_forward.7} parent=0 // pred_fallthru
    _
  // Predicated region
  $region30: #{rkt_forward.7} parent=0 // pred_check
    _
  $region31: #{rkt_forward.7} parent=0 // pred_check_branch
    %30 = sbr.rel (0) target = $region33
  $region32: #{rkt_forward.7} parent=0 // pred_region
    _
  $region33: #{rkt_forward.7} parent=0 // pred_fallthru
    _
  // Predicated region
  $region34: #{rkt_forward.7} parent=0 // pred_check
    _
  $region35: #{rkt_forward.7} parent=0 // pred_check_branch
    %32 = sbr.rel (0) target = $region37
  $region36: #{rkt_forward.7} parent=0 // pred_region
    _
  $region37: #{rkt_forward.7} parent=0 // pred_fallthru
    _
  // Predicated region
  $region38: #{rkt_forward.7} parent=0 // pred_check
    _
  $region39: #{rkt_forward.7} parent=0 // pred_check_branch
    %34 = sbr.rel (0) target = $region41
  $region40: #{rkt_forward.7} parent=0 // pred_region
    _
  $region41: #{rkt_forward.7} parent=0 // pred_fallthru
    _
  %v36 = vld [vmem:[%s0] sm:$0xff]
  %v37 = vld [vmem:[%s0 + $0x8] sm:$0xff]
  %v38 = vld [vmem:[%s1] sm:$0xff]
  %v39 = vld [vmem:[%s1 + $0x8] sm:$0xff]
  %v40 = vadd.f32 %v36, %v38
  %v41 = vadd.f32 %v37, %v39
  %vm42 = vcmask 261120
  %v43 = vsel %vm42, %v40, 0.0
  %44 = vadd.xlane.f32.xlu0 %v43
  %v45 = vpop.xlane.xlu0 %44
  %v46 = vsel %vm42, %v41, 0.0
  %47 = vadd.xlane.f32.xlu0 %v46
  %v48 = vpop.xlane.xlu0 %47
  %v49 = vrcp.pop 32.0
  %v50 = vmul.f32 32.0, %v49
  %v51 = vsub.f32 1.0, %v50
  %v52 = vmul.f32 %v49, %v51
  %v53 = vadd.f32 %v49, %v52
  %vm54 = vweird.f32 %v49
  %v55 = vsel %vm54, %v49, %v53
  %v56 = vmul.f32 %v45, %v55
  %v57 = vmul.f32 %v48, %v55
  %v58 = vsub.f32 %v40, %v56
  %v59 = vsub.f32 %v41, %v57
  %v60 = vmul.f32 %v58, %v58
  %v61 = vmul.f32 %v59, %v59
  %v62 = vsel %vm42, %v60, 0.0
  %63 = vadd.xlane.f32.xlu0 %v62
  %v64 = vpop.xlane.xlu0 %63
  %v65 = vsel %vm42, %v61, 0.0
  %66 = vadd.xlane.f32.xlu0 %v65
  %v67 = vpop.xlane.xlu0 %66
  %v68 = vmul.f32 %v64, %v55
  %v69 = vmul.f32 %v67, %v55
  %v70 = vadd.f32 %v68, 1e-05
  %v71 = vadd.f32 %v69, 1e-05
  %v72 = vrsqrt.pop %v70
  %v73 = vmul.f32 %v72, %v70
  %v74 = vmul.f32 %v73, %v72
  %v75 = vmul.f32 0.5, %v74
  %v76 = vsub.f32 1.5, %v75
  %v77 = vmul.f32 %v72, %v76
  %vm78 = vweird.f32 %v70
  %vm79 = vweird.f32 %v72
  %vm80 = vmor %vm78, %vm79
  %v81 = vsel %vm80, %v72, %v77
  %v82 = vrsqrt.pop %v71
  %v83 = vmul.f32 %v82, %v71
  %v84 = vmul.f32 %v83, %v82
  %v85 = vmul.f32 0.5, %v84
  %v86 = vsub.f32 1.5, %v85
  %v87 = vmul.f32 %v82, %v86
  %vm88 = vweird.f32 %v71
  %vm89 = vweird.f32 %v82
  %vm90 = vmor %vm88, %vm89
  %v91 = vsel %vm90, %v82, %v87
  %v92 = vmul.f32 %v58, %v81
  %v93 = vmul.f32 %v59, %v91
  %v94 = vld [vmem:[%s6] sm:$0x1]
  %v96 = vperm.slane %v94, 0
  %v98 = vmul.f32 %v92, %v96
  %v99 = vmul.f32 %v93, %v96
  %v100 = vld [vmem:[%s7] sm:$0x1]
  %v102 = vperm.slane %v100, 0
  %v104 = vadd.f32 %v98, %v102
  %v105 = vadd.f32 %v99, %v102
  %v106 = vpack.c.bf16 %v105, %v104
  %v107 = vld [vmem:[%s2] sm:$0xff]
  %v108 = vld [vmem:[%s2 + $0x8] sm:$0xff]
  %v109 = vld [vmem:[%s2 + $0x10] sm:$0xff]
  %v110 = vld [vmem:[%s2 + $0x18] sm:$0xff]
  %v111 = vpack.c.bf16 %v108, %v107
  %v112 = vpack.c.bf16 %v110, %v109
  %v113 = vld [vmem:[%s3] sm:$0x1]
  %v115 = vperm.slane %v113, 0
  %v118 = vsel %vm42, %v106, 0
  %120 = vmatpush.bf16.msra.mxu0 0
  %121 = vmatpush.bf16.msra.mxu0 0
  %122 = vmatpush.bf16.msra.mxu0 0
  %123 = vmatpush.bf16.msra.mxu0 0
  %124 = vmatpush.bf16.msra.mxu0 0
  %125 = vmatpush.bf16.msra.mxu0 0
  %126 = vmatpush.bf16.msra.mxu0 %v112
  %127 = vmatpush.bf16.msra.mxu0 %v111
  %128 = vmatmul.bf16.gmra.mxu0 %v118
  %v129 = vpop.f32.mrf.mxu0
  %v130 = vadd.f32 %v115, %v129
  %v131 = vpop.f32.mrf.mxu0
  %v132 = vadd.f32 %v115, %v131
  %133 = vdwg.mxu0
  %v134 = vmax.f32 %v130, 0.0
  %v135 = vmax.f32 %v132, 0.0
  %v136 = vpack.c.bf16 %v135, %v134
  %v137 = vld [vmem:[%s4] sm:$0xff]
  %v138 = vld [vmem:[%s4 + $0x8] sm:$0xff]
  %v139 = vld [vmem:[%s4 + $0x10] sm:$0xff]
  %v140 = vld [vmem:[%s4 + $0x18] sm:$0xff]
  %v141 = vpack.c.bf16 %v138, %v137
  %v142 = vpack.c.bf16 %v140, %v139
  %v143 = vld [vmem:[%s5] sm:$0x1]
  %v145 = vperm.slane %v143, 0
  %v148 = vsel %vm42, %v136, 0
  %150 = vmatpush.bf16.msra.mxu0 0
  %151 = vmatpush.bf16.msra.mxu0 0
  %152 = vmatpush.bf16.msra.mxu0 0
  %153 = vmatpush.bf16.msra.mxu0 0
  %154 = vmatpush.bf16.msra.mxu0 0
  %155 = vmatpush.bf16.msra.mxu0 0
  %156 = vmatpush.bf16.msra.mxu0 %v142
  %157 = vmatpush.bf16.msra.mxu0 %v141
  %158 = vmatmul.bf16.gmra.mxu0 %v148
  %v159 = vpop.f32.mrf.mxu0
  %v160 = vadd.f32 %v145, %v159
  %v161 = vpop.f32.mrf.mxu0
  %v162 = vadd.f32 %v145, %v161
  %163 = vdwg.mxu0
  %v164 = vadd.f32 %v160, %v104
  %v165 = vadd.f32 %v162, %v105
  %v166 = vsel %vm42, %v164, 0.0
  %167 = vadd.xlane.f32.xlu0 %v166
  %v168 = vpop.xlane.xlu0 %167
  %v169 = vsel %vm42, %v165, 0.0
  %170 = vadd.xlane.f32.xlu0 %v169
  %v171 = vpop.xlane.xlu0 %170
  %v172 = vmul.f32 %v168, %v55
  %v173 = vmul.f32 %v171, %v55
  %v174 = vsub.f32 %v164, %v172
  %v175 = vsub.f32 %v165, %v173
  %v176 = vmul.f32 %v174, %v174
  %v177 = vmul.f32 %v175, %v175
  %v178 = vsel %vm42, %v176, 0.0
  %179 = vadd.xlane.f32.xlu0 %v178
  %v180 = vpop.xlane.xlu0 %179
  %v181 = vsel %vm42, %v177, 0.0
  %182 = vadd.xlane.f32.xlu0 %v181
  %v183 = vpop.xlane.xlu0 %182
  %v184 = vmul.f32 %v180, %v55
  %v185 = vmul.f32 %v183, %v55
  %v186 = vadd.f32 %v184, 1e-05
  %v187 = vadd.f32 %v185, 1e-05
  %v188 = vrsqrt.pop %v186
  %v189 = vmul.f32 %v188, %v186
  %v190 = vmul.f32 %v189, %v188
  %v191 = vmul.f32 0.5, %v190
  %v192 = vsub.f32 1.5, %v191
  %v193 = vmul.f32 %v188, %v192
  %vm194 = vweird.f32 %v186
  %vm195 = vweird.f32 %v188
  %vm196 = vmor %vm194, %vm195
  %v197 = vsel %vm196, %v188, %v193
  %v198 = vrsqrt.pop %v187
  %v199 = vmul.f32 %v198, %v187
  %v200 = vmul.f32 %v199, %v198
  %v201 = vmul.f32 0.5, %v200
  %v202 = vsub.f32 1.5, %v201
  %v203 = vmul.f32 %v198, %v202
  %vm204 = vweird.f32 %v187
  %vm205 = vweird.f32 %v198
  %vm206 = vmor %vm204, %vm205
  %v207 = vsel %vm206, %v198, %v203
  %v208 = vmul.f32 %v174, %v197
  %v209 = vmul.f32 %v175, %v207
  %v210 = vld [vmem:[%s8] sm:$0x1]
  %v212 = vperm.slane %v210, 0
  %v214 = vmul.f32 %v208, %v212
  %v215 = vmul.f32 %v209, %v212
  %v216 = vld [vmem:[%s9] sm:$0x1]
  %v218 = vperm.slane %v216, 0
  %v220 = vadd.f32 %v214, %v218
  %v221 = vadd.f32 %v215, %v218
  %222 = vst.msk [vmem:[%s10] sm:$0xff] %vm42, %v220
  %223 = vst.msk [vmem:[%s10 + $0x8] sm:$0xff] %vm42, %v221
  // Predicated region
  $region42: #{rkt_forward.7} parent=0 // pred_check
    _
  $region43: #{rkt_forward.7} parent=0 // pred_check_branch
    %225 = sbr.rel (0) target = $region45
  $region44: #{rkt_forward.7} parent=0 // pred_region
    _
  $region45: #{rkt_forward.7} parent=0 // pred_fallthru
    _
  // Predicated region
  $region46: #{rkt_forward.7} parent=0 // pred_check
    _
  $region47: #{rkt_forward.7} parent=0 // pred_check_branch
    %227 = sbr.rel (0) target = $region49
  $region48: #{rkt_forward.7} parent=0 // pred_region
    _
  $region49: #{rkt_forward.7} parent=0 // pred_fallthru
    _

// kernel: rkt_forward.8
$region0: #{rkt_forward.8}
  #allocation0 [shape = 'u32[]', space=smem, size = 0x4, offset = 0x4, fixed_abs, tag = 'smem constant byte address 0x4 - core index']
  #allocation1 [shape = 'u32[72,128]{1,0:T(1,128)}', space=vmem, size = 0x9000, scoped, tag = 'internal scratch']
  #allocation2 [shape = 'bf16[8,64]{1,0:T(8,128)(2,1)}', space=vmem, size = 0x800, scoped, tag = 'scratch operand']
  #allocation3 [shape = 'bf16[8,32]{1,0:T(8,128)(2,1)}', space=vmem, size = 0x800, scoped, tag = 'scratch operand']
  #allocation4 [shape = 'f32[1]{0:T(128)S(6)}', space=smem, size = 0x200, scoped, tag = 'scoped memory for rkt_forward.8']
  %s0 = inlined_call_operand.<no memory space> [shape: f32[1], index: 0, kind: input, shape index: {}]
  %s1 = inlined_call_operand.vmem [shape: f32[2,8,32], index: 1, kind: input, shape index: {}]
  %s2 = inlined_call_operand.vmem [shape: f32[2,8,32], index: 2, kind: input, shape index: {}]
  %s3 = inlined_call_operand.vmem [shape: bf16[2,8,8], index: 3, kind: input, shape index: {}]
  %s4 = inlined_call_operand.vmem [shape: f32[2,8,1], index: 4, kind: input, shape index: {}]
  %s5 = inlined_call_operand.vmem [shape: f32[2,1,8], index: 5, kind: input, shape index: {}]
  %s6 = inlined_call_operand.vmem [shape: f32[32,32], index: 6, kind: input, shape index: {}]
  %s7 = inlined_call_operand.vmem [shape: f32[1,32], index: 7, kind: input, shape index: {}]
  %s8 = inlined_call_operand.vmem [shape: f32[32,64], index: 8, kind: input, shape index: {}]
  %s9 = inlined_call_operand.vmem [shape: f32[1,64], index: 9, kind: input, shape index: {}]
  %s10 = inlined_call_operand.hbm [shape: f32[2,8,32], index: 10, kind: output, shape index: {0}]
  %s11 = inlined_call_operand.hbm [shape: f32[2,4,8,8], index: 11, kind: output, shape index: {1}]
  %12 = xla_tuple %s10, %s11
  %s13 = sld [smem:[#allocation0]]
  $region85: #{rkt_forward.8} parent=0
    _
  %s15 = ssub.s32 1, %s13
  %s16 = scalar_select 0, %s15, %s13
  %17 = sst [smem:[#allocation4]] %s0
  $region1: #{rkt_forward.8} parent=0
    #allocation5 [shape = 'u8[8192]{0}', space=vmem, size = 0x2000, scoped, tag = 'output window, operand 0']
    #allocation6 [shape = 's32[2]{0}', space=sflag, size = 0x8, scoped, tag = 'scoped memory for rkt_forward.8']
    #allocation7 [shape = 'u8[32768]{0}', space=vmem, size = 0x8000, scoped, tag = 'output window, operand 1']
    #allocation8 [shape = 's32[2]{0}', space=sflag, size = 0x8, scoped, tag = 'scoped memory for rkt_forward.8']
    %18 = vsyncpa [#allocation6], 0
    %s19 = scalar_lea.sflag [#allocation6], 1
    %20 = vsyncpa %s19, 0
    %21 = vsyncpa [#allocation8], 0
    %s22 = scalar_lea.sflag [#allocation8], 1
    %23 = vsyncpa %s22, 0
    loop: start=0, step=1, limit=4
    $region2: #{rkt_forward.8} parent=1 // loop_pre_header
      _
    $region3: #{rkt_forward.8} parent=1 // loop_header
      %s25 = sphi 0, %s29
      %p26 = scmp.ge.s32.totalorder %s25, 4
      %s32 = sphi 0, %s44
      %s33 = sphi 0, %s40
      %s34 = sphi 0, %s32
      %s35 = sphi 0, %s33
      %s36 = sphi 0, %s34
      %s37 = sphi 0, %s35
      %s45 = sphi 0, %s45
      %s47 = sphi 0, %s45
      %s48 = sphi 0, %s47
      %s62 = sphi 0, %s48
      %s70 = sphi 0, %s72
      %s73 = sphi 0, %s70
      %s74 = sphi 0, %s73
      %s90 = sphi 0, %s74
      %s96 = sphi 0, %s98
      %s99 = sphi 0, %s96
      %s100 = sphi 0, %s99
      %s116 = sphi 0, %s100
      %s124 = sphi 0, %s126
      %s127 = sphi 0, %s124
      %s128 = sphi 0, %s127
      %s144 = sphi 0, %s128
      %s152 = sphi 0, %s154
      %s155 = sphi 0, %s152
      %s156 = sphi 0, %s155
      %s172 = sphi 0, %s156
      %s178 = sphi 0, %s180
      %s181 = sphi 0, %s178
      %s182 = sphi 0, %s181
      %s198 = sphi 0, %s182
      %s202 = sphi 0, %s202
      %s204 = sphi 0, %s202
      %s205 = sphi 0, %s204
      %s219 = sphi 0, %s205
      %s223 = sphi 0, %s223
      %s225 = sphi 0, %s223
      %s226 = sphi 0, %s225
      %s240 = sphi 0, %s226
      %s244 = sphi 0, %s244
      %s246 = sphi 0, %s244
      %s247 = sphi 0, %s246
      %s261 = sphi 0, %s247
      %s265 = sphi 0, %s265
      %s267 = sphi 0, %s265
      %s268 = sphi 0, %s267
      %s282 = sphi 0, %s268
      %s290 = sphi 0, %s292
      %s293 = sphi 0, %s290
      %s294 = sphi 0, %s293
      %s310 = sphi 0, %s294
      %s318 = sphi 0, %s320
      %s321 = sphi 0, %s318
      %s322 = sphi 0, %s321
      %s338 = sphi 0, %s322
    $region4: #{rkt_forward.8} parent=1 // loop_header_branch
      %28 = sbr.rel (%p26) target = $region8
    $region5: #{rkt_forward.8} parent=1 // loop_body
      %s30 = ssub.s32 %s25, 1
      %s31 = ssub.s32 %s25, 2
      %s38 = sadd.s32 1, %s33
      %p39 = scmp.ge.s32.totalorder %s38, 1
      %s40 = scalar_select %p39, 0, %s38
      %s41 = sadd.s32 1, %s32
      %s42 = scalar_select %p39, %s41, %s32
      %p43 = scmp.ge.s32.totalorder %s42, 2
      %s44 = scalar_select %p43, 0, %s42
      %s46 = sadd.s32 %s45, 1
      %p49 = scmp.eq.s32.totalorder %s25, 1
      %p50 = scmp.ne.s32.totalorder %s45, %s47
      %p51 = scmp.eq.s32.totalorder %s25, 0
      %p52 = por %p50, %p51
      %p53 = scmp.ne.s32.totalorder %s45, %s47
      %p54 = scmp.eq.s32.totalorder %s30, 1
      %p55 = por %p53, %p54
      %p56 = scmp.ne.s32.totalorder %s47, %s48
      %p57 = scmp.eq.s32.totalorder %s30, 0
      %p58 = por %p56, %p57
      %p59 = scmp.ne.s32.totalorder %s47, %s48
      %p60 = scmp.eq.s32.totalorder %s31, 1
      %p61 = por %p59, %p60
      %p63 = scmp.ne.s32.totalorder %s48, %s62
      %p64 = scmp.eq.s32.totalorder %s31, 0
      %p65 = por %p63, %p64
      %s66 = ssub.s32 %s32, %s44
      %s67 = ssub.s32 %s33, %s40
      %s68 = sor.u32 %s66, %s67
      %p69 = scmp.eq.s32.totalorder %s68, 0
      %s71 = sadd.s32 %s70, 1
      %s72 = scalar_select %p69, %s70, %s71
      %p75 = pneg %p69
      %p76 = scmp.eq.s32.totalorder %s25, 1
      %p77 = por %p75, %p76
      %p78 = scmp.ne.s32.totalorder %s70, %s73
      %p79 = scmp.eq.s32.totalorder %s25, 0
      %p80 = por %p78, %p79
      %p81 = scmp.ne.s32.totalorder %s70, %s73
      %p82 = scmp.eq.s32.totalorder %s30, 1
      %p83 = por %p81, %p82
      %p84 = scmp.ne.s32.totalorder %s73, %s74
      %p85 = scmp.eq.s32.totalorder %s30, 0
      %p86 = por %p84, %p85
      %p87 = scmp.ne.s32.totalorder %s73, %s74
      %p88 = scmp.eq.s32.totalorder %s31, 1
      %p89 = por %p87, %p88
      %p91 = scmp.ne.s32.totalorder %s74, %s90
      %p92 = scmp.eq.s32.totalorder %s31, 0
      %p93 = por %p91, %p92
      %s94 = ssub.s32 %s32, %s44
      %p95 = scmp.eq.s32.totalorder %s94, 0
      %s97 = sadd.s32 %s96, 1
      %s98 = scalar_select %p95, %s96, %s97
      %p101 = pneg %p95
      %p102 = scmp.eq.s32.totalorder %s25, 1
      %p103 = por %p101, %p102
      %p104 = scmp.ne.s32.totalorder %s96, %s99
      %p105 = scmp.eq.s32.totalorder %s25, 0
      %p106 = por %p104, %p105
      %p107 = scmp.ne.s32.totalorder %s96, %s99
      %p108 = scmp.eq.s32.totalorder %s30, 1
      %p109 = por %p107, %p108
      %p110 = scmp.ne.s32.totalorder %s99, %s100
      %p111 = scmp.eq.s32.totalorder %s30, 0
      %p112 = por %p110, %p111
      %p113 = scmp.ne.s32.totalorder %s99, %s100
      %p114 = scmp.eq.s32.totalorder %s31, 1
      %p115 = por %p113, %p114
      %p117 = scmp.ne.s32.totalorder %s100, %s116
      %p118 = scmp.eq.s32.totalorder %s31, 0
      %p119 = por %p117, %p118
      %s120 = ssub.s32 %s32, %s44
      %s121 = ssub.s32 %s33, %s40
      %s122 = sor.u32 %s120, %s121
      %p123 = scmp.eq.s32.totalorder %s122, 0
      %s125 = sadd.s32 %s124, 1
      %s126 = scalar_select %p123, %s124, %s125
      %p129 = pneg %p123
      %p130 = scmp.eq.s32.totalorder %s25, 1
      %p131 = por %p129, %p130
      %p132 = scmp.ne.s32.totalorder %s124, %s127
      %p133 = scmp.eq.s32.totalorder %s25, 0
      %p134 = por %p132, %p133
      %p135 = scmp.ne.s32.totalorder %s124, %s127
      %p136 = scmp.eq.s32.totalorder %s30, 1
      %p137 = por %p135, %p136
      %p138 = scmp.ne.s32.totalorder %s127, %s128
      %p139 = scmp.eq.s32.totalorder %s30, 0
      %p140 = por %p138, %p139
      %p141 = scmp.ne.s32.totalorder %s127, %s128
      %p142 = scmp.eq.s32.totalorder %s31, 1
      %p143 = por %p141, %p142
      %p145 = scmp.ne.s32.totalorder %s128, %s144
      %p146 = scmp.eq.s32.totalorder %s31, 0
      %p147 = por %p145, %p146
      %s148 = ssub.s32 %s32, %s44
      %s149 = ssub.s32 %s33, %s40
      %s150 = sor.u32 %s148, %s149
      %p151 = scmp.eq.s32.totalorder %s150, 0
      %s153 = sadd.s32 %s152, 1
      %s154 = scalar_select %p151, %s152, %s153
      %p157 = pneg %p151
      %p158 = scmp.eq.s32.totalorder %s25, 1
      %p159 = por %p157, %p158
      %p160 = scmp.ne.s32.totalorder %s152, %s155
      %p161 = scmp.eq.s32.totalorder %s25, 0
      %p162 = por %p160, %p161
      %p163 = scmp.ne.s32.totalorder %s152, %s155
      %p164 = scmp.eq.s32.totalorder %s30, 1
      %p165 = por %p163, %p164
      %p166 = scmp.ne.s32.totalorder %s155, %s156
      %p167 = scmp.eq.s32.totalorder %s30, 0
      %p168 = por %p166, %p167
      %p169 = scmp.ne.s32.totalorder %s155, %s156
      %p170 = scmp.eq.s32.totalorder %s31, 1
      %p171 = por %p169, %p170
      %p173 = scmp.ne.s32.totalorder %s156, %s172
      %p174 = scmp.eq.s32.totalorder %s31, 0
      %p175 = por %p173, %p174
      %s176 = ssub.s32 %s32, %s44
      %p177 = scmp.eq.s32.totalorder %s176, 0
      %s179 = sadd.s32 %s178, 1
      %s180 = scalar_select %p177, %s178, %s179
      %p183 = pneg %p177
      %p184 = scmp.eq.s32.totalorder %s25, 1
      %p185 = por %p183, %p184
      %p186 = scmp.ne.s32.totalorder %s178, %s181
      %p187 = scmp.eq.s32.totalorder %s25, 0
      %p188 = por %p186, %p187
      %p189 = scmp.ne.s32.totalorder %s178, %s181
      %p190 = scmp.eq.s32.totalorder %s30, 1
      %p191 = por %p189, %p190
      %p192 = scmp.ne.s32.totalorder %s181, %s182
      %p193 = scmp.eq.s32.totalorder %s30, 0
      %p194 = por %p192, %p193
      %p195 = scmp.ne.s32.totalorder %s181, %s182
      %p196 = scmp.eq.s32.totalorder %s31, 1
      %p197 = por %p195, %p196
      %p199 = scmp.ne.s32.totalorder %s182, %s198
      %p200 = scmp.eq.s32.totalorder %s31, 0
      %p201 = por %p199, %p200
      %s203 = sadd.s32 %s202, 1
      %p206 = scmp.eq.s32.totalorder %s25, 1
      %p207 = scmp.ne.s32.totalorder %s202, %s204
      %p208 = scmp.eq.s32.totalorder %s25, 0
      %p209 = por %p207, %p208
      %p210 = scmp.ne.s32.totalorder %s202, %s204
      %p211 = scmp.eq.s32.totalorder %s30, 1
      %p212 = por %p210, %p211
      %p213 = scmp.ne.s32.totalorder %s204, %s205
      %p214 = scmp.eq.s32.totalorder %s30, 0
      %p215 = por %p213, %p214
      %p216 = scmp.ne.s32.totalorder %s204, %s205
      %p217 = scmp.eq.s32.totalorder %s31, 1
      %p218 = por %p216, %p217
      %p220 = scmp.ne.s32.totalorder %s205, %s219
      %p221 = scmp.eq.s32.totalorder %s31, 0
      %p222 = por %p220, %p221
      %s224 = sadd.s32 %s223, 1
      %p227 = scmp.eq.s32.totalorder %s25, 1
      %p228 = scmp.ne.s32.totalorder %s223, %s225
      %p229 = scmp.eq.s32.totalorder %s25, 0
      %p230 = por %p228, %p229
      %p231 = scmp.ne.s32.totalorder %s223, %s225
      %p232 = scmp.eq.s32.totalorder %s30, 1
      %p233 = por %p231, %p232
      %p234 = scmp.ne.s32.totalorder %s225, %s226
      %p235 = scmp.eq.s32.totalorder %s30, 0
      %p236 = por %p234, %p235
      %p237 = scmp.ne.s32.totalorder %s225, %s226
      %p238 = scmp.eq.s32.totalorder %s31, 1
      %p239 = por %p237, %p238
      %p241 = scmp.ne.s32.totalorder %s226, %s240
      %p242 = scmp.eq.s32.totalorder %s31, 0
      %p243 = por %p241, %p242
      %s245 = sadd.s32 %s244, 1
      %p248 = scmp.eq.s32.totalorder %s25, 1
      %p249 = scmp.ne.s32.totalorder %s244, %s246
      %p250 = scmp.eq.s32.totalorder %s25, 0
      %p251 = por %p249, %p250
      %p252 = scmp.ne.s32.totalorder %s244, %s246
      %p253 = scmp.eq.s32.totalorder %s30, 1
      %p254 = por %p252, %p253
      %p255 = scmp.ne.s32.totalorder %s246, %s247
      %p256 = scmp.eq.s32.totalorder %s30, 0
      %p257 = por %p255, %p256
      %p258 = scmp.ne.s32.totalorder %s246, %s247
      %p259 = scmp.eq.s32.totalorder %s31, 1
      %p260 = por %p258, %p259
      %p262 = scmp.ne.s32.totalorder %s247, %s261
      %p263 = scmp.eq.s32.totalorder %s31, 0
      %p264 = por %p262, %p263
      %s266 = sadd.s32 %s265, 1
      %p269 = scmp.eq.s32.totalorder %s25, 1
      %p270 = scmp.ne.s32.totalorder %s265, %s267
      %p271 = scmp.eq.s32.totalorder %s25, 0
      %p272 = por %p270, %p271
      %p273 = scmp.ne.s32.totalorder %s265, %s267
      %p274 = scmp.eq.s32.totalorder %s30, 1
      %p275 = por %p273, %p274
      %p276 = scmp.ne.s32.totalorder %s267, %s268
      %p277 = scmp.eq.s32.totalorder %s30, 0
      %p278 = por %p276, %p277
      %p279 = scmp.ne.s32.totalorder %s267, %s268
      %p280 = scmp.eq.s32.totalorder %s31, 1
      %p281 = por %p279, %p280
      %p283 = scmp.ne.s32.totalorder %s268, %s282
      %p284 = scmp.eq.s32.totalorder %s31, 0
      %p285 = por %p283, %p284
      %s286 = ssub.s32 %s32, %s44
      %s287 = ssub.s32 %s33, %s40
      %s288 = sor.u32 %s286, %s287
      %p289 = scmp.eq.s32.totalorder %s288, 0
      %s291 = sadd.s32 %s290, 1
      %s292 = scalar_select %p289, %s290, %s291
      %p295 = pneg %p289
      %p296 = scmp.eq.s32.totalorder %s25, 1
      %p297 = por %p295, %p296
      %p298 = scmp.ne.s32.totalorder %s290, %s293
      %p299 = scmp.eq.s32.totalorder %s25, 0
      %p300 = por %p298, %p299
      %p301 = scmp.ne.s32.totalorder %s290, %s293
      %p302 = scmp.eq.s32.totalorder %s30, 1
      %p303 = por %p301, %p302
      %p304 = scmp.ne.s32.totalorder %s293, %s294
      %p305 = scmp.eq.s32.totalorder %s30, 0
      %p306 = por %p304, %p305
      %p307 = scmp.ne.s32.totalorder %s293, %s294
      %p308 = scmp.eq.s32.totalorder %s31, 1
      %p309 = por %p307, %p308
      %p311 = scmp.ne.s32.totalorder %s294, %s310
      %p312 = scmp.eq.s32.totalorder %s31, 0
      %p313 = por %p311, %p312
      %s314 = ssub.s32 %s32, %s44
      %s315 = ssub.s32 %s33, %s40
      %s316 = sor.u32 %s314, %s315
      %p317 = scmp.eq.s32.totalorder %s316, 0
      %s319 = sadd.s32 %s318, 1
      %s320 = scalar_select %p317, %s318, %s319
      %p323 = pneg %p317
      %p324 = scmp.eq.s32.totalorder %s25, 1
      %p325 = por %p323, %p324
      %p326 = scmp.ne.s32.totalorder %s318, %s321
      %p327 = scmp.eq.s32.totalorder %s25, 0
      %p328 = por %p326, %p327
      %p329 = scmp.ne.s32.totalorder %s318, %s321
      %p330 = scmp.eq.s32.totalorder %s30, 1
      %p331 = por %p329, %p330
      %p332 = scmp.ne.s32.totalorder %s321, %s322
      %p333 = scmp.eq.s32.totalorder %s30, 0
      %p334 = por %p332, %p333
      %p335 = scmp.ne.s32.totalorder %s321, %s322
      %p336 = scmp.eq.s32.totalorder %s31, 1
      %p337 = por %p335, %p336
      %p339 = scmp.ne.s32.totalorder %s322, %s338
      %p340 = scmp.eq.s32.totalorder %s31, 0
      %p341 = por %p339, %p340
      %p342 = scmp.le.s32.totalorder 1, %s25
      %p343 = scmp.lt.s32.totalorder %s25, 3
      %p344 = pnand %p342, %p343
      %p345 = pneg %p344
      // Predicated region
      $region9: #{rkt_forward.8} parent=5 // pred_check
        _
      $region10: #{rkt_forward.8} parent=5 // pred_check_branch
        %347 = sbr.rel (%p344) target = $region12
      $region11: #{rkt_forward.8} parent=5 // pred_region
        %s348 = ssub.s32 %s25, 1
        // Predicated region
        $region13: #{rkt_forward.8} parent=11 // pred_check
          %p349 = pneg %p58
        $region14: #{rkt_forward.8} parent=11 // pred_check_branch
          %351 = sbr.rel (%p349) target = $region16
        $region15: #{rkt_forward.8} parent=11 // pred_region
          _
        $region16: #{rkt_forward.8} parent=11 // pred_fallthru
          _
        // Predicated region
        $region17: #{rkt_forward.8} parent=11 // pred_check
          %p352 = pneg %p215
        $region18: #{rkt_forward.8} parent=11 // pred_check_branch
          %354 = sbr.rel (%p352) target = $region20
        $region19: #{rkt_forward.8} parent=11 // pred_region
          _
        $region20: #{rkt_forward.8} parent=11 // pred_fallthru
          _
        // Predicated region
        $region21: #{rkt_forward.8} parent=11 // pred_check
          %p355 = pneg %p236
        $region22: #{rkt_forward.8} parent=11 // pred_check_branch
          %357 = sbr.rel (%p355) target = $region24
        $region23: #{rkt_forward.8} parent=11 // pred_region
          _
        $region24: #{rkt_forward.8} parent=11 // pred_fallthru
          _
        // Predicated region
        $region25: #{rkt_forward.8} parent=11 // pred_check
          %p358 = pneg %p257
        $region26: #{rkt_forward.8} parent=11 // pred_check_branch
          %360 = sbr.rel (%p358) target = $region28
        $region27: #{rkt_forward.8} parent=11 // pred_region
          _
        $region28: #{rkt_forward.8} parent=11 // pred_fallthru
          _
        // Predicated region
        $region29: #{rkt_forward.8} parent=11 // pred_check
          %p361 = pneg %p278
        $region30: #{rkt_forward.8} parent=11 // pred_check_branch
          %363 = sbr.rel (%p361) target = $region32
        $region31: #{rkt_forward.8} parent=11 // pred_region
          _
        $region32: #{rkt_forward.8} parent=11 // pred_fallthru
          _
      $region12: #{rkt_forward.8} parent=5 // pred_fallthru
        _
      %p364 = scmp.lt.s32.totalorder %s25, 2
      // Predicated region
      $region33: #{rkt_forward.8} parent=5 // pred_check
        %p365 = pneg %p364
      $region34: #{rkt_forward.8} parent=5 // pred_check_branch
        %367 = sbr.rel (%p365) target = $region36
      $region35: #{rkt_forward.8} parent=5 // pred_region
        // Predicated region
        $region37: #{rkt_forward.8} parent=35 // pred_check
          %p368 = pneg %p80
        $region38: #{rkt_forward.8} parent=35 // pred_check_branch
          %370 = sbr.rel (%p368) target = $region40
        $region39: #{rkt_forward.8} parent=35 // pred_region
          %p371 = scmp.lt.s32.totalorder %s32, 1
          %s372 = scalar_select %p371, %s32, 1
          %p373 = scmp.lt.s32.totalorder %s33, 0
          %s374 = scalar_select %p373, %s33, 0
          %s375 = sadd.s32 %s374, %s372
          %s376 = smul.addr %s375, 8
          %s377 = scalar_lea.vmem %s1, %s376
        $region40: #{rkt_forward.8} parent=35 // pred_fallthru
          _
        // Predicated region
        $region41: #{rkt_forward.8} parent=35 // pred_check
          %p378 = pneg %p106
        $region42: #{rkt_forward.8} parent=35 // pred_check_branch
          %380 = sbr.rel (%p378) target = $region44
        $region43: #{rkt_forward.8} parent=35 // pred_region
          %p381 = scmp.lt.s32.totalorder %s32, 1
          %s382 = scalar_select %p381, %s32, 1
          %s383 = smul.addr %s382, 8
          %s384 = scalar_lea.vmem %s2, %s383
        $region44: #{rkt_forward.8} parent=35 // pred_fallthru
          _
        // Predicated region
        $region45: #{rkt_forward.8} parent=35 // pred_check
          %p385 = pneg %p134
        $region46: #{rkt_forward.8} parent=35 // pred_check_branch
          %387 = sbr.rel (%p385) target = $region48
        $region47: #{rkt_forward.8} parent=35 // pred_region
          %p388 = scmp.lt.s32.totalorder %s32, 1
          %s389 = scalar_select %p388, %s32, 1
          %p390 = scmp.lt.s32.totalorder %s33, 0
          %s391 = scalar_select %p390, %s33, 0
          %s392 = sadd.s32 %s391, %s389
          %s393 = smul.addr %s392, 4
          %s394 = scalar_lea.vmem %s3, %s393
        $region48: #{rkt_forward.8} parent=35 // pred_fallthru
          _
        // Predicated region
        $region49: #{rkt_forward.8} parent=35 // pred_check
          %p395 = pneg %p162
        $region50: #{rkt_forward.8} parent=35 // pred_check_branch
          %397 = sbr.rel (%p395) target = $region52
        $region51: #{rkt_forward.8} parent=35 // pred_region
          %p398 = scmp.lt.s32.totalorder %s32, 1
          %s399 = scalar_select %p398, %s32, 1
          %p400 = scmp.lt.s32.totalorder %s33, 0
          %s401 = scalar_select %p400, %s33, 0
          %s402 = sadd.s32 %s401, %s399
          %s403 = smul.addr %s402, 8
          %s404 = scalar_lea.vmem %s4, %s403
        $region52: #{rkt_forward.8} parent=35 // pred_fallthru
          _
        // Predicated region
        $region53: #{rkt_forward.8} parent=35 // pred_check
          %p405 = pneg %p188
        $region54: #{rkt_forward.8} parent=35 // pred_check_branch
          %407 = sbr.rel (%p405) target = $region56
        $region55: #{rkt_forward.8} parent=35 // pred_region
          %p408 = scmp.lt.s32.totalorder %s32, 1
          %s409 = scalar_select %p408, %s32, 1
          %s410 = scalar_lea.vmem %s5, %s409
        $region56: #{rkt_forward.8} parent=35 // pred_fallthru
          _
      $region36: #{rkt_forward.8} parent=5 // pred_fallthru
        _
      %p411 = scmp.le.s32.totalorder 1, %s25
      %p412 = scmp.lt.s32.totalorder %s25, 3
      %p413 = pnand %p411, %p412
      %p414 = pneg %p413
      // Predicated region
      $region57: #{rkt_forward.8} parent=5 // pred_check
        _
      $region58: #{rkt_forward.8} parent=5 // pred_check_branch
        %416 = sbr.rel (%p413) target = $region60
      $region59: #{rkt_forward.8} parent=5 // pred_region
        %s417 = ssub.s32 %s25, 1
        %p418 = pneg %p58
        %p419 = pneg %p55
        %p420 = scmp.lt.s32.totalorder %s34, 1
        %s421 = scalar_select %p420, %s34, 1
        %p422 = scmp.lt.s32.totalorder %s35, 0
        %s423 = scalar_select %p422, %s35, 0
        %s424 = sadd.s32 %s423, %s421
        %s425 = smul.addr %s424, 8
        %s426 = scalar_lea.vmem %s1, %s425
        %p427 = pneg %p86
        %p428 = pneg %p83
        %p429 = scmp.lt.s32.totalorder %s34, 1
        %s430 = scalar_select %p429, %s34, 1
        %s431 = smul.addr %s430, 8
        %s432 = scalar_lea.vmem %s2, %s431
        %p433 = pneg %p112
        %p434 = pneg %p109
        %p435 = scmp.lt.s32.totalorder %s34, 1
        %s436 = scalar_select %p435, %s34, 1
        %p437 = scmp.lt.s32.totalorder %s35, 0
        %s438 = scalar_select %p437, %s35, 0
        %s439 = sadd.s32 %s438, %s436
        %s440 = smul.addr %s439, 4
        %s441 = scalar_lea.vmem %s3, %s440
        %p442 = pneg %p140
        %p443 = pneg %p137
        %p444 = scmp.lt.s32.totalorder %s34, 1
        %s445 = scalar_select %p444, %s34, 1
        %p446 = scmp.lt.s32.totalorder %s35, 0
        %s447 = scalar_select %p446, %s35, 0
        %s448 = sadd.s32 %s447, %s445
        %s449 = smul.addr %s448, 8
        %s450 = scalar_lea.vmem %s4, %s449
        %p451 = pneg %p168
        %p452 = pneg %p165
        %p453 = scmp.lt.s32.totalorder %s34, 1
        %s454 = scalar_select %p453, %s34, 1
        %s455 = scalar_lea.vmem %s5, %s454
        %p456 = pneg %p194
        %p457 = pneg %p191
        %p458 = pneg %p215
        %p459 = pneg %p212
        %p460 = pneg %p236
        %p461 = pneg %p233
        %p462 = pneg %p257
        %p463 = pneg %p254
        %p464 = pneg %p278
        %p465 = pneg %p275
        %p466 = pneg %p306
        %p467 = pneg %p303
        %s468 = sand.u32 %s293, 1
        %s469 = scalar_lea.sflag [#allocation6], %s468
        %s470 = sand.u32 %s293, 1
        %s471 = smul.addr %s470, 8
        %s472 = scalar_lea.vmem [#allocation5], %s471
        %p473 = pneg %p334
        %p474 = pneg %p331
        %s475 = sand.u32 %s321, 1
        %s476 = scalar_lea.sflag [#allocation8], %s475
        %s477 = sand.u32 %s321, 1
        %s478 = smul.addr %s477, 32
        %s479 = scalar_lea.vmem [#allocation7], %s478
        %p480 = scmp.lt.s32.totalorder %s34, 1
        %s481 = scalar_select %p480, %s34, 1
        %p482 = scmp.lt.s32.totalorder %s35, 0
        %s483 = scalar_select %p482, %s35, 0
        %s484 = sadd.s32 %s483, %s481
        %s485 = smul.addr %s484, 8
        %s486 = scalar_lea.vmem %s1, %s485
        %p487 = scmp.lt.s32.totalorder %s34, 1
        %s488 = scalar_select %p487, %s34, 1
        %s489 = smul.addr %s488, 8
        %s490 = scalar_lea.vmem %s2, %s489
        %p491 = scmp.lt.s32.totalorder %s34, 1
        %s492 = scalar_select %p491, %s34, 1
        %p493 = scmp.lt.s32.totalorder %s35, 0
        %s494 = scalar_select %p493, %s35, 0
        %s495 = sadd.s32 %s494, %s492
        %s496 = smul.addr %s495, 4
        %s497 = scalar_lea.vmem %s3, %s496
        %p498 = scmp.lt.s32.totalorder %s34, 1
        %s499 = scalar_select %p498, %s34, 1
        %p500 = scmp.lt.s32.totalorder %s35, 0
        %s501 = scalar_select %p500, %s35, 0
        %s502 = sadd.s32 %s501, %s499
        %s503 = smul.addr %s502, 8
        %s504 = scalar_lea.vmem %s4, %s503
        %p505 = scmp.lt.s32.totalorder %s34, 1
        %s506 = scalar_select %p505, %s34, 1
        %s507 = scalar_lea.vmem %s5, %s506
        %p509 = scmp.eq.s32.totalorder %s35, 0
        // Predicated region
        $region61: #{rkt_forward.8} parent=59 // pred_check
          %p510 = pneg %p509
        $region62: #{rkt_forward.8} parent=59 // pred_check_branch
          %512 = sbr.rel (%p510) target = $region64
        $region63: #{rkt_forward.8} parent=59 // pred_region
          %v513 = vld [vmem:[%s490] sm:$0xff]
          %v514 = vpack.c.bf16 %v513, %v513
          %v515 = vld [vmem:[%s8] sm:$0xff]
          %v516 = vld [vmem:[%s8 + $0x8] sm:$0xff]
          %v517 = vld [vmem:[%s8 + $0x10] sm:$0xff]
          %v518 = vld [vmem:[%s8 + $0x18] sm:$0xff]
          %v519 = vpack.c.bf16 %v516, %v515
          %v520 = vpack.c.bf16 %v518, %v517
          %v521 = vld [vmem:[%s9] sm:$0x1]
          %v523 = vperm.slane %v521, 0
          %vm525 = vcmask 261120
          %v527 = vsel %vm525, %v514, 0
          %529 = vmatpush.bf16.msra.mxu0 0
          %530 = vmatpush.bf16.msra.mxu0 0
          %531 = vmatpush.bf16.msra.mxu0 0
          %532 = vmatpush.bf16.msra.mxu0 0
          %533 = vmatpush.bf16.msra.mxu0 0
          %534 = vmatpush.bf16.msra.mxu0 0
          %535 = vmatpush.bf16.msra.mxu0 %v520
          %536 = vmatpush.bf16.msra.mxu0 %v519
          %537 = vmatmul.bf16.gmra.mxu0 %v527
          %v538 = vpop.f32.mrf.mxu0
          %v539 = vadd.f32 %v523, %v538
          %v540 = vpop.f32.mrf.mxu0
          %541 = vdwg.mxu0
          %v542 = vpack.c.bf16 %v539, %v539
          %vm543 = vcmask 519168
          %544 = vst.msk [vmem:[#allocation2] sm:$0xf] %vm543, %v542
        $region64: #{rkt_forward.8} parent=59 // pred_fallthru
          _
        %v545 = vld [vmem:[%s486] sm:$0xff]
        %v546 = vpack.c.bf16 %v545, %v545
        %v547 = vld [vmem:[%s6] sm:$0xff]
        %v548 = vld [vmem:[%s6 + $0x8] sm:$0xff]
        %v549 = vld [vmem:[%s6 + $0x10] sm:$0xff]
        %v550 = vld [vmem:[%s6 + $0x18] sm:$0xff]
        %v551 = vpack.c.bf16 %v548, %v547
        %v552 = vpack.c.bf16 %v550, %v549
        %v553 = vld [vmem:[%s7] sm:$0x1]
        %v555 = vperm.slane %v553, 0
        %vm557 = vcmask 261120
        %v559 = vsel %vm557, %v546, 0
        %561 = vmatpush.bf16.msra.mxu0 0
        %562 = vmatpush.bf16.msra.mxu0 0
        %563 = vmatpush.bf16.msra.mxu0 0
        %564 = vmatpush.bf16.msra.mxu0 0
        %565 = vmatpush.bf16.msra.mxu0 0
        %566 = vmatpush.bf16.msra.mxu0 0
        %567 = vmatpush.bf16.msra.mxu0 %v552
        %568 = vmatpush.bf16.msra.mxu0 %v551
        %569 = vmatmul.bf16.gmra.mxu0 %v559
        %v570 = vpop.f32.mrf.mxu0
        %v571 = vadd.f32 %v555, %v570
        %v572 = vpop.f32.mrf.mxu0
        %573 = vdwg.mxu0
        %v574 = vpack.c.bf16 %v571, %v571
        %vm575 = vcmask 257024
        %576 = vst.msk [vmem:[#allocation3] sm:$0xf] %vm575, %v574
        %s577 = sld [smem:[#allocation4]]
        %v578 = vstv %s577
        %v579 = vrcp.pop %v578
        %v580 = vmul.f32 %v578, %v579
        %v581 = vsub.f32 1.0, %v580
        %v582 = vmul.f32 %v579, %v581
        %v583 = vadd.f32 %v579, %v582
        %vm584 = vweird.f32 %v578
        %vm585 = vweird.f32 %v579
        %vm586 = vmor %vm584, %vm585
        %v587 = vsel %vm586, %v579, %v583
        %v588 = vand.u32 2147483647, %v578
        %vm589 = vcmp.eq.f32.partialorder %v588, 8.507059e+37
        %v590 = vand.u32 %v578, 2147483648
        %v591 = vor.u32 1.1754944e-38, %v590
        %v592 = vsel %vm589, %v591, %v587
        %s593 = vtos %v592
        %s594 = smul.u32 %s35, 8
        %v595 = vlaneseq
        %v596 = vshrl.u32 %v595, 7
        %v597 = vstv %s594
        %v598 = vadd.s32 %v597, %v596
        %v599 = vlaneseq
        %v600 = vand.u32 %v599, 127
        %vm601 = vcmp.ge.s32.totalorder %v600, %v598
        %v602 = vld [vmem:[%s497] sm:$0xf]
        %v603 = vunpack.c.l.bf16 %v602
        %v604 = vsel %vm601, 1, 0
        %v605 = vcvt.s32.f32 %v604
        %v606 = vmul.f32 %v603, %v605
        %vm607 = vcmp.eq.f32.partialorder %v606, 0.0
        %v608 = vsel %vm607, -100000.0, %v606
        %v609 = vld [vmem:[%s504] sm:$0xff]
        %v610 = vld [vmem:[%s507] sm:$0x1]
        %612 = vset.pattern.permute.xlu0 0
        %613 = vperm.xlu0 %612, %v609
        %v614 = vpop.permute.xlu0 %613
        %v617 = vperm.slane %v610, 0
        %v619 = vsub.f32 %v614, %v617
        %v620 = vand.u32 2147483647, %v619
        %v621 = vsub.f32 0.0, %v620
        %v622 = vstv %s593
        %v623 = vmul.f32 %v621, %v622
        %v624 = vmul.f32 %v623, 1.442695
        %v625 = vpow.pop %v624
        %v626 = vsel %vm601, -100000.0, %v625
        %v627 = vadd.f32 %v626, %v608
        %vm628 = vcmask 64512
        %v629 = vsel %vm628, %v627, -inf
        %630 = vmax.xlane.f32.xlu0 %v629
        %v631 = vpop.xlane.xlu0 %630
        %v632 = vsub.f32 %v627, %v631
        %v633 = vmul.f32 %v632, 1.442695
        %v634 = vpow.pop %v633
        %v635 = vsel %vm628, %v634, 0.0
        %636 = vadd.xlane.f32.xlu0 %v635
        %v637 = vpop.xlane.xlu0 %636
        %v638 = vrcp.pop %v637
        %v639 = vmul.f32 %v634, %v638
        %v640 = vmul.f32 %v639, 0.6
        %v641 = vld [vmem:[#allocation3] sm:$0xf]
        %v642 = vld [vmem:[#allocation2] sm:$0xf]
        %v644 = vsel %vm628, %v641, 0
        %v647 = vsel %vm628, %v642, 0
        %649 = vmatpush.bf16.xpose.msra.mxu0 0
        %650 = vmatpush.bf16.xpose.msra.mxu0 0
        %651 = vmatpush.bf16.xpose.msra.mxu0 0
        %652 = vmatpush.bf16.xpose.msra.mxu0 0
        %653 = vmatpush.bf16.xpose.msra.mxu0 0
        %654 = vmatpush.bf16.xpose.msra.mxu0 0
        %655 = vmatpush.bf16.xpose.msra.mxu0 0
        %656 = vmatpush.bf16.xpose.msra.mxu0 %v647
        %657 = vmatmul.bf16.gmra.mxu0 %v644
        %v658 = vpop.f32.mrf.mxu0
        %v659 = vadd.f32 0.0, %v658
        %v660 = vpop.f32.mrf.mxu0
        %661 = vdwg.mxu0
        %v662 = vmul.f32 %v659, 0.35355338
        %v663 = vsel %vm601, -1e+32, %v662
        %v664 = vsel %vm628, %v663, -inf
        %665 = vmax.xlane.f32.xlu0 %v664
        %v666 = vpop.xlane.xlu0 %665
        %v667 = vsub.f32 %v663, %v666
        %v668 = vmul.f32 %v667, 1.442695
        %v669 = vpow.pop %v668
        %v670 = vsel %vm628, %v669, 0.0
        %671 = vadd.xlane.f32.xlu0 %v670
        %v672 = vpop.xlane.xlu0 %671
        %v673 = vrcp.pop %v672
        %v674 = vmul.f32 %v669, %v673
        %v675 = vmul.f32 %v674, 0.4
        %v676 = vadd.f32 %v675, %v640
        %677 = vst.msk [vmem:[%s479] sm:$0xff] %vm628, %v676
        %v678 = vpack.c.bf16 %v676, %v676
        %v680 = vunpack.c.l.b16 %v642
        %v681 = vpack.c.b16 %v680, %v680
        %682 = vrot.lane.b32.xlu0 %v681, 96
        %v683 = vpop.permute.xlu0 %682
        %v685 = vsel %vm628, %v678, 0
        %vm687 = vcmask 1043456
        %v689 = vsel %vm687, %v683, 0
        %691 = vmatpush.bf16.msra.mxu0 0
        %692 = vmatpush.bf16.msra.mxu0 0
        %693 = vmatpush.bf16.msra.mxu0 0
        %694 = vmatpush.bf16.msra.mxu0 0
        %695 = vmatpush.bf16.msra.mxu0 0
        %696 = vmatpush.bf16.msra.mxu0 0
        %697 = vmatpush.bf16.msra.mxu0 0
        %698 = vmatpush.bf16.msra.mxu0 %v689
        %699 = vmatmul.bf16.gmra.mxu0 %v685
        %v700 = vpop.f32.mrf.mxu0
        %v701 = vadd.f32 0.0, %v700
        %v702 = vpop.f32.mrf.mxu0
        %703 = vdwg.mxu0
        %704 = vst.msk [vmem:[%s472] sm:$0xff] %vm628, %v701
        %v705 = vld [vmem:[#allocation3] sm:$0xf]
        %v706 = vld [vmem:[#allocation2] sm:$0xf]
        %v708 = vunpack.c.l.b16 %v705
        %v709 = vpack.c.b16 %v708, %v708
        %710 = vrot.lane.b32.xlu0 %v709, 120
        %v711 = vpop.permute.xlu0 %710
        %v713 = vunpack.c.l.b16 %v706
        %v714 = vpack.c.b16 %v713, %v713
        %715 = vrot.lane.b32.xlu0 %v714, 120
        %v716 = vpop.permute.xlu0 %715
        %v718 = vsel %vm628, %v711, 0
        %v721 = vsel %vm628, %v716, 0
        %723 = vmatpush.bf16.xpose.msra.mxu0 0
        %724 = vmatpush.bf16.xpose.msra.mxu0 0
        %725 = vmatpush.bf16.xpose.msra.mxu0 0
        %726 = vmatpush.bf16.xpose.msra.mxu0 0
        %727 = vmatpush.bf16.xpose.msra.mxu0 0
        %728 = vmatpush.bf16.xpose.msra.mxu0 0
        %729 = vmatpush.bf16.xpose.msra.mxu0 0
        %730 = vmatpush.bf16.xpose.msra.mxu0 %v721
        %731 = vmatmul.bf16.gmra.mxu0 %v718
        %v732 = vpop.f32.mrf.mxu0
        %v733 = vadd.f32 0.0, %v732
        %v734 = vpop.f32.mrf.mxu0
        %735 = vdwg.mxu0
        %v736 = vmul.f32 %v733, 0.35355338
        %v737 = vsel %vm601, -1e+32, %v736
        %v738 = vsel %vm628, %v737, -inf
        %739 = vmax.xlane.f32.xlu0 %v738
        %v740 = vpop.xlane.xlu0 %739
        %v741 = vsub.f32 %v737, %v740
        %v742 = vmul.f32 %v741, 1.442695
        %v743 = vpow.pop %v742
        %v744 = vsel %vm628, %v743, 0.0
        %745 = vadd.xlane.f32.xlu0 %v744
        %v746 = vpop.xlane.xlu0 %745
        %v747 = vrcp.pop %v746
        %v748 = vmul.f32 %v743, %v747
        %v749 = vmul.f32 %v748, 0.4
        %v750 = vadd.f32 %v749, %v640
        %s751 = scalar_lea.vmem %s479, 8 [#allocation7]
        %752 = vst.msk [vmem:[%s751] sm:$0xff] %vm628, %v750
        %v753 = vpack.c.bf16 %v750, %v750
        %754 = vrot.lane.b32.xlu0 %v714, 88
        %v755 = vpop.permute.xlu0 %754
        %v757 = vsel %vm628, %v753, 0
        %v760 = vsel %vm687, %v755, 0
        %762 = vmatpush.bf16.msra.mxu0 0
        %763 = vmatpush.bf16.msra.mxu0 0
        %764 = vmatpush.bf16.msra.mxu0 0
        %765 = vmatpush.bf16.msra.mxu0 0
        %766 = vmatpush.bf16.msra.mxu0 0
        %767 = vmatpush.bf16.msra.mxu0 0
        %768 = vmatpush.bf16.msra.mxu0 0
        %769 = vmatpush.bf16.msra.mxu0 %v760
        %770 = vmatmul.bf16.gmra.mxu0 %v757
        %v771 = vpop.f32.mrf.mxu0
        %v772 = vadd.f32 0.0, %v771
        %v773 = vpop.f32.mrf.mxu0
        %774 = vdwg.mxu0
        %776 = vrot.lane.b32.xlu0 %v772, 8
        %v777 = vpop.permute.xlu0 %776
        %vm779 = vcmask 130112
        %780 = vst.msk [vmem:[%s472] sm:$0xff] %vm779, %v777
        %v781 = vld [vmem:[#allocation3] sm:$0xf]
        %v782 = vld [vmem:[#allocation2] sm:$0xf]
        %v784 = vunpack.c.l.b16 %v781
        %v785 = vpack.c.b16 %v784, %v784
        %786 = vrot.lane.b32.xlu0 %v785, 112
        %v787 = vpop.permute.xlu0 %786
        %v789 = vunpack.c.l.b16 %v782
        %v790 = vpack.c.b16 %v789, %v789
        %791 = vrot.lane.b32.xlu0 %v790, 112
        %v792 = vpop.permute.xlu0 %791
        %v794 = vsel %vm628, %v787, 0
        %v797 = vsel %vm628, %v792, 0
        %799 = vmatpush.bf16.xpose.msra.mxu0 0
        %800 = vmatpush.bf16.xpose.msra.mxu0 0
        %801 = vmatpush.bf16.xpose.msra.mxu0 0
        %802 = vmatpush.bf16.xpose.msra.mxu0 0
        %803 = vmatpush.bf16.xpose.msra.mxu0 0
        %804 = vmatpush.bf16.xpose.msra.mxu0 0
        %805 = vmatpush.bf16.xpose.msra.mxu0 0
        %806 = vmatpush.bf16.xpose.msra.mxu0 %v797
        %807 = vmatmul.bf16.gmra.mxu0 %v794
        %v808 = vpop.f32.mrf.mxu0
        %v809 = vadd.f32 0.0, %v808
        %v810 = vpop.f32.mrf.mxu0
        %811 = vdwg.mxu0
        %v812 = vmul.f32 %v809, 0.35355338
        %v813 = vsel %vm601, -1e+32, %v812
        %v814 = vsel %vm628, %v813, -inf
        %815 = vmax.xlane.f32.xlu0 %v814
        %v816 = vpop.xlane.xlu0 %815
        %v817 = vsub.f32 %v813, %v816
        %v818 = vmul.f32 %v817, 1.442695
        %v819 = vpow.pop %v818
        %v820 = vsel %vm628, %v819, 0.0
        %821 = vadd.xlane.f32.xlu0 %v820
        %v822 = vpop.xlane.xlu0 %821
        %v823 = vrcp.pop %v822
        %v824 = vmul.f32 %v819, %v823
        %v825 = vmul.f32 %v824, 0.4
        %v826 = vadd.f32 %v825, %v640
        %s827 = scalar_lea.vmem %s479, 16 [#allocation7]
        %828 = vst.msk [vmem:[%s827] sm:$0xff] %vm628, %v826
        %v829 = vpack.c.bf16 %v826, %v826
        %830 = vrot.lane.b32.xlu0 %v790, 80
        %v831 = vpop.permute.xlu0 %830
        %v833 = vsel %vm628, %v829, 0
        %v836 = vsel %vm687, %v831, 0
        %838 = vmatpush.bf16.msra.mxu0 0
        %839 = vmatpush.bf16.msra.mxu0 0
        %840 = vmatpush.bf16.msra.mxu0 0
        %841 = vmatpush.bf16.msra.mxu0 0
        %842 = vmatpush.bf16.msra.mxu0 0
        %843 = vmatpush.bf16.msra.mxu0 0
        %844 = vmatpush.bf16.msra.mxu0 0
        %845 = vmatpush.bf16.msra.mxu0 %v836
        %846 = vmatmul.bf16.gmra.mxu0 %v833
        %v847 = vpop.f32.mrf.mxu0
        %v848 = vadd.f32 0.0, %v847
        %v849 = vpop.f32.mrf.mxu0
        %850 = vdwg.mxu0
        %852 = vrot.lane.b32.xlu0 %v848, 16
        %v853 = vpop.permute.xlu0 %852
        %vm855 = vcmask 195712
        %856 = vst.msk [vmem:[%s472] sm:$0xff] %vm855, %v853
        %v857 = vld [vmem:[#allocation3] sm:$0xf]
        %v858 = vld [vmem:[#allocation2] sm:$0xf]
        %v860 = vunpack.c.l.b16 %v857
        %v861 = vpack.c.b16 %v860, %v860
        %862 = vrot.lane.b32.xlu0 %v861, 104
        %v863 = vpop.permute.xlu0 %862
        %v865 = vunpack.c.l.b16 %v858
        %v866 = vpack.c.b16 %v865, %v865
        %867 = vrot.lane.b32.xlu0 %v866, 104
        %v868 = vpop.permute.xlu0 %867
        %v870 = vsel %vm628, %v863, 0
        %v873 = vsel %vm628, %v868, 0
        %875 = vmatpush.bf16.xpose.msra.mxu0 0
        %876 = vmatpush.bf16.xpose.msra.mxu0 0
        %877 = vmatpush.bf16.xpose.msra.mxu0 0
        %878 = vmatpush.bf16.xpose.msra.mxu0 0
        %879 = vmatpush.bf16.xpose.msra.mxu0 0
        %880 = vmatpush.bf16.xpose.msra.mxu0 0
        %881 = vmatpush.bf16.xpose.msra.mxu0 0
        %882 = vmatpush.bf16.xpose.msra.mxu0 %v873
        %883 = vmatmul.bf16.gmra.mxu0 %v870
        %v884 = vpop.f32.mrf.mxu0
        %v885 = vadd.f32 0.0, %v884
        %v886 = vpop.f32.mrf.mxu0
        %887 = vdwg.mxu0
        %v888 = vmul.f32 %v885, 0.35355338
        %v889 = vsel %vm601, -1e+32, %v888
        %v890 = vsel %vm628, %v889, -inf
        %891 = vmax.xlane.f32.xlu0 %v890
        %v892 = vpop.xlane.xlu0 %891
        %v893 = vsub.f32 %v889, %v892
        %v894 = vmul.f32 %v893, 1.442695
        %v895 = vpow.pop %v894
        %v896 = vsel %vm628, %v895, 0.0
        %897 = vadd.xlane.f32.xlu0 %v896
        %v898 = vpop.xlane.xlu0 %897
        %v899 = vrcp.pop %v898
        %v900 = vmul.f32 %v895, %v899
        %v901 = vmul.f32 %v900, 0.4
        %v902 = vadd.f32 %v901, %v640
        %s903 = scalar_lea.vmem %s479, 24 [#allocation7]
        %904 = vst.msk [vmem:[%s903] sm:$0xff] %vm628, %v902
        %v905 = vpack.c.bf16 %v902, %v902
        %906 = vrot.lane.b32.xlu0 %v866, 72
        %v907 = vpop.permute.xlu0 %906
        %v909 = vsel %vm628, %v905, 0
        %v912 = vsel %vm687, %v907, 0
        %914 = vmatpush.bf16.msra.mxu0 0
        %915 = vmatpush.bf16.msra.mxu0 0
        %916 = vmatpush.bf16.msra.mxu0 0
        %917 = vmatpush.bf16.msra.mxu0 0
        %918 = vmatpush.bf16.msra.mxu0 0
        %919 = vmatpush.bf16.msra.mxu0 0
        %920 = vmatpush.bf16.msra.mxu0 0
        %921 = vmatpush.bf16.msra.mxu0 %v912
        %922 = vmatmul.bf16.gmra.mxu0 %v909
        %v923 = vpop.f32.mrf.mxu0
        %v924 = vadd.f32 0.0, %v923
        %v925 = vpop.f32.mrf.mxu0
        %926 = vdwg.mxu0
        %928 = vrot.lane.b32.xlu0 %v924, 24
        %v929 = vpop.permute.xlu0 %928
        %vm931 = vcmask 261312
        %932 = vst.msk [vmem:[%s472] sm:$0xff] %vm931, %v929
        %s933 = sand.u32 %s293, 1
        %s934 = scalar_lea.sflag [#allocation6], %s933
        %s935 = sand.u32 %s293, 1
        %s936 = smul.addr %s935, 8
        %s937 = scalar_lea.vmem [#allocation5], %s936
        %s938 = sand.u32 %s321, 1
        %s939 = scalar_lea.sflag [#allocation8], %s938
        %s940 = sand.u32 %s321, 1
        %s941 = smul.addr %s940, 32
        %s942 = scalar_lea.vmem [#allocation7], %s941
        // Predicated region
        $region65: #{rkt_forward.8} parent=59 // pred_check
          %p943 = pneg %p303
        $region66: #{rkt_forward.8} parent=59 // pred_check_branch
          %945 = sbr.rel (%p943) target = $region68
        $region67: #{rkt_forward.8} parent=59 // pred_region
          %947 = vsyncadd %s934, 0
          %s948 = sadd.s32 %s35, %s34
          %s949 = smul.addr %s948, 8
          %s950 = scalar_lea.hbm %s10, %s949
          %s952 = sshll.u32 %s937, 4
          %s953 = int_to_ptr.vmem [resolvable:$true] %s952
          %s954 = sshll.u32 %s950, 4
          %s955 = int_to_ptr.hbm [resolvable:$true] %s954
          %957 = dma.vmem_to_hbm [thread:$0]  %s953, 128, %s955, %s934
        $region68: #{rkt_forward.8} parent=59 // pred_fallthru
          _
        // Predicated region
        $region69: #{rkt_forward.8} parent=59 // pred_check
          %p958 = pneg %p331
        $region70: #{rkt_forward.8} parent=59 // pred_check_branch
          %960 = sbr.rel (%p958) target = $region72
        $region71: #{rkt_forward.8} parent=59 // pred_region
          %962 = vsyncadd %s939, 0
          %s963 = smul.addr %s34, 4
          %s964 = sadd.s32 %s35, %s963
          %s965 = smul.addr %s964, 8
          %s966 = scalar_lea.hbm %s11, %s965
          %s967 = sshll.u32 %s942, 4
          %s968 = int_to_ptr.vmem [resolvable:$true] %s967
          %s969 = sshll.u32 %s966, 4
          %s970 = int_to_ptr.hbm [resolvable:$true] %s969
          %975 = dma.vmem_to_hbm [thread:$0]  %s968, 512, %s970, %s939, 128, 128, 8
        $region72: #{rkt_forward.8} parent=59 // pred_fallthru
          _
      $region60: #{rkt_forward.8} parent=5 // pred_fallthru
        _
      %p976 = scmp.le.s32.totalorder 2, %s25
      // Predicated region
      $region73: #{rkt_forward.8} parent=5 // pred_check
        %p977 = pneg %p976
      $region74: #{rkt_forward.8} parent=5 // pred_check_branch
        %979 = sbr.rel (%p977) target = $region76
      $region75: #{rkt_forward.8} parent=5 // pred_region
        %s980 = ssub.s32 %s25, 2
        // Predicated region
        $region77: #{rkt_forward.8} parent=75 // pred_check
          %p981 = pneg %p309
        $region78: #{rkt_forward.8} parent=75 // pred_check_branch
          %983 = sbr.rel (%p981) target = $region80
        $region79: #{rkt_forward.8} parent=75 // pred_region
          %s984 = sand.u32 %s294, 1
          %s985 = scalar_lea.sflag [#allocation6], %s984
          %s986 = sand.u32 %s294, 1
          %s987 = smul.addr %s986, 8
          %s988 = scalar_lea.vmem [#allocation5], %s987
          %990 = dma.done %s985, 128
        $region80: #{rkt_forward.8} parent=75 // pred_fallthru
          _
        // Predicated region
        $region81: #{rkt_forward.8} parent=75 // pred_check
          %p991 = pneg %p337
        $region82: #{rkt_forward.8} parent=75 // pred_check_branch
          %993 = sbr.rel (%p991) target = $region84
        $region83: #{rkt_forward.8} parent=75 // pred_region
          %s994 = sand.u32 %s322, 1
          %s995 = scalar_lea.sflag [#allocation8], %s994
          %s996 = sand.u32 %s322, 1
          %s997 = smul.addr %s996, 32
          %s998 = scalar_lea.vmem [#allocation7], %s997
          %1000 = dma.done %s995, 512
        $region84: #{rkt_forward.8} parent=75 // pred_fallthru
          _
      $region76: #{rkt_forward.8} parent=5 // pred_fallthru
        _
    $region6: #{rkt_forward.8} parent=1 // loop_footer
      %s29 = sadd.s32 1, %s25
    $region7: #{rkt_forward.8} parent=1 // loop_footer_branch
      %24 = sbr.rel target = $region3
    $region8: #{rkt_forward.8} parent=1 // loop_exit
      _
    %1001 = vsyncpa [#allocation6], 1
    %s1002 = scalar_lea.sflag [#allocation6], 1
    %1003 = vsyncpa %s1002, 1
    %1004 = vsyncpa [#allocation8], 1
    %s1005 = scalar_lea.sflag [#allocation8], 1
    %1006 = vsyncpa %s1005, 1

</llo_original>
